<compile_context>
chip_gen: v5e
topology: v5e:2x2
jax: 0.10.0
libtpu: 0.0.40
codegen_flags: <defaults>
</compile_context>

<pallas_src>
import functools

import jax
import jax.numpy as jnp
from jax.experimental import pallas as pl
from jax.experimental.pallas import tpu as pltpu

BN_EPS = 1e-5
# Explicit scoped-VMEM budget: far above the double-buffered working set of
# both passes, within the default/physical budget on v5e/v6e/v7x.
_VMEM_LIMIT_BYTES = 32 * 1024 * 1024


def _round_up(x, m):
    return (x + m - 1) // m * m


# ----------------------------------------------------------------------------
# Pass 1: in-kernel im2col conv (tap-shift matmuls) + per-tile channel stats.
# ----------------------------------------------------------------------------
def conv_stats_kernel(a_ref, b_ref, w_ref, mask_ref, y_ref, pstats_ref, *,
                      tap_offsets, tile_m, first_relu):
    # a_ref:      (TM, C_in)  bf16 rows [i*TM, (i+1)*TM) of the flattened padded input
    # b_ref:      (TB, C_in)  bf16 halo rows [(i+1)*TM, (i+1)*TM + TB)
    # w_ref:      (KH*KW, C_in, C_pad) bf16 weights (tap-major)
    # mask_ref:   (TM, 1) f32, 1.0 where the row is a real conv output, else 0.0
    # y_ref:      (TM, C_pad) bf16 conv output tile (no bias; BN cancels it)
    # pstats_ref: (2, C_pad) f32 per-tile [sum, sum_sq] over valid rows
    slab = jnp.concatenate([a_ref[...], b_ref[...]], axis=0)   # (TM+TB, C_in)
    if first_relu:
        # relu commutes with the zero spatial padding, so relu on the padded
        # input is exactly relu-before-conv.
        slab = jnp.maximum(slab, 0)

    # Tap 0 initializes the f32 accumulator; remaining taps accumulate.
    d0 = tap_offsets[0]
    acc = jnp.dot(slab[d0:d0 + tile_m, :], w_ref[0],
                  preferred_element_type=jnp.float32)
    for t in range(1, len(tap_offsets)):
        d = tap_offsets[t]
        acc = acc + jnp.dot(slab[d:d + tile_m, :], w_ref[t],
                            preferred_element_type=jnp.float32)

    # bf16 inter-pass intermediate (stats below use the f32 accumulator).
    y_ref[...] = acc.astype(y_ref.dtype)

    # BN partial statistics over valid rows only (mask is 0/1, so
    # (acc*mask)^2 == acc^2*mask).
    accv = acc * mask_ref[...]
    pstats_ref[0:1, :] = jnp.sum(accv, axis=0, keepdims=True)
    pstats_ref[1:2, :] = jnp.sum(accv * accv, axis=0, keepdims=True)


# ----------------------------------------------------------------------------
# Pass 2: fused BatchNorm affine + ReLU (one FMA + max per element).
# ----------------------------------------------------------------------------
def bn_relu_kernel(y_ref, affine_ref, o_ref):
    # y_ref:      (TM2, C_pad) bf16 conv tile
    # affine_ref: (2, C_pad) f32  [scale, shift]
    scale = affine_ref[0:1, :]
    shift = affine_ref[1:2, :]
    y = y_ref[...].astype(jnp.float32)
    o_ref[...] = jnp.maximum(y * scale + shift, 0.0).astype(o_ref.dtype)


# ----------------------------------------------------------------------------
# Wrapper: NCHW interface, host glue (transpose/pad/flatten), two pallas_calls.
# ----------------------------------------------------------------------------
def conv_bn_relu(x_nchw, weight_oihw, bias, gamma, beta, *, stride, padding,
                 first_relu, tile_m=512):
    """ConvBNReLU forward. x_nchw: (N, C_in, H, W). weight: (C_out, C_in, KH, KW)."""
    del bias  # BatchNorm's mean subtraction cancels the conv bias exactly.

    N, C_in, H, W = x_nchw.shape
    C_out, C_in_w, KH, KW = weight_oihw.shape
    assert C_in_w == C_in, "groups != 1 not supported"  # TODO(synk): grouped conv
    if stride != 1:
        # TODO(synk): strided convs need the host-im2col fallback path.
        raise NotImplementedError("in-kernel im2col path supports stride == 1 only")

    H_pad, W_pad = H + 2 * padding, W + 2 * padding
    H_out = H_pad - KH + 1
    W_out = W_pad - KW + 1

    M_valid = N * H_out * W_out            # real conv outputs
    Mp = N * H_pad * W_pad                 # rows computed on the padded grid
    D = (KH - 1) * W_pad + (KW - 1)        # largest tap row-shift
    C_pad = _round_up(C_out, 128)          # lane-dense output channels

    # --- pass-1 tiling: TM rows per tile + a TB-row halo block (TB | TM, TB >= D)
    TM = min(_round_up(tile_m, 16), _round_up(Mp, 16))
    TM = max(TM, _round_up(D, 16))
    M_grid = _round_up(Mp, TM)
    num_tiles = M_grid // TM
    TB = TM
    for cand in range(_round_up(D, 16), TM + 1, 16):
        if TM % cand == 0:
            TB = cand
            break
    ratio = TM // TB

    # --- host glue: NCHW -> NHWC, spatial zero-pad, flatten, bf16 cast ---
    x = jnp.transpose(x_nchw, (0, 2, 3, 1))
    xp = jnp.pad(x, ((0, 0), (padding, padding), (padding, padding), (0, 0)))
    xf = xp.reshape(Mp, C_in).astype(jnp.bfloat16)
    xf = jnp.pad(xf, ((0, M_grid + TB - Mp), (0, 0)))          # zero tail is inert

    # Weights: PyTorch OIHW -> (kh*kw, c_in, c_out), pad channels to 128 lanes.
    w3 = jnp.transpose(weight_oihw, (2, 3, 1, 0)).reshape(KH * KW, C_in, C_out)
    w3 = jnp.pad(w3, ((0, 0), (0, 0), (0, C_pad - C_out))).astype(jnp.bfloat16)

    # Validity mask over the flattened padded grid: 1.0 where (ho, wo) is a real
    # conv output, 0.0 for padding-band rows (computed but ignored).
    hw = jnp.arange(H_pad * W_pad, dtype=jnp.int32)
    valid_hw = ((hw // W_pad) < H_out) & ((hw % W_pad) < W_out)
    mask = jnp.tile(valid_hw, (N,)).astype(jnp.float32).reshape(Mp, 1)
    mask = jnp.pad(mask, ((0, M_grid - Mp), (0, 0)))

    tap_offsets = tuple(kh * W_pad + kw for kh in range(KH) for kw in range(KW))

    # ---- pass 1: conv (in-kernel im2col) + per-tile channel statistics ----
    kernel1 = functools.partial(conv_stats_kernel, tap_offsets=tap_offsets,
                                tile_m=TM, first_relu=bool(first_relu))
    y_full, pstats = pl.pallas_call(
        kernel1,
        out_shape=(jax.ShapeDtypeStruct((M_grid, C_pad), jnp.bfloat16),
                   jax.ShapeDtypeStruct((num_tiles, 2, C_pad), jnp.float32)),
        grid_spec=pl.GridSpec(
            grid=(num_tiles,),
            in_specs=[
                pl.BlockSpec((TM, C_in), lambda i: (i, 0)),
                pl.BlockSpec((TB, C_in), lambda i: ((i + 1) * ratio, 0)),
                pl.BlockSpec((KH * KW, C_in, C_pad), lambda i: (0, 0, 0)),
                pl.BlockSpec((TM, 1), lambda i: (i, 0)),
            ],
            out_specs=(
                pl.BlockSpec((TM, C_pad), lambda i: (i, 0)),
                pl.BlockSpec((None, 2, C_pad), lambda i: (i, 0, 0)),
            ),
        ),
        compiler_params=pltpu.CompilerParams(
            dimension_semantics=("parallel",),
            vmem_limit_bytes=_VMEM_LIMIT_BYTES),
    )(xf, xf, w3, mask)

    # ---- tiny host combine: batch stats -> fused affine (C_out-sized work) ----
    # Stats are of the bias-free conv output; BN cancels the bias so the fused
    # affine below reproduces conv+bias -> BN exactly.
    sums = jnp.sum(pstats[:, 0, :], axis=0)
    sumsq = jnp.sum(pstats[:, 1, :], axis=0)
    mean = sums / M_valid
    var = jnp.maximum(sumsq / M_valid - mean * mean, 0.0)  # guard cancellation
    inv_std = jax.lax.rsqrt(var + BN_EPS)
    g_p = jnp.pad(gamma.astype(jnp.float32), (0, C_pad - C_out))
    beta_p = jnp.pad(beta.astype(jnp.float32), (0, C_pad - C_out))
    scale = g_p * inv_std
    shift = beta_p - mean * scale
    affine = jnp.stack([scale, shift], axis=0)              # (2, C_pad)

    # ---- pass 2: y*scale + shift, ReLU (large decoupled tiles) ----
    g2 = 1
    for cand in range(num_tiles, 0, -1):
        if num_tiles % cand == 0 and TM * cand <= 4096:
            g2 = cand
            break
    TM2 = TM * g2
    num_tiles2 = M_grid // TM2

    out_flat = pl.pallas_call(
        bn_relu_kernel,
        out_shape=jax.ShapeDtypeStruct((M_grid, C_pad), jnp.float32),
        grid_spec=pl.GridSpec(
            grid=(num_tiles2,),
            in_specs=[
                pl.BlockSpec((TM2, C_pad), lambda i: (i, 0)),
                pl.BlockSpec((2, C_pad), lambda i: (0, 0)),
            ],
            out_specs=pl.BlockSpec((TM2, C_pad), lambda i: (i, 0)),
        ),
        compiler_params=pltpu.CompilerParams(
            dimension_semantics=("parallel",),
            vmem_limit_bytes=_VMEM_LIMIT_BYTES),
    )(y_full, affine)

    # strip padding-band rows / channel padding, back to NCHW
    out = out_flat[:Mp, :C_out].reshape(N, H_pad, W_pad, C_out)
    out = out[:, :H_out, :W_out, :]
    return jnp.transpose(out, (0, 3, 1, 2))


# ----------------------------------------------------------------------------
# Pure-JAX reference mirroring the PyTorch forward (train-mode BN).
# ----------------------------------------------------------------------------
def reference(x, w, b, gamma, beta, *, stride, padding, first_relu,
              conv_dtype=jnp.float32):
    if first_relu:
        x = jnp.maximum(x, 0.0)
    y = jax.lax.conv_general_dilated(
        x.astype(conv_dtype), w.astype(conv_dtype), (stride, stride),
        [(padding, padding), (padding, padding)],
        dimension_numbers=("NCHW", "OIHW", "NCHW"),
        preferred_element_type=jnp.float32) + b.reshape(1, -1, 1, 1)
    mean = y.mean(axis=(0, 2, 3), keepdims=True)
    var = ((y - mean) ** 2).mean(axis=(0, 2, 3), keepdims=True)
    y = (y - mean) * jax.lax.rsqrt(var + BN_EPS) * gamma.reshape(1, -1, 1, 1) \
        + beta.reshape(1, -1, 1, 1)
    return jnp.maximum(y, 0.0)


if __name__ == "__main__":
    # Module config (NIN-style block): quant_type=0 (plain conv), groups=1.
    N, C_IN, H, W = 2, 4, 16, 16
    C_OUT, KSZ, STRIDE, PAD = 8, 3, 1, 1
    FIRST_RELU = 1

    key = jax.random.PRNGKey(0)
    kx, kw, kb, kg, kbeta = jax.random.split(key, 5)
    x = jax.random.normal(kx, (N, C_IN, H, W), dtype=jnp.float32)
    weight = 0.1 * jax.random.normal(kw, (C_OUT, C_IN, KSZ, KSZ), dtype=jnp.float32)
    bias = 0.1 * jax.random.normal(kb, (C_OUT,), dtype=jnp.float32)
    gamma = 1.0 + 0.1 * jax.random.normal(kg, (C_OUT,), dtype=jnp.float32)
    beta = 0.1 * jax.random.normal(kbeta, (C_OUT,), dtype=jnp.float32)

    fwd = jax.jit(functools.partial(conv_bn_relu, stride=STRIDE, padding=PAD,
                                    first_relu=FIRST_RELU, tile_m=256))
    out = jax.block_until_ready(fwd(x, weight, bias, gamma, beta))
    assert out.shape == (N, C_OUT, H, W)

    # Check against a reference with matching MXU numerics (bf16 conv inputs,
    # f32 accumulation; our inter-pass intermediate adds one bf16 rounding) ...
    ref_bf16 = reference(x, weight, bias, gamma, beta, stride=STRIDE, padding=PAD,
                         first_relu=FIRST_RELU, conv_dtype=jnp.bfloat16)
    assert jnp.allclose(out, ref_bf16, atol=3e-2, rtol=3e-2), "mismatch vs bf16 reference"

    # ... and loosely against the full-f32 reference (bf16 quantization error only).
    ref_f32 = reference(x, weight, bias, gamma, beta, stride=STRIDE, padding=PAD,
                        first_relu=FIRST_RELU, conv_dtype=jnp.float32)
    assert jnp.allclose(out, ref_f32, atol=5e-2, rtol=5e-2), "mismatch vs f32 reference"

    print("KERNEL_OK")
</pallas_src>

<mosaic_0001>
module attributes {stable_mosaic.version = 11 : i64} {
  func.func @conv_stats_kernel(%arg0: i32, %arg1: memref<256x4xbf16, #tpu.memory_space<vmem>>, %arg2: memref<64x4xbf16, #tpu.memory_space<vmem>>, %arg3: memref<9x4x128xbf16, #tpu.memory_space<vmem>>, %arg4: memref<256x1xf32, #tpu.memory_space<vmem>>, %arg5: memref<256x128xbf16, #tpu.memory_space<vmem>>, %arg6: memref<1x2x128xf32, #tpu.memory_space<vmem>>) attributes {dimension_semantics = [#tpu.dimension_semantics<parallel>], iteration_bounds = array<i64: 3>, scalar_prefetch = 0 : i64, scratch_operands = 0 : i64, tpu.core_type = #tpu.core_type<tc>, window_params = [{transform_indices = @transform_0, window_bounds = array<i64: 256, 4>}, {transform_indices = @transform_1, window_bounds = array<i64: 64, 4>}, {pipeline_mode = #tpu.pipeline_mode<synchronous>, transform_indices = @transform_2, window_bounds = array<i64: 9, 4, 128>}, {transform_indices = @transform_3, window_bounds = array<i64: 256, 1>}, {transform_indices = @transform_4, window_bounds = array<i64: 256, 128>}, {transform_indices = @transform_5, window_bounds = array<i64: 1, 2, 128>}]} {
    %c0 = arith.constant 0 : index
    %c0_0 = arith.constant 0 : index
    %0 = vector.load %arg1[%c0, %c0_0] : memref<256x4xbf16, #tpu.memory_space<vmem>>, vector<256x4xbf16>
    %c0_1 = arith.constant 0 : index
    %c0_2 = arith.constant 0 : index
    %1 = vector.load %arg2[%c0_1, %c0_2] : memref<64x4xbf16, #tpu.memory_space<vmem>>, vector<64x4xbf16>
    %2 = tpu.concatenate %0, %1 in 0 : vector<256x4xbf16>, vector<64x4xbf16> -> vector<320x4xbf16>
    %cst = arith.constant 0.000000e+00 : bf16
    %3 = vector.broadcast %cst : bf16 to vector<320x4xbf16>
    %4 = arith.maximumf %2, %3 : vector<320x4xbf16>
    %5 = vector.extract_strided_slice %4 {offsets = [0, 0], sizes = [256, 4], strides = [1, 1]} : vector<320x4xbf16> to vector<256x4xbf16>
    %c0_3 = arith.constant 0 : index
    %c0_4 = arith.constant 0 : index
    %c0_5 = arith.constant 0 : index
    %6 = vector.load %arg3[%c0_3, %c0_4, %c0_5] : memref<9x4x128xbf16, #tpu.memory_space<vmem>>, vector<1x4x128xbf16>
    %7 = vector.shape_cast %6 : vector<1x4x128xbf16> to vector<4x128xbf16>
    %cst_6 = arith.constant dense<0.000000e+00> : vector<256x128xf32>
    %8 = tpu.matmul %5, %7, %cst_6 {dimension_numbers = #tpu.dot_dimension_numbers<[1], [0], [0], [1], [0, 0, 1, 1], [], []>} : vector<256x4xbf16>, vector<4x128xbf16>, vector<256x128xf32> -> vector<256x128xf32>
    %9 = vector.extract_strided_slice %4 {offsets = [1, 0], sizes = [256, 4], strides = [1, 1]} : vector<320x4xbf16> to vector<256x4xbf16>
    %c1 = arith.constant 1 : index
    %c0_7 = arith.constant 0 : index
    %c0_8 = arith.constant 0 : index
    %10 = vector.load %arg3[%c1, %c0_7, %c0_8] : memref<9x4x128xbf16, #tpu.memory_space<vmem>>, vector<1x4x128xbf16>
    %11 = vector.shape_cast %10 : vector<1x4x128xbf16> to vector<4x128xbf16>
    %cst_9 = arith.constant dense<0.000000e+00> : vector<256x128xf32>
    %12 = tpu.matmul %9, %11, %cst_9 {dimension_numbers = #tpu.dot_dimension_numbers<[1], [0], [0], [1], [0, 0, 1, 1], [], []>} : vector<256x4xbf16>, vector<4x128xbf16>, vector<256x128xf32> -> vector<256x128xf32>
    %13 = arith.addf %8, %12 : vector<256x128xf32>
    %14 = vector.extract_strided_slice %4 {offsets = [2, 0], sizes = [256, 4], strides = [1, 1]} : vector<320x4xbf16> to vector<256x4xbf16>
    %c2 = arith.constant 2 : index
    %c0_10 = arith.constant 0 : index
    %c0_11 = arith.constant 0 : index
    %15 = vector.load %arg3[%c2, %c0_10, %c0_11] : memref<9x4x128xbf16, #tpu.memory_space<vmem>>, vector<1x4x128xbf16>
    %16 = vector.shape_cast %15 : vector<1x4x128xbf16> to vector<4x128xbf16>
    %cst_12 = arith.constant dense<0.000000e+00> : vector<256x128xf32>
    %17 = tpu.matmul %14, %16, %cst_12 {dimension_numbers = #tpu.dot_dimension_numbers<[1], [0], [0], [1], [0, 0, 1, 1], [], []>} : vector<256x4xbf16>, vector<4x128xbf16>, vector<256x128xf32> -> vector<256x128xf32>
    %18 = arith.addf %13, %17 : vector<256x128xf32>
    %19 = vector.extract_strided_slice %4 {offsets = [18, 0], sizes = [256, 4], strides = [1, 1]} : vector<320x4xbf16> to vector<256x4xbf16>
    %c3 = arith.constant 3 : index
    %c0_13 = arith.constant 0 : index
    %c0_14 = arith.constant 0 : index
    %20 = vector.load %arg3[%c3, %c0_13, %c0_14] : memref<9x4x128xbf16, #tpu.memory_space<vmem>>, vector<1x4x128xbf16>
    %21 = vector.shape_cast %20 : vector<1x4x128xbf16> to vector<4x128xbf16>
    %cst_15 = arith.constant dense<0.000000e+00> : vector<256x128xf32>
    %22 = tpu.matmul %19, %21, %cst_15 {dimension_numbers = #tpu.dot_dimension_numbers<[1], [0], [0], [1], [0, 0, 1, 1], [], []>} : vector<256x4xbf16>, vector<4x128xbf16>, vector<256x128xf32> -> vector<256x128xf32>
    %23 = arith.addf %18, %22 : vector<256x128xf32>
    %24 = vector.extract_strided_slice %4 {offsets = [19, 0], sizes = [256, 4], strides = [1, 1]} : vector<320x4xbf16> to vector<256x4xbf16>
    %c4 = arith.constant 4 : index
    %c0_16 = arith.constant 0 : index
    %c0_17 = arith.constant 0 : index
    %25 = vector.load %arg3[%c4, %c0_16, %c0_17] : memref<9x4x128xbf16, #tpu.memory_space<vmem>>, vector<1x4x128xbf16>
    %26 = vector.shape_cast %25 : vector<1x4x128xbf16> to vector<4x128xbf16>
    %cst_18 = arith.constant dense<0.000000e+00> : vector<256x128xf32>
    %27 = tpu.matmul %24, %26, %cst_18 {dimension_numbers = #tpu.dot_dimension_numbers<[1], [0], [0], [1], [0, 0, 1, 1], [], []>} : vector<256x4xbf16>, vector<4x128xbf16>, vector<256x128xf32> -> vector<256x128xf32>
    %28 = arith.addf %23, %27 : vector<256x128xf32>
    %29 = vector.extract_strided_slice %4 {offsets = [20, 0], sizes = [256, 4], strides = [1, 1]} : vector<320x4xbf16> to vector<256x4xbf16>
    %c5 = arith.constant 5 : index
    %c0_19 = arith.constant 0 : index
    %c0_20 = arith.constant 0 : index
    %30 = vector.load %arg3[%c5, %c0_19, %c0_20] : memref<9x4x128xbf16, #tpu.memory_space<vmem>>, vector<1x4x128xbf16>
    %31 = vector.shape_cast %30 : vector<1x4x128xbf16> to vector<4x128xbf16>
    %cst_21 = arith.constant dense<0.000000e+00> : vector<256x128xf32>
    %32 = tpu.matmul %29, %31, %cst_21 {dimension_numbers = #tpu.dot_dimension_numbers<[1], [0], [0], [1], [0, 0, 1, 1], [], []>} : vector<256x4xbf16>, vector<4x128xbf16>, vector<256x128xf32> -> vector<256x128xf32>
    %33 = arith.addf %28, %32 : vector<256x128xf32>
    %34 = vector.extract_strided_slice %4 {offsets = [36, 0], sizes = [256, 4], strides = [1, 1]} : vector<320x4xbf16> to vector<256x4xbf16>
    %c6 = arith.constant 6 : index
    %c0_22 = arith.constant 0 : index
    %c0_23 = arith.constant 0 : index
    %35 = vector.load %arg3[%c6, %c0_22, %c0_23] : memref<9x4x128xbf16, #tpu.memory_space<vmem>>, vector<1x4x128xbf16>
    %36 = vector.shape_cast %35 : vector<1x4x128xbf16> to vector<4x128xbf16>
    %cst_24 = arith.constant dense<0.000000e+00> : vector<256x128xf32>
    %37 = tpu.matmul %34, %36, %cst_24 {dimension_numbers = #tpu.dot_dimension_numbers<[1], [0], [0], [1], [0, 0, 1, 1], [], []>} : vector<256x4xbf16>, vector<4x128xbf16>, vector<256x128xf32> -> vector<256x128xf32>
    %38 = arith.addf %33, %37 : vector<256x128xf32>
    %39 = vector.extract_strided_slice %4 {offsets = [37, 0], sizes = [256, 4], strides = [1, 1]} : vector<320x4xbf16> to vector<256x4xbf16>
    %c7 = arith.constant 7 : index
    %c0_25 = arith.constant 0 : index
    %c0_26 = arith.constant 0 : index
    %40 = vector.load %arg3[%c7, %c0_25, %c0_26] : memref<9x4x128xbf16, #tpu.memory_space<vmem>>, vector<1x4x128xbf16>
    %41 = vector.shape_cast %40 : vector<1x4x128xbf16> to vector<4x128xbf16>
    %cst_27 = arith.constant dense<0.000000e+00> : vector<256x128xf32>
    %42 = tpu.matmul %39, %41, %cst_27 {dimension_numbers = #tpu.dot_dimension_numbers<[1], [0], [0], [1], [0, 0, 1, 1], [], []>} : vector<256x4xbf16>, vector<4x128xbf16>, vector<256x128xf32> -> vector<256x128xf32>
    %43 = arith.addf %38, %42 : vector<256x128xf32>
    %44 = vector.extract_strided_slice %4 {offsets = [38, 0], sizes = [256, 4], strides = [1, 1]} : vector<320x4xbf16> to vector<256x4xbf16>
    %c8 = arith.constant 8 : index
    %c0_28 = arith.constant 0 : index
    %c0_29 = arith.constant 0 : index
    %45 = vector.load %arg3[%c8, %c0_28, %c0_29] : memref<9x4x128xbf16, #tpu.memory_space<vmem>>, vector<1x4x128xbf16>
    %46 = vector.shape_cast %45 : vector<1x4x128xbf16> to vector<4x128xbf16>
    %cst_30 = arith.constant dense<0.000000e+00> : vector<256x128xf32>
    %47 = tpu.matmul %44, %46, %cst_30 {dimension_numbers = #tpu.dot_dimension_numbers<[1], [0], [0], [1], [0, 0, 1, 1], [], []>} : vector<256x4xbf16>, vector<4x128xbf16>, vector<256x128xf32> -> vector<256x128xf32>
    %48 = arith.addf %43, %47 : vector<256x128xf32>
    %49 = arith.truncf %48 : vector<256x128xf32> to vector<256x128xbf16>
    %c0_31 = arith.constant 0 : index
    %c0_32 = arith.constant 0 : index
    %50 = vector.load %arg5[%c0_31, %c0_32] : memref<256x128xbf16, #tpu.memory_space<vmem>>, vector<256x128xbf16>
    tpu.vector_store %arg5[%c0_31, %c0_32], %49 {strides = array<i32>} : memref<256x128xbf16, #tpu.memory_space<vmem>>, vector<256x128xbf16>,
    %c0_33 = arith.constant 0 : index
    %c0_34 = arith.constant 0 : index
    %51 = vector.load %arg4[%c0_33, %c0_34] : memref<256x1xf32, #tpu.memory_space<vmem>>, vector<256x1xf32>
    %52 = vector.broadcast %51 : vector<256x1xf32> to vector<256x128xf32>
    %53 = arith.mulf %48, %52 : vector<256x128xf32>
    %cst_35 = arith.constant dense<0.000000e+00> : vector<128xf32>
    %54 = vector.multi_reduction <add>, %53, %cst_35 [0] : vector<256x128xf32> to vector<128xf32>
    %55 = vector.shape_cast %54 : vector<128xf32> to vector<1x128xf32>
    %c0_36 = arith.constant 0 : index
    %c0_37 = arith.constant 0 : index
    %c0_38 = arith.constant 0 : index
    %56 = vector.load %arg6[%c0_36, %c0_37, %c0_38] : memref<1x2x128xf32, #tpu.memory_space<vmem>>, vector<1x1x128xf32>
    %57 = vector.shape_cast %56 : vector<1x1x128xf32> to vector<1x128xf32>
    %58 = vector.shape_cast %55 : vector<1x128xf32> to vector<1x1x128xf32>
    tpu.vector_store %arg6[%c0_36, %c0_37, %c0_38], %58 {strides = array<i32>} : memref<1x2x128xf32, #tpu.memory_space<vmem>>, vector<1x1x128xf32>,
    %59 = arith.mulf %53, %53 : vector<256x128xf32>
    %cst_39 = arith.constant dense<0.000000e+00> : vector<128xf32>
    %60 = vector.multi_reduction <add>, %59, %cst_39 [0] : vector<256x128xf32> to vector<128xf32>
    %61 = vector.shape_cast %60 : vector<128xf32> to vector<1x128xf32>
    %c0_40 = arith.constant 0 : index
    %c1_41 = arith.constant 1 : index
    %c0_42 = arith.constant 0 : index
    %62 = vector.load %arg6[%c0_40, %c1_41, %c0_42] : memref<1x2x128xf32, #tpu.memory_space<vmem>>, vector<1x1x128xf32>
    %63 = vector.shape_cast %62 : vector<1x1x128xf32> to vector<1x128xf32>
    %64 = vector.shape_cast %61 : vector<1x128xf32> to vector<1x1x128xf32>
    tpu.vector_store %arg6[%c0_40, %c1_41, %c0_42], %64 {strides = array<i32>} : memref<1x2x128xf32, #tpu.memory_space<vmem>>, vector<1x1x128xf32>,
    return
  }
  func.func @transform_0(%arg0: i32) -> (i32, i32) {
    %c0_i32 = arith.constant 0 : i32
    %c0_i32_0 = arith.constant 0 : i32
    return %arg0, %c0_i32 : i32, i32
  }
  func.func @transform_1(%arg0: i32) -> (i32, i32) {
    %c1_i32 = arith.constant 1 : i32
    %0 = arith.addi %arg0, %c1_i32 : i32
    %c4_i32 = arith.constant 4 : i32
    %1 = arith.muli %0, %c4_i32 : i32
    %c0_i32 = arith.constant 0 : i32
    %c0_i32_0 = arith.constant 0 : i32
    return %1, %c0_i32 : i32, i32
  }
  func.func @transform_2(%arg0: i32) -> (i32, i32, i32) {
    %c0_i32 = arith.constant 0 : i32
    %c0_i32_0 = arith.constant 0 : i32
    %c0_i32_1 = arith.constant 0 : i32
    %c0_i32_2 = arith.constant 0 : i32
    return %c0_i32, %c0_i32_0, %c0_i32_1 : i32, i32, i32
  }
  func.func @transform_3(%arg0: i32) -> (i32, i32) {
    %c0_i32 = arith.constant 0 : i32
    %c0_i32_0 = arith.constant 0 : i32
    return %arg0, %c0_i32 : i32, i32
  }
  func.func @transform_4(%arg0: i32) -> (i32, i32) {
    %c0_i32 = arith.constant 0 : i32
    %c0_i32_0 = arith.constant 0 : i32
    return %arg0, %c0_i32 : i32, i32
  }
  func.func @transform_5(%arg0: i32) -> (i32, i32, i32) {
    %c0_i32 = arith.constant 0 : i32
    %c0_i32_0 = arith.constant 0 : i32
    %c0_i32_1 = arith.constant 0 : i32
    return %arg0, %c0_i32, %c0_i32_0 : i32, i32, i32
  }
}

module attributes {stable_mosaic.version = 11 : i64} {
  func.func @bn_relu_kernel(%arg0: i32, %arg1: memref<768x128xbf16, #tpu.memory_space<vmem>>, %arg2: memref<2x128xf32, #tpu.memory_space<vmem>>, %arg3: memref<768x128xf32, #tpu.memory_space<vmem>>) attributes {dimension_semantics = [#tpu.dimension_semantics<parallel>], iteration_bounds = array<i64: 1>, scalar_prefetch = 0 : i64, scratch_operands = 0 : i64, tpu.core_type = #tpu.core_type<tc>, window_params = [{transform_indices = @transform_0, window_bounds = array<i64: 768, 128>}, {pipeline_mode = #tpu.pipeline_mode<synchronous>, transform_indices = @transform_1, window_bounds = array<i64: 2, 128>}, {transform_indices = @transform_2, window_bounds = array<i64: 768, 128>}]} {
    %c0 = arith.constant 0 : index
    %c0_0 = arith.constant 0 : index
    %0 = vector.load %arg2[%c0, %c0_0] : memref<2x128xf32, #tpu.memory_space<vmem>>, vector<1x128xf32>
    %c1 = arith.constant 1 : index
    %c0_1 = arith.constant 0 : index
    %1 = vector.load %arg2[%c1, %c0_1] : memref<2x128xf32, #tpu.memory_space<vmem>>, vector<1x128xf32>
    %c0_2 = arith.constant 0 : index
    %c0_3 = arith.constant 0 : index
    %2 = vector.load %arg1[%c0_2, %c0_3] : memref<768x128xbf16, #tpu.memory_space<vmem>>, vector<768x128xbf16>
    %3 = arith.extf %2 : vector<768x128xbf16> to vector<768x128xf32>
    %4 = vector.broadcast %0 : vector<1x128xf32> to vector<768x128xf32>
    %5 = arith.mulf %3, %4 : vector<768x128xf32>
    %6 = vector.broadcast %1 : vector<1x128xf32> to vector<768x128xf32>
    %7 = arith.addf %5, %6 : vector<768x128xf32>
    %cst = arith.constant 0.000000e+00 : f32
    %8 = vector.broadcast %cst : f32 to vector<768x128xf32>
    %9 = arith.maximumf %7, %8 : vector<768x128xf32>
    %c0_4 = arith.constant 0 : index
    %c0_5 = arith.constant 0 : index
    %10 = vector.load %arg3[%c0_4, %c0_5] : memref<768x128xf32, #tpu.memory_space<vmem>>, vector<768x128xf32>
    tpu.vector_store %arg3[%c0_4, %c0_5], %9 {strides = array<i32>} : memref<768x128xf32, #tpu.memory_space<vmem>>, vector<768x128xf32>,
    return
  }
  func.func @transform_0(%arg0: i32) -> (i32, i32) {
    %c0_i32 = arith.constant 0 : i32
    %c0_i32_0 = arith.constant 0 : i32
    return %arg0, %c0_i32 : i32, i32
  }
  func.func @transform_1(%arg0: i32) -> (i32, i32) {
    %c0_i32 = arith.constant 0 : i32
    %c0_i32_0 = arith.constant 0 : i32
    %c0_i32_1 = arith.constant 0 : i32
    return %c0_i32, %c0_i32_0 : i32, i32
  }
  func.func @transform_2(%arg0: i32) -> (i32, i32) {
    %c0_i32 = arith.constant 0 : i32
    %c0_i32_0 = arith.constant 0 : i32
    return %arg0, %c0_i32 : i32, i32
  }
}

</mosaic_0001>

<llo_original>
// kernel: conv_bn_relu.3
$region0: #{conv_bn_relu.3}
  #allocation0 [shape = 'u32[]', space=smem, size = 0x4, offset = 0x4, fixed_abs, tag = 'smem constant byte address 0x4 - core index']
  #allocation1 [shape = 'u32[72,128]{1,0:T(1,128)}', space=vmem, size = 0x9000, scoped, tag = 'internal scratch']
  %s0 = inlined_call_operand.vmem [shape: bf16[768,128], index: 0, kind: input, shape index: {}]
  %s1 = inlined_call_operand.vmem [shape: f32[2,128], index: 1, kind: input, shape index: {}]
  %s2 = inlined_call_operand.vmem [shape: f32[768,128], index: 2, kind: output, shape index: {}]
  %s3 = sld [smem:[#allocation0]]
  $region18: #{conv_bn_relu.3} parent=0
    _
  %s5 = ssub.s32 1, %s3
  %s6 = scalar_select 0, %s5, %s3
  // Predicated region
  $region2: #{conv_bn_relu.3} parent=0 // pred_check
    _
  $region3: #{conv_bn_relu.3} parent=0 // pred_check_branch
    %8 = sbr.rel (0) target = $region5
  $region4: #{conv_bn_relu.3} parent=0 // pred_region
    _
  $region5: #{conv_bn_relu.3} parent=0 // pred_fallthru
    _
  // Predicated region
  $region6: #{conv_bn_relu.3} parent=0 // pred_check
    _
  $region7: #{conv_bn_relu.3} parent=0 // pred_check_branch
    %10 = sbr.rel (0) target = $region9
  $region8: #{conv_bn_relu.3} parent=0 // pred_region
    _
  $region9: #{conv_bn_relu.3} parent=0 // pred_fallthru
    _
  %v11 = vld [vmem:[%s1] sm:$0x1]
  %v12 = vld [vmem:[%s1 + $0x1] sm:$0x1]
  %v13 = vld [vmem:[%s0] sm:$0xf]
  %v14 = vld [vmem:[%s0 + $0x4] sm:$0xf]
  %v15 = vld [vmem:[%s0 + $0x8] sm:$0xf]
  %v16 = vld [vmem:[%s0 + $0xc] sm:$0xf]
  %v17 = vld [vmem:[%s0 + $0x10] sm:$0xf]
  %v18 = vld [vmem:[%s0 + $0x14] sm:$0xf]
  %v19 = vld [vmem:[%s0 + $0x18] sm:$0xf]
  %v20 = vld [vmem:[%s0 + $0x1c] sm:$0xf]
  %v21 = vld [vmem:[%s0 + $0x20] sm:$0xf]
  %v22 = vld [vmem:[%s0 + $0x24] sm:$0xf]
  %v23 = vld [vmem:[%s0 + $0x28] sm:$0xf]
  %v24 = vld [vmem:[%s0 + $0x2c] sm:$0xf]
  %v25 = vld [vmem:[%s0 + $0x30] sm:$0xf]
  %v26 = vld [vmem:[%s0 + $0x34] sm:$0xf]
  %v27 = vld [vmem:[%s0 + $0x38] sm:$0xf]
  %v28 = vld [vmem:[%s0 + $0x3c] sm:$0xf]
  %v29 = vld [vmem:[%s0 + $0x40] sm:$0xf]
  %v30 = vld [vmem:[%s0 + $0x44] sm:$0xf]
  %v31 = vld [vmem:[%s0 + $0x48] sm:$0xf]
  %v32 = vld [vmem:[%s0 + $0x4c] sm:$0xf]
  %v33 = vld [vmem:[%s0 + $0x50] sm:$0xf]
  %v34 = vld [vmem:[%s0 + $0x54] sm:$0xf]
  %v35 = vld [vmem:[%s0 + $0x58] sm:$0xf]
  %v36 = vld [vmem:[%s0 + $0x5c] sm:$0xf]
  %v37 = vld [vmem:[%s0 + $0x60] sm:$0xf]
  %v38 = vld [vmem:[%s0 + $0x64] sm:$0xf]
  %v39 = vld [vmem:[%s0 + $0x68] sm:$0xf]
  %v40 = vld [vmem:[%s0 + $0x6c] sm:$0xf]
  %v41 = vld [vmem:[%s0 + $0x70] sm:$0xf]
  %v42 = vld [vmem:[%s0 + $0x74] sm:$0xf]
  %v43 = vld [vmem:[%s0 + $0x78] sm:$0xf]
  %v44 = vld [vmem:[%s0 + $0x7c] sm:$0xf]
  %v45 = vld [vmem:[%s0 + $0x80] sm:$0xf]
  %v46 = vld [vmem:[%s0 + $0x84] sm:$0xf]
  %v47 = vld [vmem:[%s0 + $0x88] sm:$0xf]
  %v48 = vld [vmem:[%s0 + $0x8c] sm:$0xf]
  %v49 = vld [vmem:[%s0 + $0x90] sm:$0xf]
  %v50 = vld [vmem:[%s0 + $0x94] sm:$0xf]
  %v51 = vld [vmem:[%s0 + $0x98] sm:$0xf]
  %v52 = vld [vmem:[%s0 + $0x9c] sm:$0xf]
  %v53 = vld [vmem:[%s0 + $0xa0] sm:$0xf]
  %v54 = vld [vmem:[%s0 + $0xa4] sm:$0xf]
  %v55 = vld [vmem:[%s0 + $0xa8] sm:$0xf]
  %v56 = vld [vmem:[%s0 + $0xac] sm:$0xf]
  %v57 = vld [vmem:[%s0 + $0xb0] sm:$0xf]
  %v58 = vld [vmem:[%s0 + $0xb4] sm:$0xf]
  %v59 = vld [vmem:[%s0 + $0xb8] sm:$0xf]
  %v60 = vld [vmem:[%s0 + $0xbc] sm:$0xf]
  %v61 = vld [vmem:[%s0 + $0xc0] sm:$0xf]
  %v62 = vld [vmem:[%s0 + $0xc4] sm:$0xf]
  %v63 = vld [vmem:[%s0 + $0xc8] sm:$0xf]
  %v64 = vld [vmem:[%s0 + $0xcc] sm:$0xf]
  %v65 = vld [vmem:[%s0 + $0xd0] sm:$0xf]
  %v66 = vld [vmem:[%s0 + $0xd4] sm:$0xf]
  %v67 = vld [vmem:[%s0 + $0xd8] sm:$0xf]
  %v68 = vld [vmem:[%s0 + $0xdc] sm:$0xf]
  %v69 = vld [vmem:[%s0 + $0xe0] sm:$0xf]
  %v70 = vld [vmem:[%s0 + $0xe4] sm:$0xf]
  %v71 = vld [vmem:[%s0 + $0xe8] sm:$0xf]
  %v72 = vld [vmem:[%s0 + $0xec] sm:$0xf]
  %v73 = vld [vmem:[%s0 + $0xf0] sm:$0xf]
  %v74 = vld [vmem:[%s0 + $0xf4] sm:$0xf]
  %v75 = vld [vmem:[%s0 + $0xf8] sm:$0xf]
  %v76 = vld [vmem:[%s0 + $0xfc] sm:$0xf]
  %v77 = vld [vmem:[%s0 + $0x100] sm:$0xf]
  %v78 = vld [vmem:[%s0 + $0x104] sm:$0xf]
  %v79 = vld [vmem:[%s0 + $0x108] sm:$0xf]
  %v80 = vld [vmem:[%s0 + $0x10c] sm:$0xf]
  %v81 = vld [vmem:[%s0 + $0x110] sm:$0xf]
  %v82 = vld [vmem:[%s0 + $0x114] sm:$0xf]
  %v83 = vld [vmem:[%s0 + $0x118] sm:$0xf]
  %v84 = vld [vmem:[%s0 + $0x11c] sm:$0xf]
  %v85 = vld [vmem:[%s0 + $0x120] sm:$0xf]
  %v86 = vld [vmem:[%s0 + $0x124] sm:$0xf]
  %v87 = vld [vmem:[%s0 + $0x128] sm:$0xf]
  %v88 = vld [vmem:[%s0 + $0x12c] sm:$0xf]
  %v89 = vld [vmem:[%s0 + $0x130] sm:$0xf]
  %v90 = vld [vmem:[%s0 + $0x134] sm:$0xf]
  %v91 = vld [vmem:[%s0 + $0x138] sm:$0xf]
  %v92 = vld [vmem:[%s0 + $0x13c] sm:$0xf]
  %v93 = vld [vmem:[%s0 + $0x140] sm:$0xf]
  %v94 = vld [vmem:[%s0 + $0x144] sm:$0xf]
  %v95 = vld [vmem:[%s0 + $0x148] sm:$0xf]
  %v96 = vld [vmem:[%s0 + $0x14c] sm:$0xf]
  %v97 = vld [vmem:[%s0 + $0x150] sm:$0xf]
  %v98 = vld [vmem:[%s0 + $0x154] sm:$0xf]
  %v99 = vld [vmem:[%s0 + $0x158] sm:$0xf]
  %v100 = vld [vmem:[%s0 + $0x15c] sm:$0xf]
  %v101 = vld [vmem:[%s0 + $0x160] sm:$0xf]
  %v102 = vld [vmem:[%s0 + $0x164] sm:$0xf]
  %v103 = vld [vmem:[%s0 + $0x168] sm:$0xf]
  %v104 = vld [vmem:[%s0 + $0x16c] sm:$0xf]
  %v105 = vld [vmem:[%s0 + $0x170] sm:$0xf]
  %v106 = vld [vmem:[%s0 + $0x174] sm:$0xf]
  %v107 = vld [vmem:[%s0 + $0x178] sm:$0xf]
  %v108 = vld [vmem:[%s0 + $0x17c] sm:$0xf]
  %v109 = vunpack.c.l.bf16 %v13
  %v110 = vunpack.c.l.bf16 %v14
  %v111 = vunpack.c.l.bf16 %v15
  %v112 = vunpack.c.l.bf16 %v16
  %v113 = vunpack.c.l.bf16 %v17
  %v114 = vunpack.c.l.bf16 %v18
  %v115 = vunpack.c.l.bf16 %v19
  %v116 = vunpack.c.l.bf16 %v20
  %v117 = vunpack.c.l.bf16 %v21
  %v118 = vunpack.c.l.bf16 %v22
  %v119 = vunpack.c.l.bf16 %v23
  %v120 = vunpack.c.l.bf16 %v24
  %v121 = vunpack.c.l.bf16 %v25
  %v122 = vunpack.c.l.bf16 %v26
  %v123 = vunpack.c.l.bf16 %v27
  %v124 = vunpack.c.l.bf16 %v28
  %v125 = vunpack.c.l.bf16 %v29
  %v126 = vunpack.c.l.bf16 %v30
  %v127 = vunpack.c.l.bf16 %v31
  %v128 = vunpack.c.l.bf16 %v32
  %v129 = vunpack.c.l.bf16 %v33
  %v130 = vunpack.c.l.bf16 %v34
  %v131 = vunpack.c.l.bf16 %v35
  %v132 = vunpack.c.l.bf16 %v36
  %v133 = vunpack.c.l.bf16 %v37
  %v134 = vunpack.c.l.bf16 %v38
  %v135 = vunpack.c.l.bf16 %v39
  %v136 = vunpack.c.l.bf16 %v40
  %v137 = vunpack.c.l.bf16 %v41
  %v138 = vunpack.c.l.bf16 %v42
  %v139 = vunpack.c.l.bf16 %v43
  %v140 = vunpack.c.l.bf16 %v44
  %v141 = vunpack.c.l.bf16 %v45
  %v142 = vunpack.c.l.bf16 %v46
  %v143 = vunpack.c.l.bf16 %v47
  %v144 = vunpack.c.l.bf16 %v48
  %v145 = vunpack.c.l.bf16 %v49
  %v146 = vunpack.c.l.bf16 %v50
  %v147 = vunpack.c.l.bf16 %v51
  %v148 = vunpack.c.l.bf16 %v52
  %v149 = vunpack.c.l.bf16 %v53
  %v150 = vunpack.c.l.bf16 %v54
  %v151 = vunpack.c.l.bf16 %v55
  %v152 = vunpack.c.l.bf16 %v56
  %v153 = vunpack.c.l.bf16 %v57
  %v154 = vunpack.c.l.bf16 %v58
  %v155 = vunpack.c.l.bf16 %v59
  %v156 = vunpack.c.l.bf16 %v60
  %v157 = vunpack.c.l.bf16 %v61
  %v158 = vunpack.c.l.bf16 %v62
  %v159 = vunpack.c.l.bf16 %v63
  %v160 = vunpack.c.l.bf16 %v64
  %v161 = vunpack.c.l.bf16 %v65
  %v162 = vunpack.c.l.bf16 %v66
  %v163 = vunpack.c.l.bf16 %v67
  %v164 = vunpack.c.l.bf16 %v68
  %v165 = vunpack.c.l.bf16 %v69
  %v166 = vunpack.c.l.bf16 %v70
  %v167 = vunpack.c.l.bf16 %v71
  %v168 = vunpack.c.l.bf16 %v72
  %v169 = vunpack.c.l.bf16 %v73
  %v170 = vunpack.c.l.bf16 %v74
  %v171 = vunpack.c.l.bf16 %v75
  %v172 = vunpack.c.l.bf16 %v76
  %v173 = vunpack.c.l.bf16 %v77
  %v174 = vunpack.c.l.bf16 %v78
  %v175 = vunpack.c.l.bf16 %v79
  %v176 = vunpack.c.l.bf16 %v80
  %v177 = vunpack.c.l.bf16 %v81
  %v178 = vunpack.c.l.bf16 %v82
  %v179 = vunpack.c.l.bf16 %v83
  %v180 = vunpack.c.l.bf16 %v84
  %v181 = vunpack.c.l.bf16 %v85
  %v182 = vunpack.c.l.bf16 %v86
  %v183 = vunpack.c.l.bf16 %v87
  %v184 = vunpack.c.l.bf16 %v88
  %v185 = vunpack.c.l.bf16 %v89
  %v186 = vunpack.c.l.bf16 %v90
  %v187 = vunpack.c.l.bf16 %v91
  %v188 = vunpack.c.l.bf16 %v92
  %v189 = vunpack.c.l.bf16 %v93
  %v190 = vunpack.c.l.bf16 %v94
  %v191 = vunpack.c.l.bf16 %v95
  %v192 = vunpack.c.l.bf16 %v96
  %v193 = vunpack.c.l.bf16 %v97
  %v194 = vunpack.c.l.bf16 %v98
  %v195 = vunpack.c.l.bf16 %v99
  %v196 = vunpack.c.l.bf16 %v100
  %v197 = vunpack.c.l.bf16 %v101
  %v198 = vunpack.c.l.bf16 %v102
  %v199 = vunpack.c.l.bf16 %v103
  %v200 = vunpack.c.l.bf16 %v104
  %v201 = vunpack.c.l.bf16 %v105
  %v202 = vunpack.c.l.bf16 %v106
  %v203 = vunpack.c.l.bf16 %v107
  %v204 = vunpack.c.l.bf16 %v108
  %v205 = vperm.slane %v11, 0
  %v206 = vmul.f32 %v109, %v205
  %v207 = vmul.f32 %v110, %v205
  %v208 = vmul.f32 %v111, %v205
  %v209 = vmul.f32 %v112, %v205
  %v210 = vmul.f32 %v113, %v205
  %v211 = vmul.f32 %v114, %v205
  %v212 = vmul.f32 %v115, %v205
  %v213 = vmul.f32 %v116, %v205
  %v214 = vmul.f32 %v117, %v205
  %v215 = vmul.f32 %v118, %v205
  %v216 = vmul.f32 %v119, %v205
  %v217 = vmul.f32 %v120, %v205
  %v218 = vmul.f32 %v121, %v205
  %v219 = vmul.f32 %v122, %v205
  %v220 = vmul.f32 %v123, %v205
  %v221 = vmul.f32 %v124, %v205
  %v222 = vmul.f32 %v125, %v205
  %v223 = vmul.f32 %v126, %v205
  %v224 = vmul.f32 %v127, %v205
  %v225 = vmul.f32 %v128, %v205
  %v226 = vmul.f32 %v129, %v205
  %v227 = vmul.f32 %v130, %v205
  %v228 = vmul.f32 %v131, %v205
  %v229 = vmul.f32 %v132, %v205
  %v230 = vmul.f32 %v133, %v205
  %v231 = vmul.f32 %v134, %v205
  %v232 = vmul.f32 %v135, %v205
  %v233 = vmul.f32 %v136, %v205
  %v234 = vmul.f32 %v137, %v205
  %v235 = vmul.f32 %v138, %v205
  %v236 = vmul.f32 %v139, %v205
  %v237 = vmul.f32 %v140, %v205
  %v238 = vmul.f32 %v141, %v205
  %v239 = vmul.f32 %v142, %v205
  %v240 = vmul.f32 %v143, %v205
  %v241 = vmul.f32 %v144, %v205
  %v242 = vmul.f32 %v145, %v205
  %v243 = vmul.f32 %v146, %v205
  %v244 = vmul.f32 %v147, %v205
  %v245 = vmul.f32 %v148, %v205
  %v246 = vmul.f32 %v149, %v205
  %v247 = vmul.f32 %v150, %v205
  %v248 = vmul.f32 %v151, %v205
  %v249 = vmul.f32 %v152, %v205
  %v250 = vmul.f32 %v153, %v205
  %v251 = vmul.f32 %v154, %v205
  %v252 = vmul.f32 %v155, %v205
  %v253 = vmul.f32 %v156, %v205
  %v254 = vmul.f32 %v157, %v205
  %v255 = vmul.f32 %v158, %v205
  %v256 = vmul.f32 %v159, %v205
  %v257 = vmul.f32 %v160, %v205
  %v258 = vmul.f32 %v161, %v205
  %v259 = vmul.f32 %v162, %v205
  %v260 = vmul.f32 %v163, %v205
  %v261 = vmul.f32 %v164, %v205
  %v262 = vmul.f32 %v165, %v205
  %v263 = vmul.f32 %v166, %v205
  %v264 = vmul.f32 %v167, %v205
  %v265 = vmul.f32 %v168, %v205
  %v266 = vmul.f32 %v169, %v205
  %v267 = vmul.f32 %v170, %v205
  %v268 = vmul.f32 %v171, %v205
  %v269 = vmul.f32 %v172, %v205
  %v270 = vmul.f32 %v173, %v205
  %v271 = vmul.f32 %v174, %v205
  %v272 = vmul.f32 %v175, %v205
  %v273 = vmul.f32 %v176, %v205
  %v274 = vmul.f32 %v177, %v205
  %v275 = vmul.f32 %v178, %v205
  %v276 = vmul.f32 %v179, %v205
  %v277 = vmul.f32 %v180, %v205
  %v278 = vmul.f32 %v181, %v205
  %v279 = vmul.f32 %v182, %v205
  %v280 = vmul.f32 %v183, %v205
  %v281 = vmul.f32 %v184, %v205
  %v282 = vmul.f32 %v185, %v205
  %v283 = vmul.f32 %v186, %v205
  %v284 = vmul.f32 %v187, %v205
  %v285 = vmul.f32 %v188, %v205
  %v286 = vmul.f32 %v189, %v205
  %v287 = vmul.f32 %v190, %v205
  %v288 = vmul.f32 %v191, %v205
  %v289 = vmul.f32 %v192, %v205
  %v290 = vmul.f32 %v193, %v205
  %v291 = vmul.f32 %v194, %v205
  %v292 = vmul.f32 %v195, %v205
  %v293 = vmul.f32 %v196, %v205
  %v294 = vmul.f32 %v197, %v205
  %v295 = vmul.f32 %v198, %v205
  %v296 = vmul.f32 %v199, %v205
  %v297 = vmul.f32 %v200, %v205
  %v298 = vmul.f32 %v201, %v205
  %v299 = vmul.f32 %v202, %v205
  %v300 = vmul.f32 %v203, %v205
  %v301 = vmul.f32 %v204, %v205
  %v302 = vperm.slane %v12, 0
  %v303 = vadd.f32 %v206, %v302
  %v304 = vadd.f32 %v207, %v302
  %v305 = vadd.f32 %v208, %v302
  %v306 = vadd.f32 %v209, %v302
  %v307 = vadd.f32 %v210, %v302
  %v308 = vadd.f32 %v211, %v302
  %v309 = vadd.f32 %v212, %v302
  %v310 = vadd.f32 %v213, %v302
  %v311 = vadd.f32 %v214, %v302
  %v312 = vadd.f32 %v215, %v302
  %v313 = vadd.f32 %v216, %v302
  %v314 = vadd.f32 %v217, %v302
  %v315 = vadd.f32 %v218, %v302
  %v316 = vadd.f32 %v219, %v302
  %v317 = vadd.f32 %v220, %v302
  %v318 = vadd.f32 %v221, %v302
  %v319 = vadd.f32 %v222, %v302
  %v320 = vadd.f32 %v223, %v302
  %v321 = vadd.f32 %v224, %v302
  %v322 = vadd.f32 %v225, %v302
  %v323 = vadd.f32 %v226, %v302
  %v324 = vadd.f32 %v227, %v302
  %v325 = vadd.f32 %v228, %v302
  %v326 = vadd.f32 %v229, %v302
  %v327 = vadd.f32 %v230, %v302
  %v328 = vadd.f32 %v231, %v302
  %v329 = vadd.f32 %v232, %v302
  %v330 = vadd.f32 %v233, %v302
  %v331 = vadd.f32 %v234, %v302
  %v332 = vadd.f32 %v235, %v302
  %v333 = vadd.f32 %v236, %v302
  %v334 = vadd.f32 %v237, %v302
  %v335 = vadd.f32 %v238, %v302
  %v336 = vadd.f32 %v239, %v302
  %v337 = vadd.f32 %v240, %v302
  %v338 = vadd.f32 %v241, %v302
  %v339 = vadd.f32 %v242, %v302
  %v340 = vadd.f32 %v243, %v302
  %v341 = vadd.f32 %v244, %v302
  %v342 = vadd.f32 %v245, %v302
  %v343 = vadd.f32 %v246, %v302
  %v344 = vadd.f32 %v247, %v302
  %v345 = vadd.f32 %v248, %v302
  %v346 = vadd.f32 %v249, %v302
  %v347 = vadd.f32 %v250, %v302
  %v348 = vadd.f32 %v251, %v302
  %v349 = vadd.f32 %v252, %v302
  %v350 = vadd.f32 %v253, %v302
  %v351 = vadd.f32 %v254, %v302
  %v352 = vadd.f32 %v255, %v302
  %v353 = vadd.f32 %v256, %v302
  %v354 = vadd.f32 %v257, %v302
  %v355 = vadd.f32 %v258, %v302
  %v356 = vadd.f32 %v259, %v302
  %v357 = vadd.f32 %v260, %v302
  %v358 = vadd.f32 %v261, %v302
  %v359 = vadd.f32 %v262, %v302
  %v360 = vadd.f32 %v263, %v302
  %v361 = vadd.f32 %v264, %v302
  %v362 = vadd.f32 %v265, %v302
  %v363 = vadd.f32 %v266, %v302
  %v364 = vadd.f32 %v267, %v302
  %v365 = vadd.f32 %v268, %v302
  %v366 = vadd.f32 %v269, %v302
  %v367 = vadd.f32 %v270, %v302
  %v368 = vadd.f32 %v271, %v302
  %v369 = vadd.f32 %v272, %v302
  %v370 = vadd.f32 %v273, %v302
  %v371 = vadd.f32 %v274, %v302
  %v372 = vadd.f32 %v275, %v302
  %v373 = vadd.f32 %v276, %v302
  %v374 = vadd.f32 %v277, %v302
  %v375 = vadd.f32 %v278, %v302
  %v376 = vadd.f32 %v279, %v302
  %v377 = vadd.f32 %v280, %v302
  %v378 = vadd.f32 %v281, %v302
  %v379 = vadd.f32 %v282, %v302
  %v380 = vadd.f32 %v283, %v302
  %v381 = vadd.f32 %v284, %v302
  %v382 = vadd.f32 %v285, %v302
  %v383 = vadd.f32 %v286, %v302
  %v384 = vadd.f32 %v287, %v302
  %v385 = vadd.f32 %v288, %v302
  %v386 = vadd.f32 %v289, %v302
  %v387 = vadd.f32 %v290, %v302
  %v388 = vadd.f32 %v291, %v302
  %v389 = vadd.f32 %v292, %v302
  %v390 = vadd.f32 %v293, %v302
  %v391 = vadd.f32 %v294, %v302
  %v392 = vadd.f32 %v295, %v302
  %v393 = vadd.f32 %v296, %v302
  %v394 = vadd.f32 %v297, %v302
  %v395 = vadd.f32 %v298, %v302
  %v396 = vadd.f32 %v299, %v302
  %v397 = vadd.f32 %v300, %v302
  %v398 = vadd.f32 %v301, %v302
  %v399 = vmax.f32 %v303, 0.0
  %v400 = vmax.f32 %v304, 0.0
  %v401 = vmax.f32 %v305, 0.0
  %v402 = vmax.f32 %v306, 0.0
  %v403 = vmax.f32 %v307, 0.0
  %v404 = vmax.f32 %v308, 0.0
  %v405 = vmax.f32 %v309, 0.0
  %v406 = vmax.f32 %v310, 0.0
  %v407 = vmax.f32 %v311, 0.0
  %v408 = vmax.f32 %v312, 0.0
  %v409 = vmax.f32 %v313, 0.0
  %v410 = vmax.f32 %v314, 0.0
  %v411 = vmax.f32 %v315, 0.0
  %v412 = vmax.f32 %v316, 0.0
  %v413 = vmax.f32 %v317, 0.0
  %v414 = vmax.f32 %v318, 0.0
  %v415 = vmax.f32 %v319, 0.0
  %v416 = vmax.f32 %v320, 0.0
  %v417 = vmax.f32 %v321, 0.0
  %v418 = vmax.f32 %v322, 0.0
  %v419 = vmax.f32 %v323, 0.0
  %v420 = vmax.f32 %v324, 0.0
  %v421 = vmax.f32 %v325, 0.0
  %v422 = vmax.f32 %v326, 0.0
  %v423 = vmax.f32 %v327, 0.0
  %v424 = vmax.f32 %v328, 0.0
  %v425 = vmax.f32 %v329, 0.0
  %v426 = vmax.f32 %v330, 0.0
  %v427 = vmax.f32 %v331, 0.0
  %v428 = vmax.f32 %v332, 0.0
  %v429 = vmax.f32 %v333, 0.0
  %v430 = vmax.f32 %v334, 0.0
  %v431 = vmax.f32 %v335, 0.0
  %v432 = vmax.f32 %v336, 0.0
  %v433 = vmax.f32 %v337, 0.0
  %v434 = vmax.f32 %v338, 0.0
  %v435 = vmax.f32 %v339, 0.0
  %v436 = vmax.f32 %v340, 0.0
  %v437 = vmax.f32 %v341, 0.0
  %v438 = vmax.f32 %v342, 0.0
  %v439 = vmax.f32 %v343, 0.0
  %v440 = vmax.f32 %v344, 0.0
  %v441 = vmax.f32 %v345, 0.0
  %v442 = vmax.f32 %v346, 0.0
  %v443 = vmax.f32 %v347, 0.0
  %v444 = vmax.f32 %v348, 0.0
  %v445 = vmax.f32 %v349, 0.0
  %v446 = vmax.f32 %v350, 0.0
  %v447 = vmax.f32 %v351, 0.0
  %v448 = vmax.f32 %v352, 0.0
  %v449 = vmax.f32 %v353, 0.0
  %v450 = vmax.f32 %v354, 0.0
  %v451 = vmax.f32 %v355, 0.0
  %v452 = vmax.f32 %v356, 0.0
  %v453 = vmax.f32 %v357, 0.0
  %v454 = vmax.f32 %v358, 0.0
  %v455 = vmax.f32 %v359, 0.0
  %v456 = vmax.f32 %v360, 0.0
  %v457 = vmax.f32 %v361, 0.0
  %v458 = vmax.f32 %v362, 0.0
  %v459 = vmax.f32 %v363, 0.0
  %v460 = vmax.f32 %v364, 0.0
  %v461 = vmax.f32 %v365, 0.0
  %v462 = vmax.f32 %v366, 0.0
  %v463 = vmax.f32 %v367, 0.0
  %v464 = vmax.f32 %v368, 0.0
  %v465 = vmax.f32 %v369, 0.0
  %v466 = vmax.f32 %v370, 0.0
  %v467 = vmax.f32 %v371, 0.0
  %v468 = vmax.f32 %v372, 0.0
  %v469 = vmax.f32 %v373, 0.0
  %v470 = vmax.f32 %v374, 0.0
  %v471 = vmax.f32 %v375, 0.0
  %v472 = vmax.f32 %v376, 0.0
  %v473 = vmax.f32 %v377, 0.0
  %v474 = vmax.f32 %v378, 0.0
  %v475 = vmax.f32 %v379, 0.0
  %v476 = vmax.f32 %v380, 0.0
  %v477 = vmax.f32 %v381, 0.0
  %v478 = vmax.f32 %v382, 0.0
  %v479 = vmax.f32 %v383, 0.0
  %v480 = vmax.f32 %v384, 0.0
  %v481 = vmax.f32 %v385, 0.0
  %v482 = vmax.f32 %v386, 0.0
  %v483 = vmax.f32 %v387, 0.0
  %v484 = vmax.f32 %v388, 0.0
  %v485 = vmax.f32 %v389, 0.0
  %v486 = vmax.f32 %v390, 0.0
  %v487 = vmax.f32 %v391, 0.0
  %v488 = vmax.f32 %v392, 0.0
  %v489 = vmax.f32 %v393, 0.0
  %v490 = vmax.f32 %v394, 0.0
  %v491 = vmax.f32 %v395, 0.0
  %v492 = vmax.f32 %v396, 0.0
  %v493 = vmax.f32 %v397, 0.0
  %v494 = vmax.f32 %v398, 0.0
  %495 = vst [vmem:[%s2] sm:$0xff] %v399
  %496 = vst [vmem:[%s2 + $0x8] sm:$0xff] %v400
  %497 = vst [vmem:[%s2 + $0x10] sm:$0xff] %v401
  %498 = vst [vmem:[%s2 + $0x18] sm:$0xff] %v402
  %499 = vst [vmem:[%s2 + $0x20] sm:$0xff] %v403
  %500 = vst [vmem:[%s2 + $0x28] sm:$0xff] %v404
  %501 = vst [vmem:[%s2 + $0x30] sm:$0xff] %v405
  %502 = vst [vmem:[%s2 + $0x38] sm:$0xff] %v406
  %503 = vst [vmem:[%s2 + $0x40] sm:$0xff] %v407
  %504 = vst [vmem:[%s2 + $0x48] sm:$0xff] %v408
  %505 = vst [vmem:[%s2 + $0x50] sm:$0xff] %v409
  %506 = vst [vmem:[%s2 + $0x58] sm:$0xff] %v410
  %507 = vst [vmem:[%s2 + $0x60] sm:$0xff] %v411
  %508 = vst [vmem:[%s2 + $0x68] sm:$0xff] %v412
  %509 = vst [vmem:[%s2 + $0x70] sm:$0xff] %v413
  %510 = vst [vmem:[%s2 + $0x78] sm:$0xff] %v414
  %511 = vst [vmem:[%s2 + $0x80] sm:$0xff] %v415
  %512 = vst [vmem:[%s2 + $0x88] sm:$0xff] %v416
  %513 = vst [vmem:[%s2 + $0x90] sm:$0xff] %v417
  %514 = vst [vmem:[%s2 + $0x98] sm:$0xff] %v418
  %515 = vst [vmem:[%s2 + $0xa0] sm:$0xff] %v419
  %516 = vst [vmem:[%s2 + $0xa8] sm:$0xff] %v420
  %517 = vst [vmem:[%s2 + $0xb0] sm:$0xff] %v421
  %518 = vst [vmem:[%s2 + $0xb8] sm:$0xff] %v422
  %519 = vst [vmem:[%s2 + $0xc0] sm:$0xff] %v423
  %520 = vst [vmem:[%s2 + $0xc8] sm:$0xff] %v424
  %521 = vst [vmem:[%s2 + $0xd0] sm:$0xff] %v425
  %522 = vst [vmem:[%s2 + $0xd8] sm:$0xff] %v426
  %523 = vst [vmem:[%s2 + $0xe0] sm:$0xff] %v427
  %524 = vst [vmem:[%s2 + $0xe8] sm:$0xff] %v428
  %525 = vst [vmem:[%s2 + $0xf0] sm:$0xff] %v429
  %526 = vst [vmem:[%s2 + $0xf8] sm:$0xff] %v430
  %527 = vst [vmem:[%s2 + $0x100] sm:$0xff] %v431
  %528 = vst [vmem:[%s2 + $0x108] sm:$0xff] %v432
  %529 = vst [vmem:[%s2 + $0x110] sm:$0xff] %v433
  %530 = vst [vmem:[%s2 + $0x118] sm:$0xff] %v434
  %531 = vst [vmem:[%s2 + $0x120] sm:$0xff] %v435
  %532 = vst [vmem:[%s2 + $0x128] sm:$0xff] %v436
  %533 = vst [vmem:[%s2 + $0x130] sm:$0xff] %v437
  %534 = vst [vmem:[%s2 + $0x138] sm:$0xff] %v438
  %535 = vst [vmem:[%s2 + $0x140] sm:$0xff] %v439
  %536 = vst [vmem:[%s2 + $0x148] sm:$0xff] %v440
  %537 = vst [vmem:[%s2 + $0x150] sm:$0xff] %v441
  %538 = vst [vmem:[%s2 + $0x158] sm:$0xff] %v442
  %539 = vst [vmem:[%s2 + $0x160] sm:$0xff] %v443
  %540 = vst [vmem:[%s2 + $0x168] sm:$0xff] %v444
  %541 = vst [vmem:[%s2 + $0x170] sm:$0xff] %v445
  %542 = vst [vmem:[%s2 + $0x178] sm:$0xff] %v446
  %543 = vst [vmem:[%s2 + $0x180] sm:$0xff] %v447
  %544 = vst [vmem:[%s2 + $0x188] sm:$0xff] %v448
  %545 = vst [vmem:[%s2 + $0x190] sm:$0xff] %v449
  %546 = vst [vmem:[%s2 + $0x198] sm:$0xff] %v450
  %547 = vst [vmem:[%s2 + $0x1a0] sm:$0xff] %v451
  %548 = vst [vmem:[%s2 + $0x1a8] sm:$0xff] %v452
  %549 = vst [vmem:[%s2 + $0x1b0] sm:$0xff] %v453
  %550 = vst [vmem:[%s2 + $0x1b8] sm:$0xff] %v454
  %551 = vst [vmem:[%s2 + $0x1c0] sm:$0xff] %v455
  %552 = vst [vmem:[%s2 + $0x1c8] sm:$0xff] %v456
  %553 = vst [vmem:[%s2 + $0x1d0] sm:$0xff] %v457
  %554 = vst [vmem:[%s2 + $0x1d8] sm:$0xff] %v458
  %555 = vst [vmem:[%s2 + $0x1e0] sm:$0xff] %v459
  %556 = vst [vmem:[%s2 + $0x1e8] sm:$0xff] %v460
  %557 = vst [vmem:[%s2 + $0x1f0] sm:$0xff] %v461
  %558 = vst [vmem:[%s2 + $0x1f8] sm:$0xff] %v462
  %559 = vst [vmem:[%s2 + $0x200] sm:$0xff] %v463
  %560 = vst [vmem:[%s2 + $0x208] sm:$0xff] %v464
  %561 = vst [vmem:[%s2 + $0x210] sm:$0xff] %v465
  %562 = vst [vmem:[%s2 + $0x218] sm:$0xff] %v466
  %563 = vst [vmem:[%s2 + $0x220] sm:$0xff] %v467
  %564 = vst [vmem:[%s2 + $0x228] sm:$0xff] %v468
  %565 = vst [vmem:[%s2 + $0x230] sm:$0xff] %v469
  %566 = vst [vmem:[%s2 + $0x238] sm:$0xff] %v470
  %567 = vst [vmem:[%s2 + $0x240] sm:$0xff] %v471
  %568 = vst [vmem:[%s2 + $0x248] sm:$0xff] %v472
  %569 = vst [vmem:[%s2 + $0x250] sm:$0xff] %v473
  %570 = vst [vmem:[%s2 + $0x258] sm:$0xff] %v474
  %571 = vst [vmem:[%s2 + $0x260] sm:$0xff] %v475
  %572 = vst [vmem:[%s2 + $0x268] sm:$0xff] %v476
  %573 = vst [vmem:[%s2 + $0x270] sm:$0xff] %v477
  %574 = vst [vmem:[%s2 + $0x278] sm:$0xff] %v478
  %575 = vst [vmem:[%s2 + $0x280] sm:$0xff] %v479
  %576 = vst [vmem:[%s2 + $0x288] sm:$0xff] %v480
  %577 = vst [vmem:[%s2 + $0x290] sm:$0xff] %v481
  %578 = vst [vmem:[%s2 + $0x298] sm:$0xff] %v482
  %579 = vst [vmem:[%s2 + $0x2a0] sm:$0xff] %v483
  %580 = vst [vmem:[%s2 + $0x2a8] sm:$0xff] %v484
  %581 = vst [vmem:[%s2 + $0x2b0] sm:$0xff] %v485
  %582 = vst [vmem:[%s2 + $0x2b8] sm:$0xff] %v486
  %583 = vst [vmem:[%s2 + $0x2c0] sm:$0xff] %v487
  %584 = vst [vmem:[%s2 + $0x2c8] sm:$0xff] %v488
  %585 = vst [vmem:[%s2 + $0x2d0] sm:$0xff] %v489
  %586 = vst [vmem:[%s2 + $0x2d8] sm:$0xff] %v490
  %587 = vst [vmem:[%s2 + $0x2e0] sm:$0xff] %v491
  %588 = vst [vmem:[%s2 + $0x2e8] sm:$0xff] %v492
  %589 = vst [vmem:[%s2 + $0x2f0] sm:$0xff] %v493
  %590 = vst [vmem:[%s2 + $0x2f8] sm:$0xff] %v494
  // Predicated region
  $region10: #{conv_bn_relu.3} parent=0 // pred_check
    _
  $region11: #{conv_bn_relu.3} parent=0 // pred_check_branch
    %592 = sbr.rel (0) target = $region13
  $region12: #{conv_bn_relu.3} parent=0 // pred_region
    _
  $region13: #{conv_bn_relu.3} parent=0 // pred_fallthru
    _
  // Predicated region
  $region14: #{conv_bn_relu.3} parent=0 // pred_check
    _
  $region15: #{conv_bn_relu.3} parent=0 // pred_check_branch
    %594 = sbr.rel (0) target = $region17
  $region16: #{conv_bn_relu.3} parent=0 // pred_region
    _
  $region17: #{conv_bn_relu.3} parent=0 // pred_fallthru
    _

// kernel: conv_bn_relu.2
$region0: #{conv_bn_relu.2}
  #allocation0 [shape = 'u32[]', space=smem, size = 0x4, offset = 0x4, fixed_abs, tag = 'smem constant byte address 0x4 - core index']
  #allocation1 [shape = 'u32[72,128]{1,0:T(1,128)}', space=vmem, size = 0x9000, scoped, tag = 'internal scratch']
  %s0 = inlined_call_operand.vmem [shape: bf16[832,4], index: 0, kind: input, shape index: {}, may-alias: {0,1}]
  %s1 = inlined_call_operand.vmem [shape: bf16[832,4], index: 1, kind: input, shape index: {}, may-alias: {0,1}]
  %s2 = inlined_call_operand.vmem [shape: bf16[9,4,128], index: 2, kind: input, shape index: {}]
  %s3 = inlined_call_operand.vmem [shape: f32[768,1], index: 3, kind: input, shape index: {}]
  %s4 = inlined_call_operand.vmem [shape: bf16[768,128], index: 4, kind: output, shape index: {0}]
  %s5 = inlined_call_operand.vmem [shape: f32[3,2,128], index: 5, kind: output, shape index: {1}]
  %6 = xla_tuple %s4, %s5
  %s7 = sld [smem:[#allocation0]]
  $region57: #{conv_bn_relu.2} parent=0
    _
  %s9 = ssub.s32 1, %s7
  %s10 = scalar_select 0, %s9, %s7
  loop: start=0, step=1, limit=5
  $region2: #{conv_bn_relu.2} parent=0 // loop_pre_header
    _
  $region3: #{conv_bn_relu.2} parent=0 // loop_header
    %s12 = sphi 0, %s16
    %p13 = scmp.ge.s32.totalorder %s12, 5
    %s22 = sphi 0, %s24
    %s25 = sphi 0, %s22
    %s26 = sphi 0, %s25
    %s42 = sphi 0, %s26
    %s52 = sphi 0, %s54
    %s55 = sphi 0, %s52
    %s56 = sphi 0, %s55
    %s72 = sphi 0, %s56
    %s76 = sphi 0, %s76
    %s78 = sphi 0, %s76
    %s79 = sphi 0, %s78
    %s93 = sphi 0, %s79
    %s99 = sphi 0, %s101
    %s102 = sphi 0, %s99
    %s103 = sphi 0, %s102
    %s119 = sphi 0, %s103
    %s125 = sphi 0, %s127
    %s128 = sphi 0, %s125
    %s129 = sphi 0, %s128
    %s145 = sphi 0, %s129
    %s151 = sphi 0, %s153
    %s154 = sphi 0, %s151
    %s155 = sphi 0, %s154
    %s171 = sphi 0, %s155
  $region4: #{conv_bn_relu.2} parent=0 // loop_header_branch
    %15 = sbr.rel (%p13) target = $region8
  $region5: #{conv_bn_relu.2} parent=0 // loop_body
    %s17 = ssub.s32 %s12, 1
    %s18 = ssub.s32 %s12, 2
    %s19 = sadd.s32 %s12, 1
    %s20 = ssub.s32 %s12, %s19
    %p21 = scmp.eq.s32.totalorder %s20, 0
    %s23 = sadd.s32 %s22, 1
    %s24 = scalar_select %p21, %s22, %s23
    %p27 = pneg %p21
    %p28 = scmp.eq.s32.totalorder %s12, 2
    %p29 = por %p27, %p28
    %p30 = scmp.ne.s32.totalorder %s22, %s25
    %p31 = scmp.eq.s32.totalorder %s12, 0
    %p32 = por %p30, %p31
    %p33 = scmp.ne.s32.totalorder %s22, %s25
    %p34 = scmp.eq.s32.totalorder %s17, 2
    %p35 = por %p33, %p34
    %p36 = scmp.ne.s32.totalorder %s25, %s26
    %p37 = scmp.eq.s32.totalorder %s17, 0
    %p38 = por %p36, %p37
    %p39 = scmp.ne.s32.totalorder %s25, %s26
    %p40 = scmp.eq.s32.totalorder %s18, 2
    %p41 = por %p39, %p40
    %p43 = scmp.ne.s32.totalorder %s26, %s42
    %p44 = scmp.eq.s32.totalorder %s18, 0
    %p45 = por %p43, %p44
    %s46 = sadd.s32 %s12, 1
    %s47 = smul.u32 %s46, 4
    %s48 = sadd.s32 %s19, 1
    %s49 = smul.u32 %s48, 4
    %s50 = ssub.s32 %s47, %s49
    %p51 = scmp.eq.s32.totalorder %s50, 0
    %s53 = sadd.s32 %s52, 1
    %s54 = scalar_select %p51, %s52, %s53
    %p57 = pneg %p51
    %p58 = scmp.eq.s32.totalorder %s12, 2
    %p59 = por %p57, %p58
    %p60 = scmp.ne.s32.totalorder %s52, %s55
    %p61 = scmp.eq.s32.totalorder %s12, 0
    %p62 = por %p60, %p61
    %p63 = scmp.ne.s32.totalorder %s52, %s55
    %p64 = scmp.eq.s32.totalorder %s17, 2
    %p65 = por %p63, %p64
    %p66 = scmp.ne.s32.totalorder %s55, %s56
    %p67 = scmp.eq.s32.totalorder %s17, 0
    %p68 = por %p66, %p67
    %p69 = scmp.ne.s32.totalorder %s55, %s56
    %p70 = scmp.eq.s32.totalorder %s18, 2
    %p71 = por %p69, %p70
    %p73 = scmp.ne.s32.totalorder %s56, %s72
    %p74 = scmp.eq.s32.totalorder %s18, 0
    %p75 = por %p73, %p74
    %s77 = sadd.s32 %s76, 1
    %p80 = scmp.eq.s32.totalorder %s12, 2
    %p81 = scmp.ne.s32.totalorder %s76, %s78
    %p82 = scmp.eq.s32.totalorder %s12, 0
    %p83 = por %p81, %p82
    %p84 = scmp.ne.s32.totalorder %s76, %s78
    %p85 = scmp.eq.s32.totalorder %s17, 2
    %p86 = por %p84, %p85
    %p87 = scmp.ne.s32.totalorder %s78, %s79
    %p88 = scmp.eq.s32.totalorder %s17, 0
    %p89 = por %p87, %p88
    %p90 = scmp.ne.s32.totalorder %s78, %s79
    %p91 = scmp.eq.s32.totalorder %s18, 2
    %p92 = por %p90, %p91
    %p94 = scmp.ne.s32.totalorder %s79, %s93
    %p95 = scmp.eq.s32.totalorder %s18, 0
    %p96 = por %p94, %p95
    %s97 = ssub.s32 %s12, %s19
    %p98 = scmp.eq.s32.totalorder %s97, 0
    %s100 = sadd.s32 %s99, 1
    %s101 = scalar_select %p98, %s99, %s100
    %p104 = pneg %p98
    %p105 = scmp.eq.s32.totalorder %s12, 2
    %p106 = por %p104, %p105
    %p107 = scmp.ne.s32.totalorder %s99, %s102
    %p108 = scmp.eq.s32.totalorder %s12, 0
    %p109 = por %p107, %p108
    %p110 = scmp.ne.s32.totalorder %s99, %s102
    %p111 = scmp.eq.s32.totalorder %s17, 2
    %p112 = por %p110, %p111
    %p113 = scmp.ne.s32.totalorder %s102, %s103
    %p114 = scmp.eq.s32.totalorder %s17, 0
    %p115 = por %p113, %p114
    %p116 = scmp.ne.s32.totalorder %s102, %s103
    %p117 = scmp.eq.s32.totalorder %s18, 2
    %p118 = por %p116, %p117
    %p120 = scmp.ne.s32.totalorder %s103, %s119
    %p121 = scmp.eq.s32.totalorder %s18, 0
    %p122 = por %p120, %p121
    %s123 = ssub.s32 %s12, %s19
    %p124 = scmp.eq.s32.totalorder %s123, 0
    %s126 = sadd.s32 %s125, 1
    %s127 = scalar_select %p124, %s125, %s126
    %p130 = pneg %p124
    %p131 = scmp.eq.s32.totalorder %s12, 2
    %p132 = por %p130, %p131
    %p133 = scmp.ne.s32.totalorder %s125, %s128
    %p134 = scmp.eq.s32.totalorder %s12, 0
    %p135 = por %p133, %p134
    %p136 = scmp.ne.s32.totalorder %s125, %s128
    %p137 = scmp.eq.s32.totalorder %s17, 2
    %p138 = por %p136, %p137
    %p139 = scmp.ne.s32.totalorder %s128, %s129
    %p140 = scmp.eq.s32.totalorder %s17, 0
    %p141 = por %p139, %p140
    %p142 = scmp.ne.s32.totalorder %s128, %s129
    %p143 = scmp.eq.s32.totalorder %s18, 2
    %p144 = por %p142, %p143
    %p146 = scmp.ne.s32.totalorder %s129, %s145
    %p147 = scmp.eq.s32.totalorder %s18, 0
    %p148 = por %p146, %p147
    %s149 = ssub.s32 %s12, %s19
    %p150 = scmp.eq.s32.totalorder %s149, 0
    %s152 = sadd.s32 %s151, 1
    %s153 = scalar_select %p150, %s151, %s152
    %p156 = pneg %p150
    %p157 = scmp.eq.s32.totalorder %s12, 2
    %p158 = por %p156, %p157
    %p159 = scmp.ne.s32.totalorder %s151, %s154
    %p160 = scmp.eq.s32.totalorder %s12, 0
    %p161 = por %p159, %p160
    %p162 = scmp.ne.s32.totalorder %s151, %s154
    %p163 = scmp.eq.s32.totalorder %s17, 2
    %p164 = por %p162, %p163
    %p165 = scmp.ne.s32.totalorder %s154, %s155
    %p166 = scmp.eq.s32.totalorder %s17, 0
    %p167 = por %p165, %p166
    %p168 = scmp.ne.s32.totalorder %s154, %s155
    %p169 = scmp.eq.s32.totalorder %s18, 2
    %p170 = por %p168, %p169
    %p172 = scmp.ne.s32.totalorder %s155, %s171
    %p173 = scmp.eq.s32.totalorder %s18, 0
    %p174 = por %p172, %p173
    %p175 = scmp.le.s32.totalorder 1, %s12
    %p176 = scmp.lt.s32.totalorder %s12, 4
    %p177 = pnand %p175, %p176
    %p178 = pneg %p177
    // Predicated region
    $region9: #{conv_bn_relu.2} parent=5 // pred_check
      _
    $region10: #{conv_bn_relu.2} parent=5 // pred_check_branch
      %180 = sbr.rel (%p177) target = $region12
    $region11: #{conv_bn_relu.2} parent=5 // pred_region
      %s181 = ssub.s32 %s12, 1
      // Predicated region
      $region13: #{conv_bn_relu.2} parent=11 // pred_check
        %p182 = pneg %p89
      $region14: #{conv_bn_relu.2} parent=11 // pred_check_branch
        %184 = sbr.rel (%p182) target = $region16
      $region15: #{conv_bn_relu.2} parent=11 // pred_region
        _
      $region16: #{conv_bn_relu.2} parent=11 // pred_fallthru
        _
    $region12: #{conv_bn_relu.2} parent=5 // pred_fallthru
      _
    %p185 = scmp.lt.s32.totalorder %s12, 3
    // Predicated region
    $region17: #{conv_bn_relu.2} parent=5 // pred_check
      %p186 = pneg %p185
    $region18: #{conv_bn_relu.2} parent=5 // pred_check_branch
      %188 = sbr.rel (%p186) target = $region20
    $region19: #{conv_bn_relu.2} parent=5 // pred_region
      // Predicated region
      $region21: #{conv_bn_relu.2} parent=19 // pred_check
        %p189 = pneg %p32
      $region22: #{conv_bn_relu.2} parent=19 // pred_check_branch
        %191 = sbr.rel (%p189) target = $region24
      $region23: #{conv_bn_relu.2} parent=19 // pred_region
        %s192 = smul.u32 32, %s12
        %s193 = ssub.s32 104, %s192
        %p194 = scmp.lt.s32.totalorder %s193, 32
        %s195 = scalar_select %p194, %s193, 32
        %s196 = smul.u32 4, %s195
        %p197 = scmp.lt.s32.totalorder %s192, 103
        %s198 = scalar_select %p197, %s192, 103
        %s199 = smul.addr %s198, 4
        %s200 = scalar_lea.vmem %s0, %s199
        %s201 = smul.u32 32, %s12
        %s202 = ssub.s32 104, %s201
        %p203 = scmp.lt.s32.totalorder %s202, 32
        %s204 = scalar_select %p203, %s202, 32
        %s205 = smul.u32 4, %s204
      $region24: #{conv_bn_relu.2} parent=19 // pred_fallthru
        _
      // Predicated region
      $region25: #{conv_bn_relu.2} parent=19 // pred_check
        %p206 = pneg %p62
      $region26: #{conv_bn_relu.2} parent=19 // pred_check_branch
        %208 = sbr.rel (%p206) target = $region28
      $region27: #{conv_bn_relu.2} parent=19 // pred_region
        %s209 = sadd.s32 %s12, 1
        %s210 = smul.u32 %s209, 4
        %s211 = smul.u32 8, %s210
        %p212 = scmp.lt.s32.totalorder %s211, 103
        %s213 = scalar_select %p212, %s211, 103
        %s214 = smul.addr %s213, 4
        %s215 = scalar_lea.vmem %s1, %s214
        %s216 = sadd.s32 %s12, 1
        %s217 = smul.u32 %s216, 4
        %s218 = smul.u32 8, %s217
      $region28: #{conv_bn_relu.2} parent=19 // pred_fallthru
        _
      // Predicated region
      $region29: #{conv_bn_relu.2} parent=19 // pred_check
        %p219 = pneg %p109
      $region30: #{conv_bn_relu.2} parent=19 // pred_check_branch
        %221 = sbr.rel (%p219) target = $region32
      $region31: #{conv_bn_relu.2} parent=19 // pred_region
        %s222 = smul.u32 32, %s12
        %p223 = scmp.lt.s32.totalorder %s222, 95
        %s224 = scalar_select %p223, %s222, 95
        %s225 = smul.addr %s224, 8
        %s226 = scalar_lea.vmem %s3, %s225
        %s227 = smul.u32 32, %s12
      $region32: #{conv_bn_relu.2} parent=19 // pred_fallthru
        _
    $region20: #{conv_bn_relu.2} parent=5 // pred_fallthru
      _
    %p228 = scmp.le.s32.totalorder 1, %s12
    %p229 = scmp.lt.s32.totalorder %s12, 4
    %p230 = pnand %p228, %p229
    %p231 = pneg %p230
    // Predicated region
    $region33: #{conv_bn_relu.2} parent=5 // pred_check
      _
    $region34: #{conv_bn_relu.2} parent=5 // pred_check_branch
      %233 = sbr.rel (%p230) target = $region36
    $region35: #{conv_bn_relu.2} parent=5 // pred_region
      %s234 = ssub.s32 %s12, 1
      %s235 = smul.u32 32, %s17
      %s236 = ssub.s32 104, %s235
      %p237 = scmp.lt.s32.totalorder %s236, 32
      %s238 = scalar_select %p237, %s236, 32
      %s239 = smul.u32 4, %s238
      %p240 = scmp.lt.s32.totalorder %s235, 103
      %s241 = scalar_select %p240, %s235, 103
      %s242 = smul.addr %s241, 4
      %s243 = scalar_lea.vmem %s0, %s242
      %p244 = pneg %p38
      %p245 = pneg %p35
      %s246 = sadd.s32 %s17, 1
      %s247 = smul.u32 %s246, 4
      %s248 = smul.u32 8, %s247
      %p249 = scmp.lt.s32.totalorder %s248, 103
      %s250 = scalar_select %p249, %s248, 103
      %s251 = smul.addr %s250, 4
      %s252 = scalar_lea.vmem %s1, %s251
      %p253 = pneg %p68
      %p254 = pneg %p65
      %p255 = pneg %p89
      %p256 = pneg %p86
      %s257 = smul.u32 32, %s17
      %p258 = scmp.lt.s32.totalorder %s257, 95
      %s259 = scalar_select %p258, %s257, 95
      %s260 = smul.addr %s259, 8
      %s261 = scalar_lea.vmem %s3, %s260
      %p262 = pneg %p115
      %p263 = pneg %p112
      %p264 = pneg %p141
      %p265 = pneg %p138
      %s266 = smul.u32 32, %s17
      %p267 = scmp.lt.s32.totalorder %s266, 95
      %s268 = scalar_select %p267, %s266, 95
      %s269 = smul.addr %s268, 4
      %s270 = scalar_lea.vmem %s4, %s269
      %p271 = pneg %p167
      %p272 = pneg %p164
      %p273 = scmp.lt.s32.totalorder %s17, 2
      %s274 = scalar_select %p273, %s17, 2
      %s275 = smul.addr %s274, 2
      %s276 = scalar_lea.vmem %s5, %s275
      %s277 = smul.u32 32, %s17
      %s278 = ssub.s32 104, %s277
      %p279 = scmp.lt.s32.totalorder %s278, 32
      %s280 = scalar_select %p279, %s278, 32
      %s281 = smul.u32 4, %s280
      %p282 = scmp.lt.s32.totalorder %s277, 103
      %s283 = scalar_select %p282, %s277, 103
      %s284 = smul.addr %s283, 4
      %s285 = scalar_lea.vmem %s0, %s284
      %s286 = smul.u32 32, %s17
      %s287 = ssub.s32 104, %s286
      %p288 = scmp.lt.s32.totalorder %s287, 32
      %s289 = scalar_select %p288, %s287, 32
      %s290 = smul.u32 4, %s289
      %s291 = sadd.s32 %s17, 1
      %s292 = smul.u32 %s291, 4
      %s293 = smul.u32 8, %s292
      %p294 = scmp.lt.s32.totalorder %s293, 103
      %s295 = scalar_select %p294, %s293, 103
      %s296 = smul.addr %s295, 4
      %s297 = scalar_lea.vmem %s1, %s296
      %s298 = sadd.s32 %s17, 1
      %s299 = smul.u32 %s298, 4
      %s300 = smul.u32 8, %s299
      %s301 = smul.u32 32, %s17
      %p302 = scmp.lt.s32.totalorder %s301, 95
      %s303 = scalar_select %p302, %s301, 95
      %s304 = smul.addr %s303, 8
      %s305 = scalar_lea.vmem %s3, %s304
      %s306 = smul.u32 32, %s17
      %s307 = smul.u32 32, %s17
      %p308 = scmp.lt.s32.totalorder %s307, 95
      %s309 = scalar_select %p308, %s307, 95
      %s310 = smul.addr %s309, 4
      %s311 = scalar_lea.vmem %s4, %s310
      %s312 = smul.u32 32, %s17
      %p313 = scmp.lt.s32.totalorder %s17, 2
      %s314 = scalar_select %p313, %s17, 2
      %s315 = smul.addr %s314, 2
      %s316 = scalar_lea.vmem %s5, %s315
      %v318 = vld [vmem:[%s285] sm:$0xf]
      %v319 = vld [vmem:[%s285 + $0x4] sm:$0xf]
      %v320 = vld [vmem:[%s285 + $0x8] sm:$0xf]
      %v321 = vld [vmem:[%s285 + $0xc] sm:$0xf]
      %v322 = vld [vmem:[%s285 + $0x10] sm:$0xf]
      %v323 = vld [vmem:[%s285 + $0x14] sm:$0xf]
      %v324 = vld [vmem:[%s285 + $0x18] sm:$0xf]
      %v325 = vld [vmem:[%s285 + $0x1c] sm:$0xf]
      %v326 = vld [vmem:[%s285 + $0x20] sm:$0xf]
      %v327 = vld [vmem:[%s285 + $0x24] sm:$0xf]
      %v328 = vld [vmem:[%s285 + $0x28] sm:$0xf]
      %v329 = vld [vmem:[%s285 + $0x2c] sm:$0xf]
      %v330 = vld [vmem:[%s285 + $0x30] sm:$0xf]
      %v331 = vld [vmem:[%s285 + $0x34] sm:$0xf]
      %v332 = vld [vmem:[%s285 + $0x38] sm:$0xf]
      %v333 = vld [vmem:[%s285 + $0x3c] sm:$0xf]
      %v334 = vld [vmem:[%s285 + $0x40] sm:$0xf]
      %v335 = vld [vmem:[%s285 + $0x44] sm:$0xf]
      %v336 = vld [vmem:[%s285 + $0x48] sm:$0xf]
      %v337 = vld [vmem:[%s285 + $0x4c] sm:$0xf]
      %v338 = vld [vmem:[%s285 + $0x50] sm:$0xf]
      %v339 = vld [vmem:[%s285 + $0x54] sm:$0xf]
      %v340 = vld [vmem:[%s285 + $0x58] sm:$0xf]
      %v341 = vld [vmem:[%s285 + $0x5c] sm:$0xf]
      %v342 = vld [vmem:[%s285 + $0x60] sm:$0xf]
      %v343 = vld [vmem:[%s285 + $0x64] sm:$0xf]
      %v344 = vld [vmem:[%s285 + $0x68] sm:$0xf]
      %v345 = vld [vmem:[%s285 + $0x6c] sm:$0xf]
      %v346 = vld [vmem:[%s285 + $0x70] sm:$0xf]
      %v347 = vld [vmem:[%s285 + $0x74] sm:$0xf]
      %v348 = vld [vmem:[%s285 + $0x78] sm:$0xf]
      %v349 = vld [vmem:[%s285 + $0x7c] sm:$0xf]
      %v350 = vld [vmem:[%s297] sm:$0xf]
      %v351 = vld [vmem:[%s297 + $0x4] sm:$0xf]
      %v352 = vld [vmem:[%s297 + $0x8] sm:$0xf]
      %v353 = vld [vmem:[%s297 + $0xc] sm:$0xf]
      %v354 = vld [vmem:[%s297 + $0x10] sm:$0xf]
      %v355 = vld [vmem:[%s297 + $0x14] sm:$0xf]
      %v388 = vunpack.c.l.b16 %v318
      %v389 = vunpack.c.l.b16 %v319
      %v390 = vunpack.c.l.b16 %v320
      %v391 = vunpack.c.l.b16 %v321
      %v392 = vunpack.c.l.b16 %v322
      %v393 = vunpack.c.l.b16 %v323
      %v394 = vunpack.c.l.b16 %v324
      %v395 = vunpack.c.l.b16 %v325
      %v396 = vunpack.c.l.b16 %v326
      %v397 = vunpack.c.l.b16 %v327
      %v398 = vunpack.c.l.b16 %v328
      %v399 = vunpack.c.l.b16 %v329
      %v400 = vunpack.c.l.b16 %v330
      %v401 = vunpack.c.l.b16 %v331
      %v402 = vunpack.c.l.b16 %v332
      %v403 = vunpack.c.l.b16 %v333
      %v404 = vunpack.c.l.b16 %v334
      %v405 = vunpack.c.l.b16 %v335
      %v406 = vunpack.c.l.b16 %v336
      %v407 = vunpack.c.l.b16 %v337
      %v408 = vunpack.c.l.b16 %v338
      %v409 = vunpack.c.l.b16 %v339
      %v410 = vunpack.c.l.b16 %v340
      %v411 = vunpack.c.l.b16 %v341
      %v412 = vunpack.c.l.b16 %v342
      %v413 = vunpack.c.l.b16 %v343
      %v414 = vunpack.c.l.b16 %v344
      %v415 = vunpack.c.l.b16 %v345
      %v416 = vunpack.c.l.b16 %v346
      %v417 = vunpack.c.l.b16 %v347
      %v418 = vunpack.c.l.b16 %v348
      %v419 = vunpack.c.l.b16 %v349
      %v420 = vpack.c.b16 %v389, %v388
      %v421 = vpack.c.b16 %v391, %v390
      %v422 = vpack.c.b16 %v393, %v392
      %v423 = vpack.c.b16 %v395, %v394
      %v424 = vpack.c.b16 %v397, %v396
      %v425 = vpack.c.b16 %v399, %v398
      %v426 = vpack.c.b16 %v401, %v400
      %v427 = vpack.c.b16 %v403, %v402
      %v428 = vpack.c.b16 %v405, %v404
      %v429 = vpack.c.b16 %v407, %v406
      %v430 = vpack.c.b16 %v409, %v408
      %v431 = vpack.c.b16 %v411, %v410
      %v432 = vpack.c.b16 %v413, %v412
      %v433 = vpack.c.b16 %v415, %v414
      %v434 = vpack.c.b16 %v417, %v416
      %v435 = vpack.c.b16 %v419, %v418
      %v458 = vunpack.c.l.b16 %v350
      %v459 = vunpack.c.l.b16 %v351
      %v460 = vunpack.c.l.b16 %v352
      %v461 = vunpack.c.l.b16 %v353
      %v462 = vunpack.c.l.b16 %v354
      %v463 = vunpack.c.l.b16 %v355
      %v464 = vpack.c.b16 %v459, %v458
      %v465 = vpack.c.b16 %v461, %v460
      %v466 = vpack.c.b16 %v463, %v462
      %v470 = vunpack.c.l.bf16 %v420
      %v471 = vunpack.c.h.bf16 %v420
      %v472 = vunpack.c.l.bf16 %v421
      %v473 = vunpack.c.h.bf16 %v421
      %v474 = vunpack.c.l.bf16 %v422
      %v475 = vunpack.c.h.bf16 %v422
      %v476 = vunpack.c.l.bf16 %v423
      %v477 = vunpack.c.h.bf16 %v423
      %v478 = vunpack.c.l.bf16 %v424
      %v479 = vunpack.c.h.bf16 %v424
      %v480 = vunpack.c.l.bf16 %v425
      %v481 = vunpack.c.h.bf16 %v425
      %v482 = vunpack.c.l.bf16 %v426
      %v483 = vunpack.c.h.bf16 %v426
      %v484 = vunpack.c.l.bf16 %v427
      %v485 = vunpack.c.h.bf16 %v427
      %v486 = vunpack.c.l.bf16 %v428
      %v487 = vunpack.c.h.bf16 %v428
      %v488 = vunpack.c.l.bf16 %v429
      %v489 = vunpack.c.h.bf16 %v429
      %v490 = vunpack.c.l.bf16 %v430
      %v491 = vunpack.c.h.bf16 %v430
      %v492 = vunpack.c.l.bf16 %v431
      %v493 = vunpack.c.h.bf16 %v431
      %v494 = vunpack.c.l.bf16 %v432
      %v495 = vunpack.c.h.bf16 %v432
      %v496 = vunpack.c.l.bf16 %v433
      %v497 = vunpack.c.h.bf16 %v433
      %v498 = vunpack.c.l.bf16 %v434
      %v499 = vunpack.c.h.bf16 %v434
      %v500 = vunpack.c.l.bf16 %v435
      %v501 = vunpack.c.h.bf16 %v435
      %v502 = vunpack.c.l.bf16 %v464
      %v503 = vunpack.c.h.bf16 %v464
      %v504 = vunpack.c.l.bf16 %v465
      %v505 = vunpack.c.h.bf16 %v465
      %v506 = vunpack.c.l.bf16 %v466
      %v507 = vmax.f32 %v470, 0.0
      %v508 = vmax.f32 %v471, 0.0
      %v509 = vmax.f32 %v472, 0.0
      %v510 = vmax.f32 %v473, 0.0
      %v511 = vmax.f32 %v474, 0.0
      %v512 = vmax.f32 %v475, 0.0
      %v513 = vmax.f32 %v476, 0.0
      %v514 = vmax.f32 %v477, 0.0
      %v515 = vmax.f32 %v478, 0.0
      %v516 = vmax.f32 %v479, 0.0
      %v517 = vmax.f32 %v480, 0.0
      %v518 = vmax.f32 %v481, 0.0
      %v519 = vmax.f32 %v482, 0.0
      %v520 = vmax.f32 %v483, 0.0
      %v521 = vmax.f32 %v484, 0.0
      %v522 = vmax.f32 %v485, 0.0
      %v523 = vmax.f32 %v486, 0.0
      %v524 = vmax.f32 %v487, 0.0
      %v525 = vmax.f32 %v488, 0.0
      %v526 = vmax.f32 %v489, 0.0
      %v527 = vmax.f32 %v490, 0.0
      %v528 = vmax.f32 %v491, 0.0
      %v529 = vmax.f32 %v492, 0.0
      %v530 = vmax.f32 %v493, 0.0
      %v531 = vmax.f32 %v494, 0.0
      %v532 = vmax.f32 %v495, 0.0
      %v533 = vmax.f32 %v496, 0.0
      %v534 = vmax.f32 %v497, 0.0
      %v535 = vmax.f32 %v498, 0.0
      %v536 = vmax.f32 %v499, 0.0
      %v537 = vmax.f32 %v500, 0.0
      %v538 = vmax.f32 %v501, 0.0
      %v539 = vmax.f32 %v502, 0.0
      %v540 = vmax.f32 %v503, 0.0
      %v541 = vmax.f32 %v504, 0.0
      %v542 = vmax.f32 %v505, 0.0
      %v543 = vmax.f32 %v506, 0.0
      %v544 = vpack.c.bf16 %v507, %v507
      %v545 = vpack.c.bf16 %v508, %v508
      %v546 = vpack.c.bf16 %v509, %v509
      %v547 = vpack.c.bf16 %v510, %v510
      %v548 = vpack.c.bf16 %v511, %v511
      %v549 = vpack.c.bf16 %v512, %v512
      %v550 = vpack.c.bf16 %v513, %v513
      %v551 = vpack.c.bf16 %v514, %v514
      %v552 = vpack.c.bf16 %v515, %v515
      %v553 = vpack.c.bf16 %v516, %v516
      %v554 = vpack.c.bf16 %v517, %v517
      %v555 = vpack.c.bf16 %v518, %v518
      %v556 = vpack.c.bf16 %v519, %v519
      %v557 = vpack.c.bf16 %v520, %v520
      %v558 = vpack.c.bf16 %v521, %v521
      %v559 = vpack.c.bf16 %v522, %v522
      %v560 = vpack.c.bf16 %v523, %v523
      %v561 = vpack.c.bf16 %v524, %v524
      %v562 = vpack.c.bf16 %v525, %v525
      %v563 = vpack.c.bf16 %v526, %v526
      %v564 = vpack.c.bf16 %v527, %v527
      %v565 = vpack.c.bf16 %v528, %v528
      %v566 = vpack.c.bf16 %v529, %v529
      %v567 = vpack.c.bf16 %v530, %v530
      %v568 = vpack.c.bf16 %v531, %v531
      %v569 = vpack.c.bf16 %v532, %v532
      %v570 = vpack.c.bf16 %v533, %v533
      %v571 = vpack.c.bf16 %v534, %v534
      %v572 = vpack.c.bf16 %v535, %v535
      %v573 = vpack.c.bf16 %v536, %v536
      %v574 = vpack.c.bf16 %v537, %v537
      %v575 = vpack.c.bf16 %v538, %v538
      %v576 = vpack.c.bf16 %v539, %v539
      %v577 = vpack.c.bf16 %v540, %v540
      %v578 = vpack.c.bf16 %v541, %v541
      %v579 = vpack.c.bf16 %v542, %v542
      %v580 = vpack.c.bf16 %v543, %v543
      %v581 = vld [vmem:[%s2] sm:$0x3]
      %s582 = scalar_lea.vmem %s2, 2
      %v583 = vld [vmem:[%s582] sm:$0x3]
      %v617 = vunpack.c.l.b16 %v544
      %v618 = vunpack.c.l.b16 %v545
      %v619 = vunpack.c.l.b16 %v546
      %v620 = vunpack.c.l.b16 %v547
      %v621 = vunpack.c.l.b16 %v548
      %v622 = vunpack.c.l.b16 %v549
      %v623 = vunpack.c.l.b16 %v550
      %v624 = vunpack.c.l.b16 %v551
      %v625 = vunpack.c.l.b16 %v552
      %v626 = vunpack.c.l.b16 %v553
      %v627 = vunpack.c.l.b16 %v554
      %v628 = vunpack.c.l.b16 %v555
      %v629 = vunpack.c.l.b16 %v556
      %v630 = vunpack.c.l.b16 %v557
      %v631 = vunpack.c.l.b16 %v558
      %v632 = vunpack.c.l.b16 %v559
      %v633 = vunpack.c.l.b16 %v560
      %v634 = vunpack.c.l.b16 %v561
      %v635 = vunpack.c.l.b16 %v562
      %v636 = vunpack.c.l.b16 %v563
      %v637 = vunpack.c.l.b16 %v564
      %v638 = vunpack.c.l.b16 %v565
      %v639 = vunpack.c.l.b16 %v566
      %v640 = vunpack.c.l.b16 %v567
      %v641 = vunpack.c.l.b16 %v568
      %v642 = vunpack.c.l.b16 %v569
      %v643 = vunpack.c.l.b16 %v570
      %v644 = vunpack.c.l.b16 %v571
      %v645 = vunpack.c.l.b16 %v572
      %v646 = vunpack.c.l.b16 %v573
      %v647 = vunpack.c.l.b16 %v574
      %v648 = vunpack.c.l.b16 %v575
      %v649 = vunpack.c.l.b16 %v576
      %v650 = vpack.c.b16 %v618, %v617
      %v651 = vpack.c.b16 %v620, %v619
      %v652 = vpack.c.b16 %v622, %v621
      %v653 = vpack.c.b16 %v624, %v623
      %v654 = vpack.c.b16 %v626, %v625
      %v655 = vpack.c.b16 %v628, %v627
      %v656 = vpack.c.b16 %v630, %v629
      %v657 = vpack.c.b16 %v632, %v631
      %v658 = vpack.c.b16 %v634, %v633
      %v659 = vpack.c.b16 %v636, %v635
      %v660 = vpack.c.b16 %v638, %v637
      %v661 = vpack.c.b16 %v640, %v639
      %v662 = vpack.c.b16 %v642, %v641
      %v663 = vpack.c.b16 %v644, %v643
      %v664 = vpack.c.b16 %v646, %v645
      %v665 = vpack.c.b16 %v648, %v647
      %v666 = vpack.c.b16 %v649, %v649
      %vm667 = vsmask.f32 7424
      %v669 = vshrl.u32 %v650, 16
      %v671 = vshll.u32 %v650, 16
      %v673 = vrot.slane %v671, 1
      %v674 = vor.u32 %v669, %v673
      %v676 = vshll.u32 %v651, 16
      %v678 = vrot.slane %v676, 1
      %v679 = vsel %vm667, %v674, %v678
      %v680 = vshrl.u32 %v651, 16
      %v682 = vor.u32 %v680, %v678
      %v684 = vshll.u32 %v652, 16
      %v686 = vrot.slane %v684, 1
      %v687 = vsel %vm667, %v682, %v686
      %v688 = vshrl.u32 %v652, 16
      %v690 = vor.u32 %v688, %v686
      %v692 = vshll.u32 %v653, 16
      %v694 = vrot.slane %v692, 1
      %v695 = vsel %vm667, %v690, %v694
      %v696 = vshrl.u32 %v653, 16
      %v698 = vor.u32 %v696, %v694
      %v700 = vshll.u32 %v654, 16
      %v702 = vrot.slane %v700, 1
      %v703 = vsel %vm667, %v698, %v702
      %v704 = vshrl.u32 %v654, 16
      %v706 = vor.u32 %v704, %v702
      %v708 = vshll.u32 %v655, 16
      %v710 = vrot.slane %v708, 1
      %v711 = vsel %vm667, %v706, %v710
      %v712 = vshrl.u32 %v655, 16
      %v714 = vor.u32 %v712, %v710
      %v716 = vshll.u32 %v656, 16
      %v718 = vrot.slane %v716, 1
      %v719 = vsel %vm667, %v714, %v718
      %v720 = vshrl.u32 %v656, 16
      %v722 = vor.u32 %v720, %v718
      %v724 = vshll.u32 %v657, 16
      %v726 = vrot.slane %v724, 1
      %v727 = vsel %vm667, %v722, %v726
      %v728 = vshrl.u32 %v657, 16
      %v730 = vor.u32 %v728, %v726
      %v732 = vshll.u32 %v658, 16
      %v734 = vrot.slane %v732, 1
      %v735 = vsel %vm667, %v730, %v734
      %v736 = vshrl.u32 %v658, 16
      %v738 = vor.u32 %v736, %v734
      %v740 = vshll.u32 %v659, 16
      %v742 = vrot.slane %v740, 1
      %v743 = vsel %vm667, %v738, %v742
      %v744 = vshrl.u32 %v659, 16
      %v746 = vor.u32 %v744, %v742
      %v748 = vshll.u32 %v660, 16
      %v750 = vrot.slane %v748, 1
      %v751 = vsel %vm667, %v746, %v750
      %v752 = vshrl.u32 %v660, 16
      %v754 = vor.u32 %v752, %v750
      %v756 = vshll.u32 %v661, 16
      %v758 = vrot.slane %v756, 1
      %v759 = vsel %vm667, %v754, %v758
      %v760 = vshrl.u32 %v661, 16
      %v762 = vor.u32 %v760, %v758
      %v764 = vshll.u32 %v662, 16
      %v766 = vrot.slane %v764, 1
      %v767 = vsel %vm667, %v762, %v766
      %v768 = vshrl.u32 %v662, 16
      %v770 = vor.u32 %v768, %v766
      %v772 = vshll.u32 %v663, 16
      %v774 = vrot.slane %v772, 1
      %v775 = vsel %vm667, %v770, %v774
      %v776 = vshrl.u32 %v663, 16
      %v778 = vor.u32 %v776, %v774
      %v780 = vshll.u32 %v664, 16
      %v782 = vrot.slane %v780, 1
      %v783 = vsel %vm667, %v778, %v782
      %v784 = vshrl.u32 %v664, 16
      %v786 = vor.u32 %v784, %v782
      %v788 = vshll.u32 %v665, 16
      %v790 = vrot.slane %v788, 1
      %v791 = vsel %vm667, %v786, %v790
      %v792 = vshrl.u32 %v665, 16
      %v794 = vor.u32 %v792, %v790
      %v796 = vshll.u32 %v666, 16
      %v798 = vrot.slane %v796, 1
      %v799 = vsel %vm667, %v794, %v798
      %vm800 = vcmask 31744
      %v802 = vsel %vm800, %v679, 0
      %v805 = vsel %vm800, %v687, 0
      %v808 = vsel %vm800, %v695, 0
      %v811 = vsel %vm800, %v703, 0
      %v814 = vsel %vm800, %v711, 0
      %v817 = vsel %vm800, %v719, 0
      %v820 = vsel %vm800, %v727, 0
      %v823 = vsel %vm800, %v735, 0
      %v826 = vsel %vm800, %v743, 0
      %v829 = vsel %vm800, %v751, 0
      %v832 = vsel %vm800, %v759, 0
      %v835 = vsel %vm800, %v767, 0
      %v838 = vsel %vm800, %v775, 0
      %v841 = vsel %vm800, %v783, 0
      %v844 = vsel %vm800, %v791, 0
      %v847 = vsel %vm800, %v799, 0
      %vm849 = vcmask 1041408
      %v851 = vsel %vm849, %v583, 0
      %853 = vmatpush.bf16.msra.mxu0 0
      %854 = vmatpush.bf16.msra.mxu0 0
      %855 = vmatpush.bf16.msra.mxu0 0
      %856 = vmatpush.bf16.msra.mxu0 0
      %857 = vmatpush.bf16.msra.mxu0 0
      %858 = vmatpush.bf16.msra.mxu0 0
      %859 = vmatpush.bf16.msra.mxu0 0
      %860 = vmatpush.bf16.msra.mxu0 %v851
      %861 = vmatmul.bf16.gmra.mxu0 %v802
      %v862 = vpop.f32.mrf.mxu0
      %v863 = vadd.f32 0.0, %v862
      %v864 = vpop.f32.mrf.mxu0
      %v865 = vadd.f32 0.0, %v864
      %866 = vmatmul.bf16.gmra.mxu0 %v805
      %v867 = vpop.f32.mrf.mxu0
      %v868 = vadd.f32 0.0, %v867
      %v869 = vpop.f32.mrf.mxu0
      %v870 = vadd.f32 0.0, %v869
      %871 = vmatmul.bf16.gmra.mxu0 %v808
      %v872 = vpop.f32.mrf.mxu0
      %v873 = vadd.f32 0.0, %v872
      %v874 = vpop.f32.mrf.mxu0
      %v875 = vadd.f32 0.0, %v874
      %876 = vmatmul.bf16.gmra.mxu0 %v811
      %v877 = vpop.f32.mrf.mxu0
      %v878 = vadd.f32 0.0, %v877
      %v879 = vpop.f32.mrf.mxu0
      %v880 = vadd.f32 0.0, %v879
      %881 = vmatmul.bf16.gmra.mxu0 %v814
      %v882 = vpop.f32.mrf.mxu0
      %v883 = vadd.f32 0.0, %v882
      %v884 = vpop.f32.mrf.mxu0
      %v885 = vadd.f32 0.0, %v884
      %886 = vmatmul.bf16.gmra.mxu0 %v817
      %v887 = vpop.f32.mrf.mxu0
      %v888 = vadd.f32 0.0, %v887
      %v889 = vpop.f32.mrf.mxu0
      %v890 = vadd.f32 0.0, %v889
      %891 = vmatmul.bf16.gmra.mxu0 %v820
      %v892 = vpop.f32.mrf.mxu0
      %v893 = vadd.f32 0.0, %v892
      %v894 = vpop.f32.mrf.mxu0
      %v895 = vadd.f32 0.0, %v894
      %896 = vmatmul.bf16.gmra.mxu0 %v823
      %v897 = vpop.f32.mrf.mxu0
      %v898 = vadd.f32 0.0, %v897
      %v899 = vpop.f32.mrf.mxu0
      %v900 = vadd.f32 0.0, %v899
      %901 = vmatmul.bf16.gmra.mxu0 %v826
      %v902 = vpop.f32.mrf.mxu0
      %v903 = vadd.f32 0.0, %v902
      %v904 = vpop.f32.mrf.mxu0
      %v905 = vadd.f32 0.0, %v904
      %906 = vmatmul.bf16.gmra.mxu0 %v829
      %v907 = vpop.f32.mrf.mxu0
      %v908 = vadd.f32 0.0, %v907
      %v909 = vpop.f32.mrf.mxu0
      %v910 = vadd.f32 0.0, %v909
      %911 = vmatmul.bf16.gmra.mxu0 %v832
      %v912 = vpop.f32.mrf.mxu0
      %v913 = vadd.f32 0.0, %v912
      %v914 = vpop.f32.mrf.mxu0
      %v915 = vadd.f32 0.0, %v914
      %916 = vmatmul.bf16.gmra.mxu0 %v835
      %v917 = vpop.f32.mrf.mxu0
      %v918 = vadd.f32 0.0, %v917
      %v919 = vpop.f32.mrf.mxu0
      %v920 = vadd.f32 0.0, %v919
      %921 = vmatmul.bf16.gmra.mxu0 %v838
      %v922 = vpop.f32.mrf.mxu0
      %v923 = vadd.f32 0.0, %v922
      %v924 = vpop.f32.mrf.mxu0
      %v925 = vadd.f32 0.0, %v924
      %926 = vmatmul.bf16.gmra.mxu0 %v841
      %v927 = vpop.f32.mrf.mxu0
      %v928 = vadd.f32 0.0, %v927
      %v929 = vpop.f32.mrf.mxu0
      %v930 = vadd.f32 0.0, %v929
      %931 = vmatmul.bf16.gmra.mxu0 %v844
      %v932 = vpop.f32.mrf.mxu0
      %v933 = vadd.f32 0.0, %v932
      %v934 = vpop.f32.mrf.mxu0
      %v935 = vadd.f32 0.0, %v934
      %936 = vmatmul.bf16.gmra.mxu0 %v847
      %v937 = vpop.f32.mrf.mxu0
      %v938 = vadd.f32 0.0, %v937
      %v939 = vpop.f32.mrf.mxu0
      %v940 = vadd.f32 0.0, %v939
      %941 = vdwg.mxu0
      %v942 = vsel %vm800, %v650, 0
      %v944 = vsel %vm800, %v651, 0
      %v946 = vsel %vm800, %v652, 0
      %v948 = vsel %vm800, %v653, 0
      %v950 = vsel %vm800, %v654, 0
      %v952 = vsel %vm800, %v655, 0
      %v954 = vsel %vm800, %v656, 0
      %v956 = vsel %vm800, %v657, 0
      %v958 = vsel %vm800, %v658, 0
      %v960 = vsel %vm800, %v659, 0
      %v962 = vsel %vm800, %v660, 0
      %v964 = vsel %vm800, %v661, 0
      %v966 = vsel %vm800, %v662, 0
      %v968 = vsel %vm800, %v663, 0
      %v970 = vsel %vm800, %v664, 0
      %v972 = vsel %vm800, %v665, 0
      %v975 = vsel %vm849, %v581, 0
      %977 = vmatpush.bf16.msra.mxu0 0
      %978 = vmatpush.bf16.msra.mxu0 0
      %979 = vmatpush.bf16.msra.mxu0 0
      %980 = vmatpush.bf16.msra.mxu0 0
      %981 = vmatpush.bf16.msra.mxu0 0
      %982 = vmatpush.bf16.msra.mxu0 0
      %983 = vmatpush.bf16.msra.mxu0 0
      %984 = vmatpush.bf16.msra.mxu0 %v975
      %985 = vmatmul.bf16.gmra.mxu0 %v942
      %v986 = vpop.f32.mrf.mxu0
      %v987 = vadd.f32 %v863, %v986
      %v988 = vpop.f32.mrf.mxu0
      %v989 = vadd.f32 %v865, %v988
      %990 = vmatmul.bf16.gmra.mxu0 %v944
      %v991 = vpop.f32.mrf.mxu0
      %v992 = vadd.f32 %v868, %v991
      %v993 = vpop.f32.mrf.mxu0
      %v994 = vadd.f32 %v870, %v993
      %995 = vmatmul.bf16.gmra.mxu0 %v946
      %v996 = vpop.f32.mrf.mxu0
      %v997 = vadd.f32 %v873, %v996
      %v998 = vpop.f32.mrf.mxu0
      %v999 = vadd.f32 %v875, %v998
      %1000 = vmatmul.bf16.gmra.mxu0 %v948
      %v1001 = vpop.f32.mrf.mxu0
      %v1002 = vadd.f32 %v878, %v1001
      %v1003 = vpop.f32.mrf.mxu0
      %v1004 = vadd.f32 %v880, %v1003
      %1005 = vmatmul.bf16.gmra.mxu0 %v950
      %v1006 = vpop.f32.mrf.mxu0
      %v1007 = vadd.f32 %v883, %v1006
      %v1008 = vpop.f32.mrf.mxu0
      %v1009 = vadd.f32 %v885, %v1008
      %1010 = vmatmul.bf16.gmra.mxu0 %v952
      %v1011 = vpop.f32.mrf.mxu0
      %v1012 = vadd.f32 %v888, %v1011
      %v1013 = vpop.f32.mrf.mxu0
      %v1014 = vadd.f32 %v890, %v1013
      %1015 = vmatmul.bf16.gmra.mxu0 %v954
      %v1016 = vpop.f32.mrf.mxu0
      %v1017 = vadd.f32 %v893, %v1016
      %v1018 = vpop.f32.mrf.mxu0
      %v1019 = vadd.f32 %v895, %v1018
      %1020 = vmatmul.bf16.gmra.mxu0 %v956
      %v1021 = vpop.f32.mrf.mxu0
      %v1022 = vadd.f32 %v898, %v1021
      %v1023 = vpop.f32.mrf.mxu0
      %v1024 = vadd.f32 %v900, %v1023
      %1025 = vmatmul.bf16.gmra.mxu0 %v958
      %v1026 = vpop.f32.mrf.mxu0
      %v1027 = vadd.f32 %v903, %v1026
      %v1028 = vpop.f32.mrf.mxu0
      %v1029 = vadd.f32 %v905, %v1028
      %1030 = vmatmul.bf16.gmra.mxu0 %v960
      %v1031 = vpop.f32.mrf.mxu0
      %v1032 = vadd.f32 %v908, %v1031
      %v1033 = vpop.f32.mrf.mxu0
      %v1034 = vadd.f32 %v910, %v1033
      %1035 = vmatmul.bf16.gmra.mxu0 %v962
      %v1036 = vpop.f32.mrf.mxu0
      %v1037 = vadd.f32 %v913, %v1036
      %v1038 = vpop.f32.mrf.mxu0
      %v1039 = vadd.f32 %v915, %v1038
      %1040 = vmatmul.bf16.gmra.mxu0 %v964
      %v1041 = vpop.f32.mrf.mxu0
      %v1042 = vadd.f32 %v918, %v1041
      %v1043 = vpop.f32.mrf.mxu0
      %v1044 = vadd.f32 %v920, %v1043
      %1045 = vmatmul.bf16.gmra.mxu0 %v966
      %v1046 = vpop.f32.mrf.mxu0
      %v1047 = vadd.f32 %v923, %v1046
      %v1048 = vpop.f32.mrf.mxu0
      %v1049 = vadd.f32 %v925, %v1048
      %1050 = vmatmul.bf16.gmra.mxu0 %v968
      %v1051 = vpop.f32.mrf.mxu0
      %v1052 = vadd.f32 %v928, %v1051
      %v1053 = vpop.f32.mrf.mxu0
      %v1054 = vadd.f32 %v930, %v1053
      %1055 = vmatmul.bf16.gmra.mxu0 %v970
      %v1056 = vpop.f32.mrf.mxu0
      %v1057 = vadd.f32 %v933, %v1056
      %v1058 = vpop.f32.mrf.mxu0
      %v1059 = vadd.f32 %v935, %v1058
      %1060 = vmatmul.bf16.gmra.mxu0 %v972
      %v1061 = vpop.f32.mrf.mxu0
      %v1062 = vadd.f32 %v938, %v1061
      %v1063 = vpop.f32.mrf.mxu0
      %v1064 = vadd.f32 %v940, %v1063
      %1065 = vdwg.mxu0
      %s1066 = scalar_lea.vmem %s2, 4
      %v1067 = vld [vmem:[%s1066] sm:$0x3]
      %vm1068 = vcmask 1046528
      %v1069 = vrot.slane %v650, 1
      %v1070 = vrot.slane %v651, 1
      %v1071 = vsel %vm1068, %v1069, %v1070
      %v1072 = vrot.slane %v652, 1
      %v1073 = vsel %vm1068, %v1070, %v1072
      %v1074 = vrot.slane %v653, 1
      %v1075 = vsel %vm1068, %v1072, %v1074
      %v1076 = vrot.slane %v654, 1
      %v1077 = vsel %vm1068, %v1074, %v1076
      %v1078 = vrot.slane %v655, 1
      %v1079 = vsel %vm1068, %v1076, %v1078
      %v1080 = vrot.slane %v656, 1
      %v1081 = vsel %vm1068, %v1078, %v1080
      %v1082 = vrot.slane %v657, 1
      %v1083 = vsel %vm1068, %v1080, %v1082
      %v1084 = vrot.slane %v658, 1
      %v1085 = vsel %vm1068, %v1082, %v1084
      %v1086 = vrot.slane %v659, 1
      %v1087 = vsel %vm1068, %v1084, %v1086
      %v1088 = vrot.slane %v660, 1
      %v1089 = vsel %vm1068, %v1086, %v1088
      %v1090 = vrot.slane %v661, 1
      %v1091 = vsel %vm1068, %v1088, %v1090
      %v1092 = vrot.slane %v662, 1
      %v1093 = vsel %vm1068, %v1090, %v1092
      %v1094 = vrot.slane %v663, 1
      %v1095 = vsel %vm1068, %v1092, %v1094
      %v1096 = vrot.slane %v664, 1
      %v1097 = vsel %vm1068, %v1094, %v1096
      %v1098 = vrot.slane %v665, 1
      %v1099 = vsel %vm1068, %v1096, %v1098
      %v1100 = vrot.slane %v666, 1
      %v1101 = vsel %vm1068, %v1098, %v1100
      %v1103 = vsel %vm800, %v1071, 0
      %v1106 = vsel %vm800, %v1073, 0
      %v1109 = vsel %vm800, %v1075, 0
      %v1112 = vsel %vm800, %v1077, 0
      %v1115 = vsel %vm800, %v1079, 0
      %v1118 = vsel %vm800, %v1081, 0
      %v1121 = vsel %vm800, %v1083, 0
      %v1124 = vsel %vm800, %v1085, 0
      %v1127 = vsel %vm800, %v1087, 0
      %v1130 = vsel %vm800, %v1089, 0
      %v1133 = vsel %vm800, %v1091, 0
      %v1136 = vsel %vm800, %v1093, 0
      %v1139 = vsel %vm800, %v1095, 0
      %v1142 = vsel %vm800, %v1097, 0
      %v1145 = vsel %vm800, %v1099, 0
      %v1148 = vsel %vm800, %v1101, 0
      %v1151 = vsel %vm849, %v1067, 0
      %1153 = vmatpush.bf16.msra.mxu0 0
      %1154 = vmatpush.bf16.msra.mxu0 0
      %1155 = vmatpush.bf16.msra.mxu0 0
      %1156 = vmatpush.bf16.msra.mxu0 0
      %1157 = vmatpush.bf16.msra.mxu0 0
      %1158 = vmatpush.bf16.msra.mxu0 0
      %1159 = vmatpush.bf16.msra.mxu0 0
      %1160 = vmatpush.bf16.msra.mxu0 %v1151
      %1161 = vmatmul.bf16.gmra.mxu0 %v1103
      %v1162 = vpop.f32.mrf.mxu0
      %v1163 = vadd.f32 0.0, %v1162
      %v1164 = vpop.f32.mrf.mxu0
      %v1165 = vadd.f32 0.0, %v1164
      %1166 = vmatmul.bf16.gmra.mxu0 %v1106
      %v1167 = vpop.f32.mrf.mxu0
      %v1168 = vadd.f32 0.0, %v1167
      %v1169 = vpop.f32.mrf.mxu0
      %v1170 = vadd.f32 0.0, %v1169
      %1171 = vmatmul.bf16.gmra.mxu0 %v1109
      %v1172 = vpop.f32.mrf.mxu0
      %v1173 = vadd.f32 0.0, %v1172
      %v1174 = vpop.f32.mrf.mxu0
      %v1175 = vadd.f32 0.0, %v1174
      %1176 = vmatmul.bf16.gmra.mxu0 %v1112
      %v1177 = vpop.f32.mrf.mxu0
      %v1178 = vadd.f32 0.0, %v1177
      %v1179 = vpop.f32.mrf.mxu0
      %v1180 = vadd.f32 0.0, %v1179
      %1181 = vmatmul.bf16.gmra.mxu0 %v1115
      %v1182 = vpop.f32.mrf.mxu0
      %v1183 = vadd.f32 0.0, %v1182
      %v1184 = vpop.f32.mrf.mxu0
      %v1185 = vadd.f32 0.0, %v1184
      %1186 = vmatmul.bf16.gmra.mxu0 %v1118
      %v1187 = vpop.f32.mrf.mxu0
      %v1188 = vadd.f32 0.0, %v1187
      %v1189 = vpop.f32.mrf.mxu0
      %v1190 = vadd.f32 0.0, %v1189
      %1191 = vmatmul.bf16.gmra.mxu0 %v1121
      %v1192 = vpop.f32.mrf.mxu0
      %v1193 = vadd.f32 0.0, %v1192
      %v1194 = vpop.f32.mrf.mxu0
      %v1195 = vadd.f32 0.0, %v1194
      %1196 = vmatmul.bf16.gmra.mxu0 %v1124
      %v1197 = vpop.f32.mrf.mxu0
      %v1198 = vadd.f32 0.0, %v1197
      %v1199 = vpop.f32.mrf.mxu0
      %v1200 = vadd.f32 0.0, %v1199
      %1201 = vmatmul.bf16.gmra.mxu0 %v1127
      %v1202 = vpop.f32.mrf.mxu0
      %v1203 = vadd.f32 0.0, %v1202
      %v1204 = vpop.f32.mrf.mxu0
      %v1205 = vadd.f32 0.0, %v1204
      %1206 = vmatmul.bf16.gmra.mxu0 %v1130
      %v1207 = vpop.f32.mrf.mxu0
      %v1208 = vadd.f32 0.0, %v1207
      %v1209 = vpop.f32.mrf.mxu0
      %v1210 = vadd.f32 0.0, %v1209
      %1211 = vmatmul.bf16.gmra.mxu0 %v1133
      %v1212 = vpop.f32.mrf.mxu0
      %v1213 = vadd.f32 0.0, %v1212
      %v1214 = vpop.f32.mrf.mxu0
      %v1215 = vadd.f32 0.0, %v1214
      %1216 = vmatmul.bf16.gmra.mxu0 %v1136
      %v1217 = vpop.f32.mrf.mxu0
      %v1218 = vadd.f32 0.0, %v1217
      %v1219 = vpop.f32.mrf.mxu0
      %v1220 = vadd.f32 0.0, %v1219
      %1221 = vmatmul.bf16.gmra.mxu0 %v1139
      %v1222 = vpop.f32.mrf.mxu0
      %v1223 = vadd.f32 0.0, %v1222
      %v1224 = vpop.f32.mrf.mxu0
      %v1225 = vadd.f32 0.0, %v1224
      %1226 = vmatmul.bf16.gmra.mxu0 %v1142
      %v1227 = vpop.f32.mrf.mxu0
      %v1228 = vadd.f32 0.0, %v1227
      %v1229 = vpop.f32.mrf.mxu0
      %v1230 = vadd.f32 0.0, %v1229
      %1231 = vmatmul.bf16.gmra.mxu0 %v1145
      %v1232 = vpop.f32.mrf.mxu0
      %v1233 = vadd.f32 0.0, %v1232
      %v1234 = vpop.f32.mrf.mxu0
      %v1235 = vadd.f32 0.0, %v1234
      %1236 = vmatmul.bf16.gmra.mxu0 %v1148
      %v1237 = vpop.f32.mrf.mxu0
      %v1238 = vadd.f32 0.0, %v1237
      %v1239 = vpop.f32.mrf.mxu0
      %v1240 = vadd.f32 0.0, %v1239
      %1241 = vdwg.mxu0
      %v1242 = vadd.f32 %v987, %v1163
      %v1243 = vadd.f32 %v989, %v1165
      %v1244 = vadd.f32 %v992, %v1168
      %v1245 = vadd.f32 %v994, %v1170
      %v1246 = vadd.f32 %v997, %v1173
      %v1247 = vadd.f32 %v999, %v1175
      %v1248 = vadd.f32 %v1002, %v1178
      %v1249 = vadd.f32 %v1004, %v1180
      %v1250 = vadd.f32 %v1007, %v1183
      %v1251 = vadd.f32 %v1009, %v1185
      %v1252 = vadd.f32 %v1012, %v1188
      %v1253 = vadd.f32 %v1014, %v1190
      %v1254 = vadd.f32 %v1017, %v1193
      %v1255 = vadd.f32 %v1019, %v1195
      %v1256 = vadd.f32 %v1022, %v1198
      %v1257 = vadd.f32 %v1024, %v1200
      %v1258 = vadd.f32 %v1027, %v1203
      %v1259 = vadd.f32 %v1029, %v1205
      %v1260 = vadd.f32 %v1032, %v1208
      %v1261 = vadd.f32 %v1034, %v1210
      %v1262 = vadd.f32 %v1037, %v1213
      %v1263 = vadd.f32 %v1039, %v1215
      %v1264 = vadd.f32 %v1042, %v1218
      %v1265 = vadd.f32 %v1044, %v1220
      %v1266 = vadd.f32 %v1047, %v1223
      %v1267 = vadd.f32 %v1049, %v1225
      %v1268 = vadd.f32 %v1052, %v1228
      %v1269 = vadd.f32 %v1054, %v1230
      %v1270 = vadd.f32 %v1057, %v1233
      %v1271 = vadd.f32 %v1059, %v1235
      %v1272 = vadd.f32 %v1062, %v1238
      %v1273 = vadd.f32 %v1064, %v1240
      %s1274 = scalar_lea.vmem %s2, 6
      %v1275 = vld [vmem:[%s1274] sm:$0x3]
      %v1278 = vunpack.c.l.b16 %v577
      %v1279 = vunpack.c.l.b16 %v578
      %v1280 = vpack.c.b16 %v1278, %v649
      %v1281 = vpack.c.b16 %v1279, %v1279
      %v1282 = vrot.slane %v1280, 1
      %v1283 = vsel %vm1068, %v1098, %v1282
      %v1284 = vrot.slane %v1281, 1
      %v1285 = vsel %vm1068, %v1282, %v1284
      %v1287 = vsel %vm800, %v1283, 0
      %v1290 = vsel %vm800, %v1285, 0
      %v1293 = vsel %vm849, %v1275, 0
      %1295 = vmatpush.bf16.msra.mxu0 0
      %1296 = vmatpush.bf16.msra.mxu0 0
      %1297 = vmatpush.bf16.msra.mxu0 0
      %1298 = vmatpush.bf16.msra.mxu0 0
      %1299 = vmatpush.bf16.msra.mxu0 0
      %1300 = vmatpush.bf16.msra.mxu0 0
      %1301 = vmatpush.bf16.msra.mxu0 0
      %1302 = vmatpush.bf16.msra.mxu0 %v1293
      %1303 = vmatmul.bf16.gmra.mxu0 %v1106
      %v1304 = vpop.f32.mrf.mxu0
      %v1305 = vadd.f32 0.0, %v1304
      %v1306 = vpop.f32.mrf.mxu0
      %v1307 = vadd.f32 0.0, %v1306
      %1308 = vmatmul.bf16.gmra.mxu0 %v1109
      %v1309 = vpop.f32.mrf.mxu0
      %v1310 = vadd.f32 0.0, %v1309
      %v1311 = vpop.f32.mrf.mxu0
      %v1312 = vadd.f32 0.0, %v1311
      %1313 = vmatmul.bf16.gmra.mxu0 %v1112
      %v1314 = vpop.f32.mrf.mxu0
      %v1315 = vadd.f32 0.0, %v1314
      %v1316 = vpop.f32.mrf.mxu0
      %v1317 = vadd.f32 0.0, %v1316
      %1318 = vmatmul.bf16.gmra.mxu0 %v1115
      %v1319 = vpop.f32.mrf.mxu0
      %v1320 = vadd.f32 0.0, %v1319
      %v1321 = vpop.f32.mrf.mxu0
      %v1322 = vadd.f32 0.0, %v1321
      %1323 = vmatmul.bf16.gmra.mxu0 %v1118
      %v1324 = vpop.f32.mrf.mxu0
      %v1325 = vadd.f32 0.0, %v1324
      %v1326 = vpop.f32.mrf.mxu0
      %v1327 = vadd.f32 0.0, %v1326
      %1328 = vmatmul.bf16.gmra.mxu0 %v1121
      %v1329 = vpop.f32.mrf.mxu0
      %v1330 = vadd.f32 0.0, %v1329
      %v1331 = vpop.f32.mrf.mxu0
      %v1332 = vadd.f32 0.0, %v1331
      %1333 = vmatmul.bf16.gmra.mxu0 %v1124
      %v1334 = vpop.f32.mrf.mxu0
      %v1335 = vadd.f32 0.0, %v1334
      %v1336 = vpop.f32.mrf.mxu0
      %v1337 = vadd.f32 0.0, %v1336
      %1338 = vmatmul.bf16.gmra.mxu0 %v1127
      %v1339 = vpop.f32.mrf.mxu0
      %v1340 = vadd.f32 0.0, %v1339
      %v1341 = vpop.f32.mrf.mxu0
      %v1342 = vadd.f32 0.0, %v1341
      %1343 = vmatmul.bf16.gmra.mxu0 %v1130
      %v1344 = vpop.f32.mrf.mxu0
      %v1345 = vadd.f32 0.0, %v1344
      %v1346 = vpop.f32.mrf.mxu0
      %v1347 = vadd.f32 0.0, %v1346
      %1348 = vmatmul.bf16.gmra.mxu0 %v1133
      %v1349 = vpop.f32.mrf.mxu0
      %v1350 = vadd.f32 0.0, %v1349
      %v1351 = vpop.f32.mrf.mxu0
      %v1352 = vadd.f32 0.0, %v1351
      %1353 = vmatmul.bf16.gmra.mxu0 %v1136
      %v1354 = vpop.f32.mrf.mxu0
      %v1355 = vadd.f32 0.0, %v1354
      %v1356 = vpop.f32.mrf.mxu0
      %v1357 = vadd.f32 0.0, %v1356
      %1358 = vmatmul.bf16.gmra.mxu0 %v1139
      %v1359 = vpop.f32.mrf.mxu0
      %v1360 = vadd.f32 0.0, %v1359
      %v1361 = vpop.f32.mrf.mxu0
      %v1362 = vadd.f32 0.0, %v1361
      %1363 = vmatmul.bf16.gmra.mxu0 %v1142
      %v1364 = vpop.f32.mrf.mxu0
      %v1365 = vadd.f32 0.0, %v1364
      %v1366 = vpop.f32.mrf.mxu0
      %v1367 = vadd.f32 0.0, %v1366
      %1368 = vmatmul.bf16.gmra.mxu0 %v1145
      %v1369 = vpop.f32.mrf.mxu0
      %v1370 = vadd.f32 0.0, %v1369
      %v1371 = vpop.f32.mrf.mxu0
      %v1372 = vadd.f32 0.0, %v1371
      %1373 = vmatmul.bf16.gmra.mxu0 %v1287
      %v1374 = vpop.f32.mrf.mxu0
      %v1375 = vadd.f32 0.0, %v1374
      %v1376 = vpop.f32.mrf.mxu0
      %v1377 = vadd.f32 0.0, %v1376
      %1378 = vmatmul.bf16.gmra.mxu0 %v1290
      %v1379 = vpop.f32.mrf.mxu0
      %v1380 = vadd.f32 0.0, %v1379
      %v1381 = vpop.f32.mrf.mxu0
      %v1382 = vadd.f32 0.0, %v1381
      %1383 = vdwg.mxu0
      %v1384 = vadd.f32 %v1242, %v1305
      %v1385 = vadd.f32 %v1243, %v1307
      %v1386 = vadd.f32 %v1244, %v1310
      %v1387 = vadd.f32 %v1245, %v1312
      %v1388 = vadd.f32 %v1246, %v1315
      %v1389 = vadd.f32 %v1247, %v1317
      %v1390 = vadd.f32 %v1248, %v1320
      %v1391 = vadd.f32 %v1249, %v1322
      %v1392 = vadd.f32 %v1250, %v1325
      %v1393 = vadd.f32 %v1251, %v1327
      %v1394 = vadd.f32 %v1252, %v1330
      %v1395 = vadd.f32 %v1253, %v1332
      %v1396 = vadd.f32 %v1254, %v1335
      %v1397 = vadd.f32 %v1255, %v1337
      %v1398 = vadd.f32 %v1256, %v1340
      %v1399 = vadd.f32 %v1257, %v1342
      %v1400 = vadd.f32 %v1258, %v1345
      %v1401 = vadd.f32 %v1259, %v1347
      %v1402 = vadd.f32 %v1260, %v1350
      %v1403 = vadd.f32 %v1261, %v1352
      %v1404 = vadd.f32 %v1262, %v1355
      %v1405 = vadd.f32 %v1263, %v1357
      %v1406 = vadd.f32 %v1264, %v1360
      %v1407 = vadd.f32 %v1265, %v1362
      %v1408 = vadd.f32 %v1266, %v1365
      %v1409 = vadd.f32 %v1267, %v1367
      %v1410 = vadd.f32 %v1268, %v1370
      %v1411 = vadd.f32 %v1269, %v1372
      %v1412 = vadd.f32 %v1270, %v1375
      %v1413 = vadd.f32 %v1271, %v1377
      %v1414 = vadd.f32 %v1272, %v1380
      %v1415 = vadd.f32 %v1273, %v1382
      %s1416 = scalar_lea.vmem %s2, 8
      %v1417 = vld [vmem:[%s1416] sm:$0x3]
      %vm1418 = vsmask.f32 6400
      %v1419 = vrot.slane %v680, 1
      %v1420 = vrot.slane %v676, 2
      %v1421 = vor.u32 %v1419, %v1420
      %v1422 = vrot.slane %v688, 1
      %v1423 = vrot.slane %v684, 2
      %v1424 = vor.u32 %v1422, %v1423
      %v1425 = vsel %vm1418, %v1421, %v1424
      %v1426 = vrot.slane %v696, 1
      %v1427 = vrot.slane %v692, 2
      %v1428 = vor.u32 %v1426, %v1427
      %v1429 = vsel %vm1418, %v1424, %v1428
      %v1430 = vrot.slane %v704, 1
      %v1431 = vrot.slane %v700, 2
      %v1432 = vor.u32 %v1430, %v1431
      %v1433 = vsel %vm1418, %v1428, %v1432
      %v1434 = vrot.slane %v712, 1
      %v1435 = vrot.slane %v708, 2
      %v1436 = vor.u32 %v1434, %v1435
      %v1437 = vsel %vm1418, %v1432, %v1436
      %v1438 = vrot.slane %v720, 1
      %v1439 = vrot.slane %v716, 2
      %v1440 = vor.u32 %v1438, %v1439
      %v1441 = vsel %vm1418, %v1436, %v1440
      %v1442 = vrot.slane %v728, 1
      %v1443 = vrot.slane %v724, 2
      %v1444 = vor.u32 %v1442, %v1443
      %v1445 = vsel %vm1418, %v1440, %v1444
      %v1446 = vrot.slane %v736, 1
      %v1447 = vrot.slane %v732, 2
      %v1448 = vor.u32 %v1446, %v1447
      %v1449 = vsel %vm1418, %v1444, %v1448
      %v1450 = vrot.slane %v744, 1
      %v1451 = vrot.slane %v740, 2
      %v1452 = vor.u32 %v1450, %v1451
      %v1453 = vsel %vm1418, %v1448, %v1452
      %v1454 = vrot.slane %v752, 1
      %v1455 = vrot.slane %v748, 2
      %v1456 = vor.u32 %v1454, %v1455
      %v1457 = vsel %vm1418, %v1452, %v1456
      %v1458 = vrot.slane %v760, 1
      %v1459 = vrot.slane %v756, 2
      %v1460 = vor.u32 %v1458, %v1459
      %v1461 = vsel %vm1418, %v1456, %v1460
      %v1462 = vrot.slane %v768, 1
      %v1463 = vrot.slane %v764, 2
      %v1464 = vor.u32 %v1462, %v1463
      %v1465 = vsel %vm1418, %v1460, %v1464
      %v1466 = vrot.slane %v776, 1
      %v1467 = vrot.slane %v772, 2
      %v1468 = vor.u32 %v1466, %v1467
      %v1469 = vsel %vm1418, %v1464, %v1468
      %v1470 = vrot.slane %v784, 1
      %v1471 = vrot.slane %v780, 2
      %v1472 = vor.u32 %v1470, %v1471
      %v1473 = vsel %vm1418, %v1468, %v1472
      %v1474 = vrot.slane %v792, 1
      %v1475 = vrot.slane %v788, 2
      %v1476 = vor.u32 %v1474, %v1475
      %v1477 = vsel %vm1418, %v1472, %v1476
      %v1479 = vshrl.u32 %v1280, 16
      %v1481 = vrot.slane %v1479, 1
      %v1482 = vshll.u32 %v1280, 16
      %v1484 = vrot.slane %v1482, 2
      %v1485 = vor.u32 %v1481, %v1484
      %v1486 = vsel %vm1418, %v1476, %v1485
      %v1488 = vshrl.u32 %v1281, 16
      %v1490 = vrot.slane %v1488, 1
      %v1491 = vshll.u32 %v1281, 16
      %v1493 = vrot.slane %v1491, 2
      %v1494 = vor.u32 %v1490, %v1493
      %v1495 = vsel %vm1418, %v1485, %v1494
      %v1497 = vsel %vm800, %v1425, 0
      %v1500 = vsel %vm800, %v1429, 0
      %v1503 = vsel %vm800, %v1433, 0
      %v1506 = vsel %vm800, %v1437, 0
      %v1509 = vsel %vm800, %v1441, 0
      %v1512 = vsel %vm800, %v1445, 0
      %v1515 = vsel %vm800, %v1449, 0
      %v1518 = vsel %vm800, %v1453, 0
      %v1521 = vsel %vm800, %v1457, 0
      %v1524 = vsel %vm800, %v1461, 0
      %v1527 = vsel %vm800, %v1465, 0
      %v1530 = vsel %vm800, %v1469, 0
      %v1533 = vsel %vm800, %v1473, 0
      %v1536 = vsel %vm800, %v1477, 0
      %v1539 = vsel %vm800, %v1486, 0
      %v1542 = vsel %vm800, %v1495, 0
      %v1545 = vsel %vm849, %v1417, 0
      %1547 = vmatpush.bf16.msra.mxu0 0
      %1548 = vmatpush.bf16.msra.mxu0 0
      %1549 = vmatpush.bf16.msra.mxu0 0
      %1550 = vmatpush.bf16.msra.mxu0 0
      %1551 = vmatpush.bf16.msra.mxu0 0
      %1552 = vmatpush.bf16.msra.mxu0 0
      %1553 = vmatpush.bf16.msra.mxu0 0
      %1554 = vmatpush.bf16.msra.mxu0 %v1545
      %1555 = vmatmul.bf16.gmra.mxu0 %v1497
      %v1556 = vpop.f32.mrf.mxu0
      %v1557 = vadd.f32 0.0, %v1556
      %v1558 = vpop.f32.mrf.mxu0
      %v1559 = vadd.f32 0.0, %v1558
      %1560 = vmatmul.bf16.gmra.mxu0 %v1500
      %v1561 = vpop.f32.mrf.mxu0
      %v1562 = vadd.f32 0.0, %v1561
      %v1563 = vpop.f32.mrf.mxu0
      %v1564 = vadd.f32 0.0, %v1563
      %1565 = vmatmul.bf16.gmra.mxu0 %v1503
      %v1566 = vpop.f32.mrf.mxu0
      %v1567 = vadd.f32 0.0, %v1566
      %v1568 = vpop.f32.mrf.mxu0
      %v1569 = vadd.f32 0.0, %v1568
      %1570 = vmatmul.bf16.gmra.mxu0 %v1506
      %v1571 = vpop.f32.mrf.mxu0
      %v1572 = vadd.f32 0.0, %v1571
      %v1573 = vpop.f32.mrf.mxu0
      %v1574 = vadd.f32 0.0, %v1573
      %1575 = vmatmul.bf16.gmra.mxu0 %v1509
      %v1576 = vpop.f32.mrf.mxu0
      %v1577 = vadd.f32 0.0, %v1576
      %v1578 = vpop.f32.mrf.mxu0
      %v1579 = vadd.f32 0.0, %v1578
      %1580 = vmatmul.bf16.gmra.mxu0 %v1512
      %v1581 = vpop.f32.mrf.mxu0
      %v1582 = vadd.f32 0.0, %v1581
      %v1583 = vpop.f32.mrf.mxu0
      %v1584 = vadd.f32 0.0, %v1583
      %1585 = vmatmul.bf16.gmra.mxu0 %v1515
      %v1586 = vpop.f32.mrf.mxu0
      %v1587 = vadd.f32 0.0, %v1586
      %v1588 = vpop.f32.mrf.mxu0
      %v1589 = vadd.f32 0.0, %v1588
      %1590 = vmatmul.bf16.gmra.mxu0 %v1518
      %v1591 = vpop.f32.mrf.mxu0
      %v1592 = vadd.f32 0.0, %v1591
      %v1593 = vpop.f32.mrf.mxu0
      %v1594 = vadd.f32 0.0, %v1593
      %1595 = vmatmul.bf16.gmra.mxu0 %v1521
      %v1596 = vpop.f32.mrf.mxu0
      %v1597 = vadd.f32 0.0, %v1596
      %v1598 = vpop.f32.mrf.mxu0
      %v1599 = vadd.f32 0.0, %v1598
      %1600 = vmatmul.bf16.gmra.mxu0 %v1524
      %v1601 = vpop.f32.mrf.mxu0
      %v1602 = vadd.f32 0.0, %v1601
      %v1603 = vpop.f32.mrf.mxu0
      %v1604 = vadd.f32 0.0, %v1603
      %1605 = vmatmul.bf16.gmra.mxu0 %v1527
      %v1606 = vpop.f32.mrf.mxu0
      %v1607 = vadd.f32 0.0, %v1606
      %v1608 = vpop.f32.mrf.mxu0
      %v1609 = vadd.f32 0.0, %v1608
      %1610 = vmatmul.bf16.gmra.mxu0 %v1530
      %v1611 = vpop.f32.mrf.mxu0
      %v1612 = vadd.f32 0.0, %v1611
      %v1613 = vpop.f32.mrf.mxu0
      %v1614 = vadd.f32 0.0, %v1613
      %1615 = vmatmul.bf16.gmra.mxu0 %v1533
      %v1616 = vpop.f32.mrf.mxu0
      %v1617 = vadd.f32 0.0, %v1616
      %v1618 = vpop.f32.mrf.mxu0
      %v1619 = vadd.f32 0.0, %v1618
      %1620 = vmatmul.bf16.gmra.mxu0 %v1536
      %v1621 = vpop.f32.mrf.mxu0
      %v1622 = vadd.f32 0.0, %v1621
      %v1623 = vpop.f32.mrf.mxu0
      %v1624 = vadd.f32 0.0, %v1623
      %1625 = vmatmul.bf16.gmra.mxu0 %v1539
      %v1626 = vpop.f32.mrf.mxu0
      %v1627 = vadd.f32 0.0, %v1626
      %v1628 = vpop.f32.mrf.mxu0
      %v1629 = vadd.f32 0.0, %v1628
      %1630 = vmatmul.bf16.gmra.mxu0 %v1542
      %v1631 = vpop.f32.mrf.mxu0
      %v1632 = vadd.f32 0.0, %v1631
      %v1633 = vpop.f32.mrf.mxu0
      %v1634 = vadd.f32 0.0, %v1633
      %1635 = vdwg.mxu0
      %v1636 = vadd.f32 %v1384, %v1557
      %v1637 = vadd.f32 %v1385, %v1559
      %v1638 = vadd.f32 %v1386, %v1562
      %v1639 = vadd.f32 %v1387, %v1564
      %v1640 = vadd.f32 %v1388, %v1567
      %v1641 = vadd.f32 %v1389, %v1569
      %v1642 = vadd.f32 %v1390, %v1572
      %v1643 = vadd.f32 %v1391, %v1574
      %v1644 = vadd.f32 %v1392, %v1577
      %v1645 = vadd.f32 %v1393, %v1579
      %v1646 = vadd.f32 %v1394, %v1582
      %v1647 = vadd.f32 %v1395, %v1584
      %v1648 = vadd.f32 %v1396, %v1587
      %v1649 = vadd.f32 %v1397, %v1589
      %v1650 = vadd.f32 %v1398, %v1592
      %v1651 = vadd.f32 %v1399, %v1594
      %v1652 = vadd.f32 %v1400, %v1597
      %v1653 = vadd.f32 %v1401, %v1599
      %v1654 = vadd.f32 %v1402, %v1602
      %v1655 = vadd.f32 %v1403, %v1604
      %v1656 = vadd.f32 %v1404, %v1607
      %v1657 = vadd.f32 %v1405, %v1609
      %v1658 = vadd.f32 %v1406, %v1612
      %v1659 = vadd.f32 %v1407, %v1614
      %v1660 = vadd.f32 %v1408, %v1617
      %v1661 = vadd.f32 %v1409, %v1619
      %v1662 = vadd.f32 %v1410, %v1622
      %v1663 = vadd.f32 %v1411, %v1624
      %v1664 = vadd.f32 %v1412, %v1627
      %v1665 = vadd.f32 %v1413, %v1629
      %v1666 = vadd.f32 %v1414, %v1632
      %v1667 = vadd.f32 %v1415, %v1634
      %s1668 = scalar_lea.vmem %s2, 10
      %v1669 = vld [vmem:[%s1668] sm:$0x3]
      %vm1670 = vcmask 1045504
      %v1671 = vrot.slane %v651, 2
      %v1672 = vrot.slane %v652, 2
      %v1673 = vsel %vm1670, %v1671, %v1672
      %v1674 = vrot.slane %v653, 2
      %v1675 = vsel %vm1670, %v1672, %v1674
      %v1676 = vrot.slane %v654, 2
      %v1677 = vsel %vm1670, %v1674, %v1676
      %v1678 = vrot.slane %v655, 2
      %v1679 = vsel %vm1670, %v1676, %v1678
      %v1680 = vrot.slane %v656, 2
      %v1681 = vsel %vm1670, %v1678, %v1680
      %v1682 = vrot.slane %v657, 2
      %v1683 = vsel %vm1670, %v1680, %v1682
      %v1684 = vrot.slane %v658, 2
      %v1685 = vsel %vm1670, %v1682, %v1684
      %v1686 = vrot.slane %v659, 2
      %v1687 = vsel %vm1670, %v1684, %v1686
      %v1688 = vrot.slane %v660, 2
      %v1689 = vsel %vm1670, %v1686, %v1688
      %v1690 = vrot.slane %v661, 2
      %v1691 = vsel %vm1670, %v1688, %v1690
      %v1692 = vrot.slane %v662, 2
      %v1693 = vsel %vm1670, %v1690, %v1692
      %v1694 = vrot.slane %v663, 2
      %v1695 = vsel %vm1670, %v1692, %v1694
      %v1696 = vrot.slane %v664, 2
      %v1697 = vsel %vm1670, %v1694, %v1696
      %v1698 = vrot.slane %v665, 2
      %v1699 = vsel %vm1670, %v1696, %v1698
      %v1700 = vrot.slane %v1280, 2
      %v1701 = vsel %vm1670, %v1698, %v1700
      %v1702 = vrot.slane %v1281, 2
      %v1703 = vsel %vm1670, %v1700, %v1702
      %v1705 = vsel %vm800, %v1673, 0
      %v1708 = vsel %vm800, %v1675, 0
      %v1711 = vsel %vm800, %v1677, 0
      %v1714 = vsel %vm800, %v1679, 0
      %v1717 = vsel %vm800, %v1681, 0
      %v1720 = vsel %vm800, %v1683, 0
      %v1723 = vsel %vm800, %v1685, 0
      %v1726 = vsel %vm800, %v1687, 0
      %v1729 = vsel %vm800, %v1689, 0
      %v1732 = vsel %vm800, %v1691, 0
      %v1735 = vsel %vm800, %v1693, 0
      %v1738 = vsel %vm800, %v1695, 0
      %v1741 = vsel %vm800, %v1697, 0
      %v1744 = vsel %vm800, %v1699, 0
      %v1747 = vsel %vm800, %v1701, 0
      %v1750 = vsel %vm800, %v1703, 0
      %v1753 = vsel %vm849, %v1669, 0
      %1755 = vmatpush.bf16.msra.mxu0 0
      %1756 = vmatpush.bf16.msra.mxu0 0
      %1757 = vmatpush.bf16.msra.mxu0 0
      %1758 = vmatpush.bf16.msra.mxu0 0
      %1759 = vmatpush.bf16.msra.mxu0 0
      %1760 = vmatpush.bf16.msra.mxu0 0
      %1761 = vmatpush.bf16.msra.mxu0 0
      %1762 = vmatpush.bf16.msra.mxu0 %v1753
      %1763 = vmatmul.bf16.gmra.mxu0 %v1705
      %v1764 = vpop.f32.mrf.mxu0
      %v1765 = vadd.f32 0.0, %v1764
      %v1766 = vpop.f32.mrf.mxu0
      %v1767 = vadd.f32 0.0, %v1766
      %1768 = vmatmul.bf16.gmra.mxu0 %v1708
      %v1769 = vpop.f32.mrf.mxu0
      %v1770 = vadd.f32 0.0, %v1769
      %v1771 = vpop.f32.mrf.mxu0
      %v1772 = vadd.f32 0.0, %v1771
      %1773 = vmatmul.bf16.gmra.mxu0 %v1711
      %v1774 = vpop.f32.mrf.mxu0
      %v1775 = vadd.f32 0.0, %v1774
      %v1776 = vpop.f32.mrf.mxu0
      %v1777 = vadd.f32 0.0, %v1776
      %1778 = vmatmul.bf16.gmra.mxu0 %v1714
      %v1779 = vpop.f32.mrf.mxu0
      %v1780 = vadd.f32 0.0, %v1779
      %v1781 = vpop.f32.mrf.mxu0
      %v1782 = vadd.f32 0.0, %v1781
      %1783 = vmatmul.bf16.gmra.mxu0 %v1717
      %v1784 = vpop.f32.mrf.mxu0
      %v1785 = vadd.f32 0.0, %v1784
      %v1786 = vpop.f32.mrf.mxu0
      %v1787 = vadd.f32 0.0, %v1786
      %1788 = vmatmul.bf16.gmra.mxu0 %v1720
      %v1789 = vpop.f32.mrf.mxu0
      %v1790 = vadd.f32 0.0, %v1789
      %v1791 = vpop.f32.mrf.mxu0
      %v1792 = vadd.f32 0.0, %v1791
      %1793 = vmatmul.bf16.gmra.mxu0 %v1723
      %v1794 = vpop.f32.mrf.mxu0
      %v1795 = vadd.f32 0.0, %v1794
      %v1796 = vpop.f32.mrf.mxu0
      %v1797 = vadd.f32 0.0, %v1796
      %1798 = vmatmul.bf16.gmra.mxu0 %v1726
      %v1799 = vpop.f32.mrf.mxu0
      %v1800 = vadd.f32 0.0, %v1799
      %v1801 = vpop.f32.mrf.mxu0
      %v1802 = vadd.f32 0.0, %v1801
      %1803 = vmatmul.bf16.gmra.mxu0 %v1729
      %v1804 = vpop.f32.mrf.mxu0
      %v1805 = vadd.f32 0.0, %v1804
      %v1806 = vpop.f32.mrf.mxu0
      %v1807 = vadd.f32 0.0, %v1806
      %1808 = vmatmul.bf16.gmra.mxu0 %v1732
      %v1809 = vpop.f32.mrf.mxu0
      %v1810 = vadd.f32 0.0, %v1809
      %v1811 = vpop.f32.mrf.mxu0
      %v1812 = vadd.f32 0.0, %v1811
      %1813 = vmatmul.bf16.gmra.mxu0 %v1735
      %v1814 = vpop.f32.mrf.mxu0
      %v1815 = vadd.f32 0.0, %v1814
      %v1816 = vpop.f32.mrf.mxu0
      %v1817 = vadd.f32 0.0, %v1816
      %1818 = vmatmul.bf16.gmra.mxu0 %v1738
      %v1819 = vpop.f32.mrf.mxu0
      %v1820 = vadd.f32 0.0, %v1819
      %v1821 = vpop.f32.mrf.mxu0
      %v1822 = vadd.f32 0.0, %v1821
      %1823 = vmatmul.bf16.gmra.mxu0 %v1741
      %v1824 = vpop.f32.mrf.mxu0
      %v1825 = vadd.f32 0.0, %v1824
      %v1826 = vpop.f32.mrf.mxu0
      %v1827 = vadd.f32 0.0, %v1826
      %1828 = vmatmul.bf16.gmra.mxu0 %v1744
      %v1829 = vpop.f32.mrf.mxu0
      %v1830 = vadd.f32 0.0, %v1829
      %v1831 = vpop.f32.mrf.mxu0
      %v1832 = vadd.f32 0.0, %v1831
      %1833 = vmatmul.bf16.gmra.mxu0 %v1747
      %v1834 = vpop.f32.mrf.mxu0
      %v1835 = vadd.f32 0.0, %v1834
      %v1836 = vpop.f32.mrf.mxu0
      %v1837 = vadd.f32 0.0, %v1836
      %1838 = vmatmul.bf16.gmra.mxu0 %v1750
      %v1839 = vpop.f32.mrf.mxu0
      %v1840 = vadd.f32 0.0, %v1839
      %v1841 = vpop.f32.mrf.mxu0
      %v1842 = vadd.f32 0.0, %v1841
      %1843 = vdwg.mxu0
      %v1844 = vadd.f32 %v1636, %v1765
      %v1845 = vadd.f32 %v1637, %v1767
      %v1846 = vadd.f32 %v1638, %v1770
      %v1847 = vadd.f32 %v1639, %v1772
      %v1848 = vadd.f32 %v1640, %v1775
      %v1849 = vadd.f32 %v1641, %v1777
      %v1850 = vadd.f32 %v1642, %v1780
      %v1851 = vadd.f32 %v1643, %v1782
      %v1852 = vadd.f32 %v1644, %v1785
      %v1853 = vadd.f32 %v1645, %v1787
      %v1854 = vadd.f32 %v1646, %v1790
      %v1855 = vadd.f32 %v1647, %v1792
      %v1856 = vadd.f32 %v1648, %v1795
      %v1857 = vadd.f32 %v1649, %v1797
      %v1858 = vadd.f32 %v1650, %v1800
      %v1859 = vadd.f32 %v1651, %v1802
      %v1860 = vadd.f32 %v1652, %v1805
      %v1861 = vadd.f32 %v1653, %v1807
      %v1862 = vadd.f32 %v1654, %v1810
      %v1863 = vadd.f32 %v1655, %v1812
      %v1864 = vadd.f32 %v1656, %v1815
      %v1865 = vadd.f32 %v1657, %v1817
      %v1866 = vadd.f32 %v1658, %v1820
      %v1867 = vadd.f32 %v1659, %v1822
      %v1868 = vadd.f32 %v1660, %v1825
      %v1869 = vadd.f32 %v1661, %v1827
      %v1870 = vadd.f32 %v1662, %v1830
      %v1871 = vadd.f32 %v1663, %v1832
      %v1872 = vadd.f32 %v1664, %v1835
      %v1873 = vadd.f32 %v1665, %v1837
      %v1874 = vadd.f32 %v1666, %v1840
      %v1875 = vadd.f32 %v1667, %v1842
      %s1876 = scalar_lea.vmem %s2, 12
      %v1877 = vld [vmem:[%s1876] sm:$0x3]
      %v1880 = vunpack.c.l.b16 %v579
      %v1881 = vunpack.c.l.b16 %v580
      %v1882 = vpack.c.b16 %v1880, %v1279
      %v1883 = vpack.c.b16 %v1881, %v1881
      %v1884 = vrot.slane %v1882, 2
      %v1885 = vsel %vm1670, %v1700, %v1884
      %v1886 = vrot.slane %v1883, 2
      %v1887 = vsel %vm1670, %v1884, %v1886
      %v1889 = vsel %vm800, %v1885, 0
      %v1892 = vsel %vm800, %v1887, 0
      %v1895 = vsel %vm849, %v1877, 0
      %1897 = vmatpush.bf16.msra.mxu0 0
      %1898 = vmatpush.bf16.msra.mxu0 0
      %1899 = vmatpush.bf16.msra.mxu0 0
      %1900 = vmatpush.bf16.msra.mxu0 0
      %1901 = vmatpush.bf16.msra.mxu0 0
      %1902 = vmatpush.bf16.msra.mxu0 0
      %1903 = vmatpush.bf16.msra.mxu0 0
      %1904 = vmatpush.bf16.msra.mxu0 %v1895
      %1905 = vmatmul.bf16.gmra.mxu0 %v1708
      %v1906 = vpop.f32.mrf.mxu0
      %v1907 = vadd.f32 0.0, %v1906
      %v1908 = vpop.f32.mrf.mxu0
      %v1909 = vadd.f32 0.0, %v1908
      %1910 = vmatmul.bf16.gmra.mxu0 %v1711
      %v1911 = vpop.f32.mrf.mxu0
      %v1912 = vadd.f32 0.0, %v1911
      %v1913 = vpop.f32.mrf.mxu0
      %v1914 = vadd.f32 0.0, %v1913
      %1915 = vmatmul.bf16.gmra.mxu0 %v1714
      %v1916 = vpop.f32.mrf.mxu0
      %v1917 = vadd.f32 0.0, %v1916
      %v1918 = vpop.f32.mrf.mxu0
      %v1919 = vadd.f32 0.0, %v1918
      %1920 = vmatmul.bf16.gmra.mxu0 %v1717
      %v1921 = vpop.f32.mrf.mxu0
      %v1922 = vadd.f32 0.0, %v1921
      %v1923 = vpop.f32.mrf.mxu0
      %v1924 = vadd.f32 0.0, %v1923
      %1925 = vmatmul.bf16.gmra.mxu0 %v1720
      %v1926 = vpop.f32.mrf.mxu0
      %v1927 = vadd.f32 0.0, %v1926
      %v1928 = vpop.f32.mrf.mxu0
      %v1929 = vadd.f32 0.0, %v1928
      %1930 = vmatmul.bf16.gmra.mxu0 %v1723
      %v1931 = vpop.f32.mrf.mxu0
      %v1932 = vadd.f32 0.0, %v1931
      %v1933 = vpop.f32.mrf.mxu0
      %v1934 = vadd.f32 0.0, %v1933
      %1935 = vmatmul.bf16.gmra.mxu0 %v1726
      %v1936 = vpop.f32.mrf.mxu0
      %v1937 = vadd.f32 0.0, %v1936
      %v1938 = vpop.f32.mrf.mxu0
      %v1939 = vadd.f32 0.0, %v1938
      %1940 = vmatmul.bf16.gmra.mxu0 %v1729
      %v1941 = vpop.f32.mrf.mxu0
      %v1942 = vadd.f32 0.0, %v1941
      %v1943 = vpop.f32.mrf.mxu0
      %v1944 = vadd.f32 0.0, %v1943
      %1945 = vmatmul.bf16.gmra.mxu0 %v1732
      %v1946 = vpop.f32.mrf.mxu0
      %v1947 = vadd.f32 0.0, %v1946
      %v1948 = vpop.f32.mrf.mxu0
      %v1949 = vadd.f32 0.0, %v1948
      %1950 = vmatmul.bf16.gmra.mxu0 %v1735
      %v1951 = vpop.f32.mrf.mxu0
      %v1952 = vadd.f32 0.0, %v1951
      %v1953 = vpop.f32.mrf.mxu0
      %v1954 = vadd.f32 0.0, %v1953
      %1955 = vmatmul.bf16.gmra.mxu0 %v1738
      %v1956 = vpop.f32.mrf.mxu0
      %v1957 = vadd.f32 0.0, %v1956
      %v1958 = vpop.f32.mrf.mxu0
      %v1959 = vadd.f32 0.0, %v1958
      %1960 = vmatmul.bf16.gmra.mxu0 %v1741
      %v1961 = vpop.f32.mrf.mxu0
      %v1962 = vadd.f32 0.0, %v1961
      %v1963 = vpop.f32.mrf.mxu0
      %v1964 = vadd.f32 0.0, %v1963
      %1965 = vmatmul.bf16.gmra.mxu0 %v1744
      %v1966 = vpop.f32.mrf.mxu0
      %v1967 = vadd.f32 0.0, %v1966
      %v1968 = vpop.f32.mrf.mxu0
      %v1969 = vadd.f32 0.0, %v1968
      %1970 = vmatmul.bf16.gmra.mxu0 %v1747
      %v1971 = vpop.f32.mrf.mxu0
      %v1972 = vadd.f32 0.0, %v1971
      %v1973 = vpop.f32.mrf.mxu0
      %v1974 = vadd.f32 0.0, %v1973
      %1975 = vmatmul.bf16.gmra.mxu0 %v1889
      %v1976 = vpop.f32.mrf.mxu0
      %v1977 = vadd.f32 0.0, %v1976
      %v1978 = vpop.f32.mrf.mxu0
      %v1979 = vadd.f32 0.0, %v1978
      %1980 = vmatmul.bf16.gmra.mxu0 %v1892
      %v1981 = vpop.f32.mrf.mxu0
      %v1982 = vadd.f32 0.0, %v1981
      %v1983 = vpop.f32.mrf.mxu0
      %v1984 = vadd.f32 0.0, %v1983
      %1985 = vdwg.mxu0
      %v1986 = vadd.f32 %v1844, %v1907
      %v1987 = vadd.f32 %v1845, %v1909
      %v1988 = vadd.f32 %v1846, %v1912
      %v1989 = vadd.f32 %v1847, %v1914
      %v1990 = vadd.f32 %v1848, %v1917
      %v1991 = vadd.f32 %v1849, %v1919
      %v1992 = vadd.f32 %v1850, %v1922
      %v1993 = vadd.f32 %v1851, %v1924
      %v1994 = vadd.f32 %v1852, %v1927
      %v1995 = vadd.f32 %v1853, %v1929
      %v1996 = vadd.f32 %v1854, %v1932
      %v1997 = vadd.f32 %v1855, %v1934
      %v1998 = vadd.f32 %v1856, %v1937
      %v1999 = vadd.f32 %v1857, %v1939
      %v2000 = vadd.f32 %v1858, %v1942
      %v2001 = vadd.f32 %v1859, %v1944
      %v2002 = vadd.f32 %v1860, %v1947
      %v2003 = vadd.f32 %v1861, %v1949
      %v2004 = vadd.f32 %v1862, %v1952
      %v2005 = vadd.f32 %v1863, %v1954
      %v2006 = vadd.f32 %v1864, %v1957
      %v2007 = vadd.f32 %v1865, %v1959
      %v2008 = vadd.f32 %v1866, %v1962
      %v2009 = vadd.f32 %v1867, %v1964
      %v2010 = vadd.f32 %v1868, %v1967
      %v2011 = vadd.f32 %v1869, %v1969
      %v2012 = vadd.f32 %v1870, %v1972
      %v2013 = vadd.f32 %v1871, %v1974
      %v2014 = vadd.f32 %v1872, %v1977
      %v2015 = vadd.f32 %v1873, %v1979
      %v2016 = vadd.f32 %v1874, %v1982
      %v2017 = vadd.f32 %v1875, %v1984
      %s2018 = scalar_lea.vmem %s2, 14
      %v2019 = vld [vmem:[%s2018] sm:$0x3]
      %vm2020 = vsmask.f32 5376
      %v2021 = vrot.slane %v688, 2
      %v2022 = vrot.slane %v684, 3
      %v2023 = vor.u32 %v2021, %v2022
      %v2024 = vrot.slane %v696, 2
      %v2025 = vrot.slane %v692, 3
      %v2026 = vor.u32 %v2024, %v2025
      %v2027 = vsel %vm2020, %v2023, %v2026
      %v2028 = vrot.slane %v704, 2
      %v2029 = vrot.slane %v700, 3
      %v2030 = vor.u32 %v2028, %v2029
      %v2031 = vsel %vm2020, %v2026, %v2030
      %v2032 = vrot.slane %v712, 2
      %v2033 = vrot.slane %v708, 3
      %v2034 = vor.u32 %v2032, %v2033
      %v2035 = vsel %vm2020, %v2030, %v2034
      %v2036 = vrot.slane %v720, 2
      %v2037 = vrot.slane %v716, 3
      %v2038 = vor.u32 %v2036, %v2037
      %v2039 = vsel %vm2020, %v2034, %v2038
      %v2040 = vrot.slane %v728, 2
      %v2041 = vrot.slane %v724, 3
      %v2042 = vor.u32 %v2040, %v2041
      %v2043 = vsel %vm2020, %v2038, %v2042
      %v2044 = vrot.slane %v736, 2
      %v2045 = vrot.slane %v732, 3
      %v2046 = vor.u32 %v2044, %v2045
      %v2047 = vsel %vm2020, %v2042, %v2046
      %v2048 = vrot.slane %v744, 2
      %v2049 = vrot.slane %v740, 3
      %v2050 = vor.u32 %v2048, %v2049
      %v2051 = vsel %vm2020, %v2046, %v2050
      %v2052 = vrot.slane %v752, 2
      %v2053 = vrot.slane %v748, 3
      %v2054 = vor.u32 %v2052, %v2053
      %v2055 = vsel %vm2020, %v2050, %v2054
      %v2056 = vrot.slane %v760, 2
      %v2057 = vrot.slane %v756, 3
      %v2058 = vor.u32 %v2056, %v2057
      %v2059 = vsel %vm2020, %v2054, %v2058
      %v2060 = vrot.slane %v768, 2
      %v2061 = vrot.slane %v764, 3
      %v2062 = vor.u32 %v2060, %v2061
      %v2063 = vsel %vm2020, %v2058, %v2062
      %v2064 = vrot.slane %v776, 2
      %v2065 = vrot.slane %v772, 3
      %v2066 = vor.u32 %v2064, %v2065
      %v2067 = vsel %vm2020, %v2062, %v2066
      %v2068 = vrot.slane %v784, 2
      %v2069 = vrot.slane %v780, 3
      %v2070 = vor.u32 %v2068, %v2069
      %v2071 = vsel %vm2020, %v2066, %v2070
      %v2072 = vrot.slane %v792, 2
      %v2073 = vrot.slane %v788, 3
      %v2074 = vor.u32 %v2072, %v2073
      %v2075 = vsel %vm2020, %v2070, %v2074
      %v2076 = vrot.slane %v1479, 2
      %v2077 = vrot.slane %v1482, 3
      %v2078 = vor.u32 %v2076, %v2077
      %v2079 = vsel %vm2020, %v2074, %v2078
      %v2081 = vshrl.u32 %v1882, 16
      %v2083 = vrot.slane %v2081, 2
      %v2084 = vshll.u32 %v1882, 16
      %v2086 = vrot.slane %v2084, 3
      %v2087 = vor.u32 %v2083, %v2086
      %v2088 = vsel %vm2020, %v2078, %v2087
      %v2090 = vshrl.u32 %v1883, 16
      %v2092 = vrot.slane %v2090, 2
      %v2093 = vshll.u32 %v1883, 16
      %v2095 = vrot.slane %v2093, 3
      %v2096 = vor.u32 %v2092, %v2095
      %v2097 = vsel %vm2020, %v2087, %v2096
      %v2099 = vsel %vm800, %v2027, 0
      %v2102 = vsel %vm800, %v2031, 0
      %v2105 = vsel %vm800, %v2035, 0
      %v2108 = vsel %vm800, %v2039, 0
      %v2111 = vsel %vm800, %v2043, 0
      %v2114 = vsel %vm800, %v2047, 0
      %v2117 = vsel %vm800, %v2051, 0
      %v2120 = vsel %vm800, %v2055, 0
      %v2123 = vsel %vm800, %v2059, 0
      %v2126 = vsel %vm800, %v2063, 0
      %v2129 = vsel %vm800, %v2067, 0
      %v2132 = vsel %vm800, %v2071, 0
      %v2135 = vsel %vm800, %v2075, 0
      %v2138 = vsel %vm800, %v2079, 0
      %v2141 = vsel %vm800, %v2088, 0
      %v2144 = vsel %vm800, %v2097, 0
      %v2147 = vsel %vm849, %v2019, 0
      %2149 = vmatpush.bf16.msra.mxu0 0
      %2150 = vmatpush.bf16.msra.mxu0 0
      %2151 = vmatpush.bf16.msra.mxu0 0
      %2152 = vmatpush.bf16.msra.mxu0 0
      %2153 = vmatpush.bf16.msra.mxu0 0
      %2154 = vmatpush.bf16.msra.mxu0 0
      %2155 = vmatpush.bf16.msra.mxu0 0
      %2156 = vmatpush.bf16.msra.mxu0 %v2147
      %2157 = vmatmul.bf16.gmra.mxu0 %v2099
      %v2158 = vpop.f32.mrf.mxu0
      %v2159 = vadd.f32 0.0, %v2158
      %v2160 = vpop.f32.mrf.mxu0
      %v2161 = vadd.f32 0.0, %v2160
      %2162 = vmatmul.bf16.gmra.mxu0 %v2102
      %v2163 = vpop.f32.mrf.mxu0
      %v2164 = vadd.f32 0.0, %v2163
      %v2165 = vpop.f32.mrf.mxu0
      %v2166 = vadd.f32 0.0, %v2165
      %2167 = vmatmul.bf16.gmra.mxu0 %v2105
      %v2168 = vpop.f32.mrf.mxu0
      %v2169 = vadd.f32 0.0, %v2168
      %v2170 = vpop.f32.mrf.mxu0
      %v2171 = vadd.f32 0.0, %v2170
      %2172 = vmatmul.bf16.gmra.mxu0 %v2108
      %v2173 = vpop.f32.mrf.mxu0
      %v2174 = vadd.f32 0.0, %v2173
      %v2175 = vpop.f32.mrf.mxu0
      %v2176 = vadd.f32 0.0, %v2175
      %2177 = vmatmul.bf16.gmra.mxu0 %v2111
      %v2178 = vpop.f32.mrf.mxu0
      %v2179 = vadd.f32 0.0, %v2178
      %v2180 = vpop.f32.mrf.mxu0
      %v2181 = vadd.f32 0.0, %v2180
      %2182 = vmatmul.bf16.gmra.mxu0 %v2114
      %v2183 = vpop.f32.mrf.mxu0
      %v2184 = vadd.f32 0.0, %v2183
      %v2185 = vpop.f32.mrf.mxu0
      %v2186 = vadd.f32 0.0, %v2185
      %2187 = vmatmul.bf16.gmra.mxu0 %v2117
      %v2188 = vpop.f32.mrf.mxu0
      %v2189 = vadd.f32 0.0, %v2188
      %v2190 = vpop.f32.mrf.mxu0
      %v2191 = vadd.f32 0.0, %v2190
      %2192 = vmatmul.bf16.gmra.mxu0 %v2120
      %v2193 = vpop.f32.mrf.mxu0
      %v2194 = vadd.f32 0.0, %v2193
      %v2195 = vpop.f32.mrf.mxu0
      %v2196 = vadd.f32 0.0, %v2195
      %2197 = vmatmul.bf16.gmra.mxu0 %v2123
      %v2198 = vpop.f32.mrf.mxu0
      %v2199 = vadd.f32 0.0, %v2198
      %v2200 = vpop.f32.mrf.mxu0
      %v2201 = vadd.f32 0.0, %v2200
      %2202 = vmatmul.bf16.gmra.mxu0 %v2126
      %v2203 = vpop.f32.mrf.mxu0
      %v2204 = vadd.f32 0.0, %v2203
      %v2205 = vpop.f32.mrf.mxu0
      %v2206 = vadd.f32 0.0, %v2205
      %2207 = vmatmul.bf16.gmra.mxu0 %v2129
      %v2208 = vpop.f32.mrf.mxu0
      %v2209 = vadd.f32 0.0, %v2208
      %v2210 = vpop.f32.mrf.mxu0
      %v2211 = vadd.f32 0.0, %v2210
      %2212 = vmatmul.bf16.gmra.mxu0 %v2132
      %v2213 = vpop.f32.mrf.mxu0
      %v2214 = vadd.f32 0.0, %v2213
      %v2215 = vpop.f32.mrf.mxu0
      %v2216 = vadd.f32 0.0, %v2215
      %2217 = vmatmul.bf16.gmra.mxu0 %v2135
      %v2218 = vpop.f32.mrf.mxu0
      %v2219 = vadd.f32 0.0, %v2218
      %v2220 = vpop.f32.mrf.mxu0
      %v2221 = vadd.f32 0.0, %v2220
      %2222 = vmatmul.bf16.gmra.mxu0 %v2138
      %v2223 = vpop.f32.mrf.mxu0
      %v2224 = vadd.f32 0.0, %v2223
      %v2225 = vpop.f32.mrf.mxu0
      %v2226 = vadd.f32 0.0, %v2225
      %2227 = vmatmul.bf16.gmra.mxu0 %v2141
      %v2228 = vpop.f32.mrf.mxu0
      %v2229 = vadd.f32 0.0, %v2228
      %v2230 = vpop.f32.mrf.mxu0
      %v2231 = vadd.f32 0.0, %v2230
      %2232 = vmatmul.bf16.gmra.mxu0 %v2144
      %v2233 = vpop.f32.mrf.mxu0
      %v2234 = vadd.f32 0.0, %v2233
      %v2235 = vpop.f32.mrf.mxu0
      %v2236 = vadd.f32 0.0, %v2235
      %2237 = vdwg.mxu0
      %v2238 = vadd.f32 %v1986, %v2159
      %v2239 = vadd.f32 %v1987, %v2161
      %v2240 = vadd.f32 %v1988, %v2164
      %v2241 = vadd.f32 %v1989, %v2166
      %v2242 = vadd.f32 %v1990, %v2169
      %v2243 = vadd.f32 %v1991, %v2171
      %v2244 = vadd.f32 %v1992, %v2174
      %v2245 = vadd.f32 %v1993, %v2176
      %v2246 = vadd.f32 %v1994, %v2179
      %v2247 = vadd.f32 %v1995, %v2181
      %v2248 = vadd.f32 %v1996, %v2184
      %v2249 = vadd.f32 %v1997, %v2186
      %v2250 = vadd.f32 %v1998, %v2189
      %v2251 = vadd.f32 %v1999, %v2191
      %v2252 = vadd.f32 %v2000, %v2194
      %v2253 = vadd.f32 %v2001, %v2196
      %v2254 = vadd.f32 %v2002, %v2199
      %v2255 = vadd.f32 %v2003, %v2201
      %v2256 = vadd.f32 %v2004, %v2204
      %v2257 = vadd.f32 %v2005, %v2206
      %v2258 = vadd.f32 %v2006, %v2209
      %v2259 = vadd.f32 %v2007, %v2211
      %v2260 = vadd.f32 %v2008, %v2214
      %v2261 = vadd.f32 %v2009, %v2216
      %v2262 = vadd.f32 %v2010, %v2219
      %v2263 = vadd.f32 %v2011, %v2221
      %v2264 = vadd.f32 %v2012, %v2224
      %v2265 = vadd.f32 %v2013, %v2226
      %v2266 = vadd.f32 %v2014, %v2229
      %v2267 = vadd.f32 %v2015, %v2231
      %v2268 = vadd.f32 %v2016, %v2234
      %v2269 = vadd.f32 %v2017, %v2236
      %s2270 = scalar_lea.vmem %s2, 16
      %v2271 = vld [vmem:[%s2270] sm:$0x3]
      %vm2272 = vcmask 1044480
      %v2273 = vrot.slane %v652, 3
      %v2274 = vrot.slane %v653, 3
      %v2275 = vsel %vm2272, %v2273, %v2274
      %v2276 = vrot.slane %v654, 3
      %v2277 = vsel %vm2272, %v2274, %v2276
      %v2278 = vrot.slane %v655, 3
      %v2279 = vsel %vm2272, %v2276, %v2278
      %v2280 = vrot.slane %v656, 3
      %v2281 = vsel %vm2272, %v2278, %v2280
      %v2282 = vrot.slane %v657, 3
      %v2283 = vsel %vm2272, %v2280, %v2282
      %v2284 = vrot.slane %v658, 3
      %v2285 = vsel %vm2272, %v2282, %v2284
      %v2286 = vrot.slane %v659, 3
      %v2287 = vsel %vm2272, %v2284, %v2286
      %v2288 = vrot.slane %v660, 3
      %v2289 = vsel %vm2272, %v2286, %v2288
      %v2290 = vrot.slane %v661, 3
      %v2291 = vsel %vm2272, %v2288, %v2290
      %v2292 = vrot.slane %v662, 3
      %v2293 = vsel %vm2272, %v2290, %v2292
      %v2294 = vrot.slane %v663, 3
      %v2295 = vsel %vm2272, %v2292, %v2294
      %v2296 = vrot.slane %v664, 3
      %v2297 = vsel %vm2272, %v2294, %v2296
      %v2298 = vrot.slane %v665, 3
      %v2299 = vsel %vm2272, %v2296, %v2298
      %v2300 = vrot.slane %v1280, 3
      %v2301 = vsel %vm2272, %v2298, %v2300
      %v2302 = vrot.slane %v1882, 3
      %v2303 = vsel %vm2272, %v2300, %v2302
      %v2304 = vrot.slane %v1883, 3
      %v2305 = vsel %vm2272, %v2302, %v2304
      %v2307 = vsel %vm800, %v2275, 0
      %v2310 = vsel %vm800, %v2277, 0
      %v2313 = vsel %vm800, %v2279, 0
      %v2316 = vsel %vm800, %v2281, 0
      %v2319 = vsel %vm800, %v2283, 0
      %v2322 = vsel %vm800, %v2285, 0
      %v2325 = vsel %vm800, %v2287, 0
      %v2328 = vsel %vm800, %v2289, 0
      %v2331 = vsel %vm800, %v2291, 0
      %v2334 = vsel %vm800, %v2293, 0
      %v2337 = vsel %vm800, %v2295, 0
      %v2340 = vsel %vm800, %v2297, 0
      %v2343 = vsel %vm800, %v2299, 0
      %v2346 = vsel %vm800, %v2301, 0
      %v2349 = vsel %vm800, %v2303, 0
      %v2352 = vsel %vm800, %v2305, 0
      %v2355 = vsel %vm849, %v2271, 0
      %2357 = vmatpush.bf16.msra.mxu0 0
      %2358 = vmatpush.bf16.msra.mxu0 0
      %2359 = vmatpush.bf16.msra.mxu0 0
      %2360 = vmatpush.bf16.msra.mxu0 0
      %2361 = vmatpush.bf16.msra.mxu0 0
      %2362 = vmatpush.bf16.msra.mxu0 0
      %2363 = vmatpush.bf16.msra.mxu0 0
      %2364 = vmatpush.bf16.msra.mxu0 %v2355
      %2365 = vmatmul.bf16.gmra.mxu0 %v2307
      %v2366 = vpop.f32.mrf.mxu0
      %v2367 = vadd.f32 0.0, %v2366
      %v2368 = vpop.f32.mrf.mxu0
      %v2369 = vadd.f32 0.0, %v2368
      %2370 = vmatmul.bf16.gmra.mxu0 %v2310
      %v2371 = vpop.f32.mrf.mxu0
      %v2372 = vadd.f32 0.0, %v2371
      %v2373 = vpop.f32.mrf.mxu0
      %v2374 = vadd.f32 0.0, %v2373
      %2375 = vmatmul.bf16.gmra.mxu0 %v2313
      %v2376 = vpop.f32.mrf.mxu0
      %v2377 = vadd.f32 0.0, %v2376
      %v2378 = vpop.f32.mrf.mxu0
      %v2379 = vadd.f32 0.0, %v2378
      %2380 = vmatmul.bf16.gmra.mxu0 %v2316
      %v2381 = vpop.f32.mrf.mxu0
      %v2382 = vadd.f32 0.0, %v2381
      %v2383 = vpop.f32.mrf.mxu0
      %v2384 = vadd.f32 0.0, %v2383
      %2385 = vmatmul.bf16.gmra.mxu0 %v2319
      %v2386 = vpop.f32.mrf.mxu0
      %v2387 = vadd.f32 0.0, %v2386
      %v2388 = vpop.f32.mrf.mxu0
      %v2389 = vadd.f32 0.0, %v2388
      %2390 = vmatmul.bf16.gmra.mxu0 %v2322
      %v2391 = vpop.f32.mrf.mxu0
      %v2392 = vadd.f32 0.0, %v2391
      %v2393 = vpop.f32.mrf.mxu0
      %v2394 = vadd.f32 0.0, %v2393
      %2395 = vmatmul.bf16.gmra.mxu0 %v2325
      %v2396 = vpop.f32.mrf.mxu0
      %v2397 = vadd.f32 0.0, %v2396
      %v2398 = vpop.f32.mrf.mxu0
      %v2399 = vadd.f32 0.0, %v2398
      %2400 = vmatmul.bf16.gmra.mxu0 %v2328
      %v2401 = vpop.f32.mrf.mxu0
      %v2402 = vadd.f32 0.0, %v2401
      %v2403 = vpop.f32.mrf.mxu0
      %v2404 = vadd.f32 0.0, %v2403
      %2405 = vmatmul.bf16.gmra.mxu0 %v2331
      %v2406 = vpop.f32.mrf.mxu0
      %v2407 = vadd.f32 0.0, %v2406
      %v2408 = vpop.f32.mrf.mxu0
      %v2409 = vadd.f32 0.0, %v2408
      %2410 = vmatmul.bf16.gmra.mxu0 %v2334
      %v2411 = vpop.f32.mrf.mxu0
      %v2412 = vadd.f32 0.0, %v2411
      %v2413 = vpop.f32.mrf.mxu0
      %v2414 = vadd.f32 0.0, %v2413
      %2415 = vmatmul.bf16.gmra.mxu0 %v2337
      %v2416 = vpop.f32.mrf.mxu0
      %v2417 = vadd.f32 0.0, %v2416
      %v2418 = vpop.f32.mrf.mxu0
      %v2419 = vadd.f32 0.0, %v2418
      %2420 = vmatmul.bf16.gmra.mxu0 %v2340
      %v2421 = vpop.f32.mrf.mxu0
      %v2422 = vadd.f32 0.0, %v2421
      %v2423 = vpop.f32.mrf.mxu0
      %v2424 = vadd.f32 0.0, %v2423
      %2425 = vmatmul.bf16.gmra.mxu0 %v2343
      %v2426 = vpop.f32.mrf.mxu0
      %v2427 = vadd.f32 0.0, %v2426
      %v2428 = vpop.f32.mrf.mxu0
      %v2429 = vadd.f32 0.0, %v2428
      %2430 = vmatmul.bf16.gmra.mxu0 %v2346
      %v2431 = vpop.f32.mrf.mxu0
      %v2432 = vadd.f32 0.0, %v2431
      %v2433 = vpop.f32.mrf.mxu0
      %v2434 = vadd.f32 0.0, %v2433
      %2435 = vmatmul.bf16.gmra.mxu0 %v2349
      %v2436 = vpop.f32.mrf.mxu0
      %v2437 = vadd.f32 0.0, %v2436
      %v2438 = vpop.f32.mrf.mxu0
      %v2439 = vadd.f32 0.0, %v2438
      %2440 = vmatmul.bf16.gmra.mxu0 %v2352
      %v2441 = vpop.f32.mrf.mxu0
      %v2442 = vadd.f32 0.0, %v2441
      %v2443 = vpop.f32.mrf.mxu0
      %v2444 = vadd.f32 0.0, %v2443
      %2445 = vdwg.mxu0
      %v2446 = vadd.f32 %v2238, %v2367
      %v2447 = vadd.f32 %v2239, %v2369
      %v2448 = vadd.f32 %v2240, %v2372
      %v2449 = vadd.f32 %v2241, %v2374
      %v2450 = vadd.f32 %v2242, %v2377
      %v2451 = vadd.f32 %v2243, %v2379
      %v2452 = vadd.f32 %v2244, %v2382
      %v2453 = vadd.f32 %v2245, %v2384
      %v2454 = vadd.f32 %v2246, %v2387
      %v2455 = vadd.f32 %v2247, %v2389
      %v2456 = vadd.f32 %v2248, %v2392
      %v2457 = vadd.f32 %v2249, %v2394
      %v2458 = vadd.f32 %v2250, %v2397
      %v2459 = vadd.f32 %v2251, %v2399
      %v2460 = vadd.f32 %v2252, %v2402
      %v2461 = vadd.f32 %v2253, %v2404
      %v2462 = vadd.f32 %v2254, %v2407
      %v2463 = vadd.f32 %v2255, %v2409
      %v2464 = vadd.f32 %v2256, %v2412
      %v2465 = vadd.f32 %v2257, %v2414
      %v2466 = vadd.f32 %v2258, %v2417
      %v2467 = vadd.f32 %v2259, %v2419
      %v2468 = vadd.f32 %v2260, %v2422
      %v2469 = vadd.f32 %v2261, %v2424
      %v2470 = vadd.f32 %v2262, %v2427
      %v2471 = vadd.f32 %v2263, %v2429
      %v2472 = vadd.f32 %v2264, %v2432
      %v2473 = vadd.f32 %v2265, %v2434
      %v2474 = vadd.f32 %v2266, %v2437
      %v2475 = vadd.f32 %v2267, %v2439
      %v2476 = vadd.f32 %v2268, %v2442
      %v2477 = vadd.f32 %v2269, %v2444
      %v2478 = vpack.c.bf16 %v2446, %v2446
      %v2479 = vpack.c.bf16 %v2447, %v2447
      %v2480 = vpack.c.bf16 %v2448, %v2448
      %v2481 = vpack.c.bf16 %v2449, %v2449
      %v2482 = vpack.c.bf16 %v2450, %v2450
      %v2483 = vpack.c.bf16 %v2451, %v2451
      %v2484 = vpack.c.bf16 %v2452, %v2452
      %v2485 = vpack.c.bf16 %v2453, %v2453
      %v2486 = vpack.c.bf16 %v2454, %v2454
      %v2487 = vpack.c.bf16 %v2455, %v2455
      %v2488 = vpack.c.bf16 %v2456, %v2456
      %v2489 = vpack.c.bf16 %v2457, %v2457
      %v2490 = vpack.c.bf16 %v2458, %v2458
      %v2491 = vpack.c.bf16 %v2459, %v2459
      %v2492 = vpack.c.bf16 %v2460, %v2460
      %v2493 = vpack.c.bf16 %v2461, %v2461
      %v2494 = vpack.c.bf16 %v2462, %v2462
      %v2495 = vpack.c.bf16 %v2463, %v2463
      %v2496 = vpack.c.bf16 %v2464, %v2464
      %v2497 = vpack.c.bf16 %v2465, %v2465
      %v2498 = vpack.c.bf16 %v2466, %v2466
      %v2499 = vpack.c.bf16 %v2467, %v2467
      %v2500 = vpack.c.bf16 %v2468, %v2468
      %v2501 = vpack.c.bf16 %v2469, %v2469
      %v2502 = vpack.c.bf16 %v2470, %v2470
      %v2503 = vpack.c.bf16 %v2471, %v2471
      %v2504 = vpack.c.bf16 %v2472, %v2472
      %v2505 = vpack.c.bf16 %v2473, %v2473
      %v2506 = vpack.c.bf16 %v2474, %v2474
      %v2507 = vpack.c.bf16 %v2475, %v2475
      %v2508 = vpack.c.bf16 %v2476, %v2476
      %v2509 = vpack.c.bf16 %v2477, %v2477
      %2510 = vst [vmem:[%s311] sm:$0xf] %v2478
      %2511 = vst [vmem:[%s311 + $0x4] sm:$0xf] %v2479
      %2512 = vst [vmem:[%s311 + $0x8] sm:$0xf] %v2480
      %2513 = vst [vmem:[%s311 + $0xc] sm:$0xf] %v2481
      %2514 = vst [vmem:[%s311 + $0x10] sm:$0xf] %v2482
      %2515 = vst [vmem:[%s311 + $0x14] sm:$0xf] %v2483
      %2516 = vst [vmem:[%s311 + $0x18] sm:$0xf] %v2484
      %2517 = vst [vmem:[%s311 + $0x1c] sm:$0xf] %v2485
      %2518 = vst [vmem:[%s311 + $0x20] sm:$0xf] %v2486
      %2519 = vst [vmem:[%s311 + $0x24] sm:$0xf] %v2487
      %2520 = vst [vmem:[%s311 + $0x28] sm:$0xf] %v2488
      %2521 = vst [vmem:[%s311 + $0x2c] sm:$0xf] %v2489
      %2522 = vst [vmem:[%s311 + $0x30] sm:$0xf] %v2490
      %2523 = vst [vmem:[%s311 + $0x34] sm:$0xf] %v2491
      %2524 = vst [vmem:[%s311 + $0x38] sm:$0xf] %v2492
      %2525 = vst [vmem:[%s311 + $0x3c] sm:$0xf] %v2493
      %2526 = vst [vmem:[%s311 + $0x40] sm:$0xf] %v2494
      %2527 = vst [vmem:[%s311 + $0x44] sm:$0xf] %v2495
      %2528 = vst [vmem:[%s311 + $0x48] sm:$0xf] %v2496
      %2529 = vst [vmem:[%s311 + $0x4c] sm:$0xf] %v2497
      %2530 = vst [vmem:[%s311 + $0x50] sm:$0xf] %v2498
      %2531 = vst [vmem:[%s311 + $0x54] sm:$0xf] %v2499
      %2532 = vst [vmem:[%s311 + $0x58] sm:$0xf] %v2500
      %2533 = vst [vmem:[%s311 + $0x5c] sm:$0xf] %v2501
      %2534 = vst [vmem:[%s311 + $0x60] sm:$0xf] %v2502
      %2535 = vst [vmem:[%s311 + $0x64] sm:$0xf] %v2503
      %2536 = vst [vmem:[%s311 + $0x68] sm:$0xf] %v2504
      %2537 = vst [vmem:[%s311 + $0x6c] sm:$0xf] %v2505
      %2538 = vst [vmem:[%s311 + $0x70] sm:$0xf] %v2506
      %2539 = vst [vmem:[%s311 + $0x74] sm:$0xf] %v2507
      %2540 = vst [vmem:[%s311 + $0x78] sm:$0xf] %v2508
      %2541 = vst [vmem:[%s311 + $0x7c] sm:$0xf] %v2509
      %v2542 = vld [vmem:[%s305] sm:$0xff]
      %v2543 = vld [vmem:[%s305 + $0x8] sm:$0xff]
      %v2544 = vld [vmem:[%s305 + $0x10] sm:$0xff]
      %v2545 = vld [vmem:[%s305 + $0x18] sm:$0xff]
      %v2546 = vld [vmem:[%s305 + $0x20] sm:$0xff]
      %v2547 = vld [vmem:[%s305 + $0x28] sm:$0xff]
      %v2548 = vld [vmem:[%s305 + $0x30] sm:$0xff]
      %v2549 = vld [vmem:[%s305 + $0x38] sm:$0xff]
      %v2550 = vld [vmem:[%s305 + $0x40] sm:$0xff]
      %v2551 = vld [vmem:[%s305 + $0x48] sm:$0xff]
      %v2552 = vld [vmem:[%s305 + $0x50] sm:$0xff]
      %v2553 = vld [vmem:[%s305 + $0x58] sm:$0xff]
      %v2554 = vld [vmem:[%s305 + $0x60] sm:$0xff]
      %v2555 = vld [vmem:[%s305 + $0x68] sm:$0xff]
      %v2556 = vld [vmem:[%s305 + $0x70] sm:$0xff]
      %v2557 = vld [vmem:[%s305 + $0x78] sm:$0xff]
      %v2558 = vld [vmem:[%s305 + $0x80] sm:$0xff]
      %v2559 = vld [vmem:[%s305 + $0x88] sm:$0xff]
      %v2560 = vld [vmem:[%s305 + $0x90] sm:$0xff]
      %v2561 = vld [vmem:[%s305 + $0x98] sm:$0xff]
      %v2562 = vld [vmem:[%s305 + $0xa0] sm:$0xff]
      %v2563 = vld [vmem:[%s305 + $0xa8] sm:$0xff]
      %v2564 = vld [vmem:[%s305 + $0xb0] sm:$0xff]
      %v2565 = vld [vmem:[%s305 + $0xb8] sm:$0xff]
      %v2566 = vld [vmem:[%s305 + $0xc0] sm:$0xff]
      %v2567 = vld [vmem:[%s305 + $0xc8] sm:$0xff]
      %v2568 = vld [vmem:[%s305 + $0xd0] sm:$0xff]
      %v2569 = vld [vmem:[%s305 + $0xd8] sm:$0xff]
      %v2570 = vld [vmem:[%s305 + $0xe0] sm:$0xff]
      %v2571 = vld [vmem:[%s305 + $0xe8] sm:$0xff]
      %v2572 = vld [vmem:[%s305 + $0xf0] sm:$0xff]
      %v2573 = vld [vmem:[%s305 + $0xf8] sm:$0xff]
      %2575 = vset.pattern.permute.xlu0 0
      %2576 = vperm.xlu0 %2575, %v2542
      %v2577 = vpop.permute.xlu0 %2576
      %2580 = vset.pattern.permute.xlu0 0
      %2581 = vperm.xlu0 %2580, %v2543
      %v2582 = vpop.permute.xlu0 %2581
      %2585 = vset.pattern.permute.xlu0 0
      %2586 = vperm.xlu0 %2585, %v2544
      %v2587 = vpop.permute.xlu0 %2586
      %2590 = vset.pattern.permute.xlu0 0
      %2591 = vperm.xlu0 %2590, %v2545
      %v2592 = vpop.permute.xlu0 %2591
      %2595 = vset.pattern.permute.xlu0 0
      %2596 = vperm.xlu0 %2595, %v2546
      %v2597 = vpop.permute.xlu0 %2596
      %2600 = vset.pattern.permute.xlu0 0
      %2601 = vperm.xlu0 %2600, %v2547
      %v2602 = vpop.permute.xlu0 %2601
      %2605 = vset.pattern.permute.xlu0 0
      %2606 = vperm.xlu0 %2605, %v2548
      %v2607 = vpop.permute.xlu0 %2606
      %2610 = vset.pattern.permute.xlu0 0
      %2611 = vperm.xlu0 %2610, %v2549
      %v2612 = vpop.permute.xlu0 %2611
      %2615 = vset.pattern.permute.xlu0 0
      %2616 = vperm.xlu0 %2615, %v2550
      %v2617 = vpop.permute.xlu0 %2616
      %2620 = vset.pattern.permute.xlu0 0
      %2621 = vperm.xlu0 %2620, %v2551
      %v2622 = vpop.permute.xlu0 %2621
      %2625 = vset.pattern.permute.xlu0 0
      %2626 = vperm.xlu0 %2625, %v2552
      %v2627 = vpop.permute.xlu0 %2626
      %2630 = vset.pattern.permute.xlu0 0
      %2631 = vperm.xlu0 %2630, %v2553
      %v2632 = vpop.permute.xlu0 %2631
      %2635 = vset.pattern.permute.xlu0 0
      %2636 = vperm.xlu0 %2635, %v2554
      %v2637 = vpop.permute.xlu0 %2636
      %2640 = vset.pattern.permute.xlu0 0
      %2641 = vperm.xlu0 %2640, %v2555
      %v2642 = vpop.permute.xlu0 %2641
      %2645 = vset.pattern.permute.xlu0 0
      %2646 = vperm.xlu0 %2645, %v2556
      %v2647 = vpop.permute.xlu0 %2646
      %2650 = vset.pattern.permute.xlu0 0
      %2651 = vperm.xlu0 %2650, %v2557
      %v2652 = vpop.permute.xlu0 %2651
      %2655 = vset.pattern.permute.xlu0 0
      %2656 = vperm.xlu0 %2655, %v2558
      %v2657 = vpop.permute.xlu0 %2656
      %2660 = vset.pattern.permute.xlu0 0
      %2661 = vperm.xlu0 %2660, %v2559
      %v2662 = vpop.permute.xlu0 %2661
      %2665 = vset.pattern.permute.xlu0 0
      %2666 = vperm.xlu0 %2665, %v2560
      %v2667 = vpop.permute.xlu0 %2666
      %2670 = vset.pattern.permute.xlu0 0
      %2671 = vperm.xlu0 %2670, %v2561
      %v2672 = vpop.permute.xlu0 %2671
      %2675 = vset.pattern.permute.xlu0 0
      %2676 = vperm.xlu0 %2675, %v2562
      %v2677 = vpop.permute.xlu0 %2676
      %2680 = vset.pattern.permute.xlu0 0
      %2681 = vperm.xlu0 %2680, %v2563
      %v2682 = vpop.permute.xlu0 %2681
      %2685 = vset.pattern.permute.xlu0 0
      %2686 = vperm.xlu0 %2685, %v2564
      %v2687 = vpop.permute.xlu0 %2686
      %2690 = vset.pattern.permute.xlu0 0
      %2691 = vperm.xlu0 %2690, %v2565
      %v2692 = vpop.permute.xlu0 %2691
      %2695 = vset.pattern.permute.xlu0 0
      %2696 = vperm.xlu0 %2695, %v2566
      %v2697 = vpop.permute.xlu0 %2696
      %2700 = vset.pattern.permute.xlu0 0
      %2701 = vperm.xlu0 %2700, %v2567
      %v2702 = vpop.permute.xlu0 %2701
      %2705 = vset.pattern.permute.xlu0 0
      %2706 = vperm.xlu0 %2705, %v2568
      %v2707 = vpop.permute.xlu0 %2706
      %2710 = vset.pattern.permute.xlu0 0
      %2711 = vperm.xlu0 %2710, %v2569
      %v2712 = vpop.permute.xlu0 %2711
      %2715 = vset.pattern.permute.xlu0 0
      %2716 = vperm.xlu0 %2715, %v2570
      %v2717 = vpop.permute.xlu0 %2716
      %2720 = vset.pattern.permute.xlu0 0
      %2721 = vperm.xlu0 %2720, %v2571
      %v2722 = vpop.permute.xlu0 %2721
      %2725 = vset.pattern.permute.xlu0 0
      %2726 = vperm.xlu0 %2725, %v2572
      %v2727 = vpop.permute.xlu0 %2726
      %2730 = vset.pattern.permute.xlu0 0
      %2731 = vperm.xlu0 %2730, %v2573
      %v2732 = vpop.permute.xlu0 %2731
      %v2734 = vmul.f32 %v2446, %v2577
      %v2735 = vmul.f32 %v2447, %v2582
      %v2736 = vmul.f32 %v2448, %v2587
      %v2737 = vmul.f32 %v2449, %v2592
      %v2738 = vmul.f32 %v2450, %v2597
      %v2739 = vmul.f32 %v2451, %v2602
      %v2740 = vmul.f32 %v2452, %v2607
      %v2741 = vmul.f32 %v2453, %v2612
      %v2742 = vmul.f32 %v2454, %v2617
      %v2743 = vmul.f32 %v2455, %v2622
      %v2744 = vmul.f32 %v2456, %v2627
      %v2745 = vmul.f32 %v2457, %v2632
      %v2746 = vmul.f32 %v2458, %v2637
      %v2747 = vmul.f32 %v2459, %v2642
      %v2748 = vmul.f32 %v2460, %v2647
      %v2749 = vmul.f32 %v2461, %v2652
      %v2750 = vmul.f32 %v2462, %v2657
      %v2751 = vmul.f32 %v2463, %v2662
      %v2752 = vmul.f32 %v2464, %v2667
      %v2753 = vmul.f32 %v2465, %v2672
      %v2754 = vmul.f32 %v2466, %v2677
      %v2755 = vmul.f32 %v2467, %v2682
      %v2756 = vmul.f32 %v2468, %v2687
      %v2757 = vmul.f32 %v2469, %v2692
      %v2758 = vmul.f32 %v2470, %v2697
      %v2759 = vmul.f32 %v2471, %v2702
      %v2760 = vmul.f32 %v2472, %v2707
      %v2761 = vmul.f32 %v2473, %v2712
      %v2762 = vmul.f32 %v2474, %v2717
      %v2763 = vmul.f32 %v2475, %v2722
      %v2764 = vmul.f32 %v2476, %v2727
      %v2765 = vmul.f32 %v2477, %v2732
      %v2766 = vadd.f32 %v2734, %v2735
      %v2767 = vadd.f32 %v2766, %v2736
      %v2768 = vadd.f32 %v2767, %v2737
      %v2769 = vadd.f32 %v2768, %v2738
      %v2770 = vadd.f32 %v2769, %v2739
      %v2771 = vadd.f32 %v2770, %v2740
      %v2772 = vadd.f32 %v2771, %v2741
      %v2773 = vadd.f32 %v2772, %v2742
      %v2774 = vadd.f32 %v2773, %v2743
      %v2775 = vadd.f32 %v2774, %v2744
      %v2776 = vadd.f32 %v2775, %v2745
      %v2777 = vadd.f32 %v2776, %v2746
      %v2778 = vadd.f32 %v2777, %v2747
      %v2779 = vadd.f32 %v2778, %v2748
      %v2780 = vadd.f32 %v2779, %v2749
      %v2781 = vadd.f32 %v2780, %v2750
      %v2782 = vadd.f32 %v2781, %v2751
      %v2783 = vadd.f32 %v2782, %v2752
      %v2784 = vadd.f32 %v2783, %v2753
      %v2785 = vadd.f32 %v2784, %v2754
      %v2786 = vadd.f32 %v2785, %v2755
      %v2787 = vadd.f32 %v2786, %v2756
      %v2788 = vadd.f32 %v2787, %v2757
      %v2789 = vadd.f32 %v2788, %v2758
      %v2790 = vadd.f32 %v2789, %v2759
      %v2791 = vadd.f32 %v2790, %v2760
      %v2792 = vadd.f32 %v2791, %v2761
      %v2793 = vadd.f32 %v2792, %v2762
      %v2794 = vadd.f32 %v2793, %v2763
      %v2795 = vadd.f32 %v2794, %v2764
      %v2796 = vadd.f32 %v2795, %v2765
      %v2797 = vrot.slane %v2796, 4
      %v2798 = vadd.f32 %v2796, %v2797
      %v2799 = vrot.slane %v2798, 2
      %v2800 = vadd.f32 %v2798, %v2799
      %v2801 = vrot.slane %v2800, 1
      %v2802 = vadd.f32 %v2800, %v2801
      %2803 = vst [vmem:[%s316] sm:$0x1] %v2802
      %v2804 = vmul.f32 %v2734, %v2734
      %v2805 = vmul.f32 %v2735, %v2735
      %v2806 = vmul.f32 %v2736, %v2736
      %v2807 = vmul.f32 %v2737, %v2737
      %v2808 = vmul.f32 %v2738, %v2738
      %v2809 = vmul.f32 %v2739, %v2739
      %v2810 = vmul.f32 %v2740, %v2740
      %v2811 = vmul.f32 %v2741, %v2741
      %v2812 = vmul.f32 %v2742, %v2742
      %v2813 = vmul.f32 %v2743, %v2743
      %v2814 = vmul.f32 %v2744, %v2744
      %v2815 = vmul.f32 %v2745, %v2745
      %v2816 = vmul.f32 %v2746, %v2746
      %v2817 = vmul.f32 %v2747, %v2747
      %v2818 = vmul.f32 %v2748, %v2748
      %v2819 = vmul.f32 %v2749, %v2749
      %v2820 = vmul.f32 %v2750, %v2750
      %v2821 = vmul.f32 %v2751, %v2751
      %v2822 = vmul.f32 %v2752, %v2752
      %v2823 = vmul.f32 %v2753, %v2753
      %v2824 = vmul.f32 %v2754, %v2754
      %v2825 = vmul.f32 %v2755, %v2755
      %v2826 = vmul.f32 %v2756, %v2756
      %v2827 = vmul.f32 %v2757, %v2757
      %v2828 = vmul.f32 %v2758, %v2758
      %v2829 = vmul.f32 %v2759, %v2759
      %v2830 = vmul.f32 %v2760, %v2760
      %v2831 = vmul.f32 %v2761, %v2761
      %v2832 = vmul.f32 %v2762, %v2762
      %v2833 = vmul.f32 %v2763, %v2763
      %v2834 = vmul.f32 %v2764, %v2764
      %v2835 = vmul.f32 %v2765, %v2765
      %v2836 = vadd.f32 %v2804, %v2805
      %v2837 = vadd.f32 %v2836, %v2806
      %v2838 = vadd.f32 %v2837, %v2807
      %v2839 = vadd.f32 %v2838, %v2808
      %v2840 = vadd.f32 %v2839, %v2809
      %v2841 = vadd.f32 %v2840, %v2810
      %v2842 = vadd.f32 %v2841, %v2811
      %v2843 = vadd.f32 %v2842, %v2812
      %v2844 = vadd.f32 %v2843, %v2813
      %v2845 = vadd.f32 %v2844, %v2814
      %v2846 = vadd.f32 %v2845, %v2815
      %v2847 = vadd.f32 %v2846, %v2816
      %v2848 = vadd.f32 %v2847, %v2817
      %v2849 = vadd.f32 %v2848, %v2818
      %v2850 = vadd.f32 %v2849, %v2819
      %v2851 = vadd.f32 %v2850, %v2820
      %v2852 = vadd.f32 %v2851, %v2821
      %v2853 = vadd.f32 %v2852, %v2822
      %v2854 = vadd.f32 %v2853, %v2823
      %v2855 = vadd.f32 %v2854, %v2824
      %v2856 = vadd.f32 %v2855, %v2825
      %v2857 = vadd.f32 %v2856, %v2826
      %v2858 = vadd.f32 %v2857, %v2827
      %v2859 = vadd.f32 %v2858, %v2828
      %v2860 = vadd.f32 %v2859, %v2829
      %v2861 = vadd.f32 %v2860, %v2830
      %v2862 = vadd.f32 %v2861, %v2831
      %v2863 = vadd.f32 %v2862, %v2832
      %v2864 = vadd.f32 %v2863, %v2833
      %v2865 = vadd.f32 %v2864, %v2834
      %v2866 = vadd.f32 %v2865, %v2835
      %v2867 = vrot.slane %v2866, 4
      %v2868 = vadd.f32 %v2866, %v2867
      %v2869 = vrot.slane %v2868, 2
      %v2870 = vadd.f32 %v2868, %v2869
      %v2871 = vrot.slane %v2870, 1
      %v2872 = vadd.f32 %v2870, %v2871
      %2873 = vst [vmem:[%s316 + $0x1] sm:$0x1] %v2872
      %s2874 = smul.u32 32, %s17
      %p2875 = scmp.lt.s32.totalorder %s2874, 95
      %s2876 = scalar_select %p2875, %s2874, 95
      %s2877 = smul.addr %s2876, 4
      %s2878 = scalar_lea.vmem %s4, %s2877
      %p2879 = scmp.lt.s32.totalorder %s17, 2
      %s2880 = scalar_select %p2879, %s17, 2
      %s2881 = smul.addr %s2880, 2
      %s2882 = scalar_lea.vmem %s5, %s2881
      // Predicated region
      $region37: #{conv_bn_relu.2} parent=35 // pred_check
        %p2883 = pneg %p138
      $region38: #{conv_bn_relu.2} parent=35 // pred_check_branch
        %2885 = sbr.rel (%p2883) target = $region40
      $region39: #{conv_bn_relu.2} parent=35 // pred_region
        %s2886 = smul.u32 32, %s17
      $region40: #{conv_bn_relu.2} parent=35 // pred_fallthru
        _
      // Predicated region
      $region41: #{conv_bn_relu.2} parent=35 // pred_check
        %p2887 = pneg %p164
      $region42: #{conv_bn_relu.2} parent=35 // pred_check_branch
        %2889 = sbr.rel (%p2887) target = $region44
      $region43: #{conv_bn_relu.2} parent=35 // pred_region
        _
      $region44: #{conv_bn_relu.2} parent=35 // pred_fallthru
        _
    $region36: #{conv_bn_relu.2} parent=5 // pred_fallthru
      _
    %p2890 = scmp.le.s32.totalorder 2, %s12
    // Predicated region
    $region45: #{conv_bn_relu.2} parent=5 // pred_check
      %p2891 = pneg %p2890
    $region46: #{conv_bn_relu.2} parent=5 // pred_check_branch
      %2893 = sbr.rel (%p2891) target = $region48
    $region47: #{conv_bn_relu.2} parent=5 // pred_region
      %s2894 = ssub.s32 %s12, 2
      // Predicated region
      $region49: #{conv_bn_relu.2} parent=47 // pred_check
        %p2895 = pneg %p144
      $region50: #{conv_bn_relu.2} parent=47 // pred_check_branch
        %2897 = sbr.rel (%p2895) target = $region52
      $region51: #{conv_bn_relu.2} parent=47 // pred_region
        %s2898 = smul.u32 32, %s18
        %p2899 = scmp.lt.s32.totalorder %s2898, 95
        %s2900 = scalar_select %p2899, %s2898, 95
        %s2901 = smul.addr %s2900, 4
        %s2902 = scalar_lea.vmem %s4, %s2901
      $region52: #{conv_bn_relu.2} parent=47 // pred_fallthru
        _
      // Predicated region
      $region53: #{conv_bn_relu.2} parent=47 // pred_check
        %p2903 = pneg %p170
      $region54: #{conv_bn_relu.2} parent=47 // pred_check_branch
        %2905 = sbr.rel (%p2903) target = $region56
      $region55: #{conv_bn_relu.2} parent=47 // pred_region
        %p2906 = scmp.lt.s32.totalorder %s18, 2
        %s2907 = scalar_select %p2906, %s18, 2
        %s2908 = smul.addr %s2907, 2
        %s2909 = scalar_lea.vmem %s5, %s2908
      $region56: #{conv_bn_relu.2} parent=47 // pred_fallthru
        _
    $region48: #{conv_bn_relu.2} parent=5 // pred_fallthru
      _
  $region6: #{conv_bn_relu.2} parent=0 // loop_footer
    %s16 = sadd.s32 1, %s12
  $region7: #{conv_bn_relu.2} parent=0 // loop_footer_branch
    %11 = sbr.rel target = $region3
  $region8: #{conv_bn_relu.2} parent=0 // loop_exit
    _

</llo_original>
